<compile_context>
chip_gen: v6e
topology: v6e:2x2x1
jax: 0.10.0
libtpu: 0.0.40
codegen_flags: <defaults>
</compile_context>

<pallas_src>
import math

import jax
import jax.numpy as jnp
from jax.experimental import pallas as pl
from jax.experimental.pallas import tpu as pltpu

NUM_MODES = 4
NUM_CLASSES = 4
INPUT_DIM = 1071
PROJ_DIM = 256       # ModalProjector hidden dim / transformer embed dim
CONV1_DIM = 128
CONV2_DIM = 256
NUM_HEADS = 8
HEAD_DIM = PROJ_DIM // NUM_HEADS
POOL = 4
LN_EPS = 1e-5
BN_EPS = 1e-5
CLS_PAD = 128        # lane-padded classifier output width (real classes = 4)
LANE = 128


# ----------------------------------------------------------------------------
# In-kernel math helpers (only ops that lower cleanly in Mosaic).
# ----------------------------------------------------------------------------
def _erf(x):
    # Abramowitz & Stegun 7.1.26 (|err| < 1.5e-7): exp/mul/select + EUP recip.
    a1, a2, a3, a4, a5 = (0.254829592, -0.284496736, 1.421413741,
                          -1.453152027, 1.061405429)
    p = 0.3275911
    ax = jnp.abs(x)
    t = pl.reciprocal(1.0 + p * ax)          # exact reciprocal, EUP-assisted
    poly = ((((a5 * t + a4) * t + a3) * t + a2) * t + a1) * t
    y = 1.0 - poly * jnp.exp(-ax * ax)
    return jnp.where(x >= 0.0, y, -y)


def _gelu(x):
    # exact (erf) GELU, matching torch.nn.GELU() default (approximate='none')
    return 0.5 * x * (1.0 + _erf(x * 0.7071067811865476))


# ----------------------------------------------------------------------------
# Kernel A: per-mode fused ModalProjector + SimplifiedTemporalCNN + time-mean.
# grid = (num_modes, num_batch_tiles); x is read in its native (B, M, S, D)
# layout (mode dim Squeezed), everything else is per-(mode, tile).
# ----------------------------------------------------------------------------
def _modal_stream_kernel(x_ref, wp_ref, bp_ref, lng_ref, lnb_ref,
                         wc1_ref, bc1_ref, bns_ref, bnh_ref,
                         wc2_ref, bc2_ref, out_ref):
    x = x_ref[...]                                 # (TB, S, D) f32, mode squeezed
    TB, S, D = x.shape
    rows = TB * S
    Kp = wp_ref.shape[1]                           # lane-padded contraction dim

    # cast + zero-pad the contraction dim in VMEM (no HBM pre-pass on x).
    xb = x.reshape(rows, D).astype(jnp.bfloat16)
    if Kp > D:
        xb = jnp.concatenate(
            [xb, jnp.zeros((rows, Kp - D), jnp.bfloat16)], axis=-1)

    # ModalProjector: Linear -> LayerNorm -> ReLU (Dropout = identity, eval)
    h = jnp.dot(xb, wp_ref[0], preferred_element_type=jnp.float32) + bp_ref[0]
    mu = jnp.mean(h, axis=-1, keepdims=True)
    var = jnp.mean((h - mu) * (h - mu), axis=-1, keepdims=True)
    h = (h - mu) * jax.lax.rsqrt(var + LN_EPS) * lng_ref[0] + lnb_ref[0]
    h = jnp.maximum(h, 0.0)                        # (rows, 256) f32

    # Conv1d(256->128, k=3, pad=1): ONE fused K=256, N=384 matmul on unshifted
    # activations; shift the three 128-wide tap outputs in time with XLU rolls
    # on the flat slab and mask per-sample boundary rows (no 3-D concat copies).
    y = jnp.dot(h.astype(jnp.bfloat16), wc1_ref[0],
                preferred_element_type=jnp.float32)            # (rows, 384)
    y0 = y[:, 0:CONV1_DIM]                   # w[:,:,0] @ h[t] -> output at t+1
    y1 = y[:, CONV1_DIM:2 * CONV1_DIM]       # w[:,:,1] @ h[t] -> output at t
    y2 = y[:, 2 * CONV1_DIM:3 * CONV1_DIM]   # w[:,:,2] @ h[t] -> output at t-1
    t_in = jax.lax.broadcasted_iota(jnp.int32, (rows, 1), 0) % S
    y0s = jnp.where(t_in == 0, 0.0, pltpu.roll(y0, shift=1, axis=0))
    y2s = jnp.where(t_in == S - 1, 0.0, pltpu.roll(y2, shift=rows - 1, axis=0))
    c = y0s + y1 + y2s + bc1_ref[0]                            # (rows, 128)

    # BatchNorm1d (eval, folded scale/shift) + GELU
    c = _gelu(c * bns_ref[0] + bnh_ref[0])

    # MaxPool1d(kernel_size=4) over time: single sublane reduce
    So = S // POOL
    pooled = jnp.max(c.reshape(TB * So, POOL, CONV1_DIM), axis=1)   # (TB*So,128)

    # Conv1d(128->256, k=1) + GELU + mean over remaining time steps
    g = _gelu(jnp.dot(pooled.astype(jnp.bfloat16), wc2_ref[0],
                      preferred_element_type=jnp.float32) + bc2_ref[0])
    feat = jnp.sum(g.reshape(TB, So, CONV2_DIM), axis=1) * (1.0 / So)
    out_ref[0] = feat.astype(out_ref.dtype)                    # (TB, 256) bf16


def _vmem_limit_bytes():
    """Generation-aware scoped-VMEM limit (v5e/v6e: ~96 MiB, v7x: ~48 MiB)."""
    try:
        cap = int(pltpu.get_tpu_info().vmem_capacity_bytes)
    except Exception:
        cap = 64 * 1024 * 1024      # conservative default (v7x per-TensorCore)
    return min(cap * 3 // 4, 112 * 1024 * 1024)


def _pick_batch_tile(B, S, D, vmem_limit):
    """Largest batch tile whose per-step working set fits the VMEM budget.
    Returns (tile, padded_batch); padded_batch is a multiple of tile."""
    d_pad = pl.cdiv(D, LANE) * LANE
    # double-buffered f32 x block + bf16 padded copy + fp32 intermediates
    per_row = (S * d_pad * (4 * 2 + 2)
               + S * 4 * (2 * PROJ_DIM + 3 * CONV1_DIM + 4 * CONV1_DIM)
               + (S // POOL) * 4 * (CONV1_DIM + CONV2_DIM))
    weight_bytes = 2 * 2 * (d_pad * PROJ_DIM + PROJ_DIM * 3 * CONV1_DIM
                            + CONV1_DIM * CONV2_DIM)
    budget = max(vmem_limit // 2 - weight_bytes, 4 * per_row)
    max_rows = max(1, budget // per_row)
    if B <= max_rows:
        return B, B                                   # single batch tile
    best = None
    for cand in range(8, int(min(B, max_rows)) + 1, 8):
        if B % cand == 0:
            best = cand
    if best is not None:
        return best, B                                # exact divisor, no padding
    tb = max(8, (int(min(B, max_rows)) // 8) * 8)
    return tb, pl.cdiv(B, tb) * tb                    # pad batch; sliced off later


def modal_streams(x, params, tb, vmem_limit):
    """x: (B_pad, M, S, D) float32 in its native layout (no wrapper pre-pass)."""
    Bp, M, S, D = x.shape
    Kp = params[0].shape[1]
    So = S // POOL
    w3 = lambda m, bt: (m, 0, 0)
    in_specs = [
        pl.BlockSpec((tb, pl.Squeezed(), S, D), lambda m, bt: (bt, m, 0, 0)),
        pl.BlockSpec((1, Kp, PROJ_DIM), w3),                        # proj W (in,out)
        pl.BlockSpec((1, 1, PROJ_DIM), w3),                         # proj bias
        pl.BlockSpec((1, 1, PROJ_DIM), w3),                         # LN gamma
        pl.BlockSpec((1, 1, PROJ_DIM), w3),                         # LN beta
        pl.BlockSpec((1, PROJ_DIM, 3 * CONV1_DIM), w3),             # conv1 W (in,3*out)
        pl.BlockSpec((1, 1, CONV1_DIM), w3),                        # conv1 bias
        pl.BlockSpec((1, 1, CONV1_DIM), w3),                        # bn scale
        pl.BlockSpec((1, 1, CONV1_DIM), w3),                        # bn shift
        pl.BlockSpec((1, CONV1_DIM, CONV2_DIM), w3),                # conv2 W (in,out)
        pl.BlockSpec((1, 1, CONV2_DIM), w3),                        # conv2 bias
    ]
    flops = (2 * M * Bp * S * PROJ_DIM * (Kp + 3 * CONV1_DIM)
             + 2 * M * Bp * So * CONV1_DIM * CONV2_DIM)
    trans = M * Bp * (S * CONV1_DIM + So * CONV2_DIM)
    bytes_acc = (x.size * 4
                 + M * 2 * (Kp * PROJ_DIM + PROJ_DIM * 3 * CONV1_DIM
                            + CONV1_DIM * CONV2_DIM)
                 + M * Bp * CONV2_DIM * 2)
    return pl.pallas_call(
        _modal_stream_kernel,
        out_shape=jax.ShapeDtypeStruct((M, Bp, CONV2_DIM), jnp.bfloat16),
        grid=(M, Bp // tb),
        in_specs=in_specs,
        out_specs=pl.BlockSpec((1, tb, CONV2_DIM), lambda m, bt: (m, bt, 0)),
        compiler_params=pltpu.CompilerParams(
            dimension_semantics=("parallel", "parallel"),
            vmem_limit_bytes=vmem_limit),
        cost_estimate=pl.CostEstimate(flops=flops, transcendentals=trans,
                                      bytes_accessed=bytes_acc),
    )(x, *params)


# ----------------------------------------------------------------------------
# Kernel B: fused SimplifiedTransformerBlock + per-mode partial classifier.
# grid = (num_modes,); attention runs over the batch axis within one mode
# (== PyTorch's batch_first=False attention over dim 0 of a (B, M, E) tensor).
# ----------------------------------------------------------------------------
def _transformer_classifier_kernel(x_ref, wqkv_ref, bqkv_ref, wo_ref, bo_ref,
                                   lng_ref, lnb_ref, wf_ref, bff_ref,
                                   wcls_ref, out_ref):
    xb = x_ref[0]                                  # (B, 256) bf16
    x = xb.astype(jnp.float32)

    # fused Q|K|V projection; 1/sqrt(head_dim) is pre-folded into Wq / bq.
    qkv = jnp.dot(xb, wqkv_ref[...],
                  preferred_element_type=jnp.float32) + bqkv_ref[...]
    q = qkv[:, 0:PROJ_DIM]
    k = qkv[:, PROJ_DIM:2 * PROJ_DIM]
    v = qkv[:, 2 * PROJ_DIM:3 * PROJ_DIM]

    # per-head attention with bf16 MXU operands and fp32 softmax; head outputs
    # are assembled once and fed through a single K=256 out-projection matmul.
    # NOTE: for very large attention length (== batch size here) the (B, B)
    # score tile should be streamed flash-style to stay inside v7x's 64 MiB/TC.
    head_outs = []
    for h in range(NUM_HEADS):
        lo, hi = h * HEAD_DIM, (h + 1) * HEAD_DIM
        qh = q[:, lo:hi].astype(jnp.bfloat16)
        kh = k[:, lo:hi].astype(jnp.bfloat16)
        vh = v[:, lo:hi].astype(jnp.bfloat16)
        s = jax.lax.dot_general(qh, kh, (((1,), (1,)), ((), ())),
                                preferred_element_type=jnp.float32)    # (B, B)
        s = s - jnp.max(s, axis=-1, keepdims=True)
        p = jnp.exp(s)
        p = p * pl.reciprocal(jnp.sum(p, axis=-1, keepdims=True), approx=True)
        head_outs.append(jnp.dot(p.astype(jnp.bfloat16), vh,
                                 preferred_element_type=jnp.float32))  # (B, 32)
    o = jnp.concatenate(head_outs, axis=-1)                            # (B, 256)
    attn = jnp.dot(o.astype(jnp.bfloat16), wo_ref[...],
                   preferred_element_type=jnp.float32) + bo_ref[...]

    # residual + LayerNorm (fp32)
    y = x + attn
    mu = jnp.mean(y, axis=-1, keepdims=True)
    var = jnp.mean((y - mu) * (y - mu), axis=-1, keepdims=True)
    y = (y - mu) * jax.lax.rsqrt(var + LN_EPS) * lng_ref[...] + lnb_ref[...]

    # feed-forward (Linear + GELU) + residual
    ff = _gelu(jnp.dot(y.astype(jnp.bfloat16), wf_ref[...],
                       preferred_element_type=jnp.float32) + bff_ref[...])
    z = y + ff                                                         # (B, 256)

    # per-mode partial classifier logits, lane-padded to 128 columns
    out_ref[0] = jnp.dot(z.astype(jnp.bfloat16), wcls_ref[0],
                         preferred_element_type=jnp.float32)           # (B, 128)


# ----------------------------------------------------------------------------
# Parameter init (deterministic, synthetic) + forward glue.
# ----------------------------------------------------------------------------
def init_params(key):
    keys = jax.random.split(key, 20)
    r = lambda k, shp, s=0.05: s * jax.random.normal(k, shp, dtype=jnp.float32)
    M, E, C1, C2, D, C = NUM_MODES, PROJ_DIM, CONV1_DIM, CONV2_DIM, INPUT_DIM, NUM_CLASSES
    p = {}
    p["proj_w"] = r(keys[0], (M, E, D))          # nn.Linear(1071, 256) weight (out,in)
    p["proj_b"] = r(keys[1], (M, E))
    p["ln1_g"] = 1.0 + r(keys[2], (M, E))
    p["ln1_b"] = r(keys[3], (M, E))
    p["conv1_w"] = r(keys[4], (M, C1, E, 3))     # Conv1d(256,128,3) weight (out,in,k)
    p["conv1_b"] = r(keys[5], (M, C1))
    p["bn_g"] = 1.0 + r(keys[6], (M, C1))
    p["bn_b"] = r(keys[7], (M, C1))
    p["bn_mean"] = jnp.zeros((M, C1), jnp.float32)   # fresh running stats (eval)
    p["bn_var"] = jnp.ones((M, C1), jnp.float32)
    p["conv2_w"] = r(keys[8], (M, C2, C1, 1))    # Conv1d(128,256,1)
    p["conv2_b"] = r(keys[9], (M, C2))
    p["in_proj_w"] = r(keys[10], (3 * E, E))     # MultiheadAttention in_proj
    p["in_proj_b"] = r(keys[11], (3 * E,))
    p["out_w"] = r(keys[12], (E, E))
    p["out_b"] = r(keys[13], (E,))
    p["ln2_g"] = 1.0 + r(keys[14], (E,))
    p["ln2_b"] = r(keys[15], (E,))
    p["ff_w"] = r(keys[16], (E, E))
    p["ff_b"] = r(keys[17], (E,))
    p["cls_w"] = r(keys[18], (C, E * M))
    p["cls_b"] = r(keys[19], (C,))
    return p


def forward(params, x):
    """x: (B, num_modes, S, 1071) — same axis convention as the PyTorch module."""
    B, M, S, D = x.shape
    assert M == NUM_MODES and D == INPUT_DIM and S % POOL == 0
    E = PROJ_DIM
    bf16 = jnp.bfloat16
    Kp = pl.cdiv(D, LANE) * LANE
    vmem_limit = _vmem_limit_bytes()

    # ---- Kernel A operands (weights only; x is consumed in its native layout) ----
    wp = jnp.pad(jnp.transpose(params["proj_w"], (0, 2, 1)),
                 ((0, 0), (0, Kp - D), (0, 0))).astype(bf16)        # (M, Kp, 256)
    bp = params["proj_b"][:, None, :]
    lng = params["ln1_g"][:, None, :]
    lnb = params["ln1_b"][:, None, :]
    wc1 = jnp.transpose(params["conv1_w"], (0, 3, 2, 1))            # (M, 3, 256, 128)
    wc1_all = jnp.concatenate([wc1[:, 0], wc1[:, 1], wc1[:, 2]],
                              axis=-1).astype(bf16)                 # (M, 256, 384)
    bc1 = params["conv1_b"][:, None, :]
    inv_std = 1.0 / jnp.sqrt(params["bn_var"] + BN_EPS)
    bn_scale = (params["bn_g"] * inv_std)[:, None, :]
    bn_shift = (params["bn_b"] - params["bn_mean"] * params["bn_g"] * inv_std)[:, None, :]
    wc2 = jnp.transpose(params["conv2_w"][:, :, :, 0], (0, 2, 1)).astype(bf16)  # (M,128,256)
    bc2 = params["conv2_b"][:, None, :]

    tb, b_pad = _pick_batch_tile(B, S, D, vmem_limit)
    xk = x if b_pad == B else jnp.pad(x, ((0, b_pad - B), (0, 0), (0, 0), (0, 0)))
    modal = modal_streams(
        xk, (wp, bp, lng, lnb, wc1_all, bc1, bn_scale, bn_shift, wc2, bc2),
        tb, vmem_limit)                                              # (M, B_pad, 256) bf16
    if b_pad != B:
        modal = modal[:, :B]                                         # drop padded rows

    # ---- Kernel B operands ----
    scale = 1.0 / math.sqrt(HEAD_DIM)
    qscale = jnp.concatenate([jnp.full((E,), scale, jnp.float32),
                              jnp.ones((2 * E,), jnp.float32)])
    wqkv = (params["in_proj_w"] * qscale[:, None]).T.astype(bf16)    # (256, 768)
    bqkv = (params["in_proj_b"] * qscale)[None, :]                   # (1, 768)
    wo = params["out_w"].T.astype(bf16)                              # (256, 256)
    bo = params["out_b"][None, :]
    lng2, lnb2 = params["ln2_g"][None, :], params["ln2_b"][None, :]
    wf_t, bff = params["ff_w"].T.astype(bf16), params["ff_b"][None, :]
    wcls = jnp.transpose(params["cls_w"].reshape(NUM_CLASSES, M, E), (1, 2, 0))  # (M,E,4)
    wcls = jnp.pad(wcls, ((0, 0), (0, 0), (0, CLS_PAD - NUM_CLASSES))).astype(bf16)

    shared2 = lambda m: (0, 0)
    per_mode3 = lambda m: (m, 0, 0)
    flops_b = (2 * M * B * E * (3 * E + E + E + CLS_PAD)
               + 4 * M * NUM_HEADS * B * B * HEAD_DIM)
    bytes_b = (modal.size * 2 + 2 * (3 * E * E + 2 * E * E + M * E * CLS_PAD)
               + M * B * CLS_PAD * 4)
    partial = pl.pallas_call(
        _transformer_classifier_kernel,
        out_shape=jax.ShapeDtypeStruct((M, B, CLS_PAD), jnp.float32),
        grid=(M,),
        in_specs=[
            pl.BlockSpec((1, B, E), per_mode3),                 # modal features (bf16)
            pl.BlockSpec((E, 3 * E), shared2),                  # fused Wqkv
            pl.BlockSpec((1, 3 * E), shared2),                  # fused bqkv
            pl.BlockSpec((E, E), shared2),                      # out-proj W
            pl.BlockSpec((1, E), shared2),                      # out-proj bias
            pl.BlockSpec((1, E), shared2),                      # LN gamma
            pl.BlockSpec((1, E), shared2),                      # LN beta
            pl.BlockSpec((E, E), shared2),                      # FF weight
            pl.BlockSpec((1, E), shared2),                      # FF bias
            pl.BlockSpec((1, E, CLS_PAD), per_mode3),           # classifier slab (padded)
        ],
        out_specs=pl.BlockSpec((1, B, CLS_PAD), per_mode3),
        compiler_params=pltpu.CompilerParams(
            dimension_semantics=("parallel",),
            vmem_limit_bytes=vmem_limit),
        cost_estimate=pl.CostEstimate(flops=flops_b, transcendentals=M * B * E,
                                      bytes_accessed=bytes_b),
    )(modal, wqkv, bqkv, wo, bo, lng2, lnb2, wf_t, bff, wcls)

    logits = jnp.sum(partial, axis=0)[:, :NUM_CLASSES] + params["cls_b"][None, :]
    return logits


if __name__ == "__main__":
    key = jax.random.PRNGKey(0)
    kx, kp = jax.random.split(key)
    B, S = 2, 8
    x = jax.random.normal(kx, (B, NUM_MODES, S, INPUT_DIM), dtype=jnp.float32)
    params = init_params(kp)
    logits = jax.jit(forward)(params, x)
    jax.block_until_ready(logits)
    assert logits.shape == (B, NUM_CLASSES) and bool(jnp.all(jnp.isfinite(logits)))
    print("KERNEL_OK")
</pallas_src>

<mosaic_0001>
module attributes {stable_mosaic.version = 11 : i64} {
  func.func @_modal_stream_kernel(%arg0: i32, %arg1: i32, %arg2: memref<2x1x8x1071xf32, #tpu.memory_space<vmem>>, %arg3: memref<1x1152x256xbf16, #tpu.memory_space<vmem>>, %arg4: memref<1x1x256xf32, #tpu.memory_space<vmem>>, %arg5: memref<1x1x256xf32, #tpu.memory_space<vmem>>, %arg6: memref<1x1x256xf32, #tpu.memory_space<vmem>>, %arg7: memref<1x256x384xbf16, #tpu.memory_space<vmem>>, %arg8: memref<1x1x128xf32, #tpu.memory_space<vmem>>, %arg9: memref<1x1x128xf32, #tpu.memory_space<vmem>>, %arg10: memref<1x1x128xf32, #tpu.memory_space<vmem>>, %arg11: memref<1x128x256xbf16, #tpu.memory_space<vmem>>, %arg12: memref<1x1x256xf32, #tpu.memory_space<vmem>>, %arg13: memref<1x2x256xbf16, #tpu.memory_space<vmem>>) attributes {dimension_semantics = [#tpu.dimension_semantics<parallel>, #tpu.dimension_semantics<parallel>], iteration_bounds = array<i64: 4, 1>, scalar_prefetch = 0 : i64, scratch_operands = 0 : i64, tpu.core_type = #tpu.core_type<tc>, window_params = [{transform_indices = @transform_0, window_bounds = array<i64: 2, 1, 8, 1071>}, {transform_indices = @transform_1, window_bounds = array<i64: 1, 1152, 256>}, {transform_indices = @transform_2, window_bounds = array<i64: 1, 1, 256>}, {transform_indices = @transform_3, window_bounds = array<i64: 1, 1, 256>}, {transform_indices = @transform_4, window_bounds = array<i64: 1, 1, 256>}, {transform_indices = @transform_5, window_bounds = array<i64: 1, 256, 384>}, {transform_indices = @transform_6, window_bounds = array<i64: 1, 1, 128>}, {transform_indices = @transform_7, window_bounds = array<i64: 1, 1, 128>}, {transform_indices = @transform_8, window_bounds = array<i64: 1, 1, 128>}, {transform_indices = @transform_9, window_bounds = array<i64: 1, 128, 256>}, {transform_indices = @transform_10, window_bounds = array<i64: 1, 1, 256>}, {transform_indices = @transform_11, window_bounds = array<i64: 1, 2, 256>}]} {
    %c0 = arith.constant 0 : index
    %c0_0 = arith.constant 0 : index
    %c0_1 = arith.constant 0 : index
    %c0_2 = arith.constant 0 : index
    %0 = vector.load %arg2[%c0, %c0_0, %c0_1, %c0_2] : memref<2x1x8x1071xf32, #tpu.memory_space<vmem>>, vector<2x1x8x1071xf32>
    %1 = vector.shape_cast %0 : vector<2x1x8x1071xf32> to vector<2x8x1071xf32>
    %2 = vector.shape_cast %1 : vector<2x8x1071xf32> to vector<16x1071xf32>
    %3 = arith.truncf %2 : vector<16x1071xf32> to vector<16x1071xbf16>
    %cst = arith.constant 0.000000e+00 : bf16
    %4 = vector.broadcast %cst : bf16 to vector<16x81xbf16>
    %5 = tpu.concatenate %3, %4 in 1 : vector<16x1071xbf16>, vector<16x81xbf16> -> vector<16x1152xbf16>
    %c0_3 = arith.constant 0 : index
    %c0_4 = arith.constant 0 : index
    %c0_5 = arith.constant 0 : index
    %6 = vector.load %arg3[%c0_3, %c0_4, %c0_5] : memref<1x1152x256xbf16, #tpu.memory_space<vmem>>, vector<1x1152x256xbf16>
    %7 = vector.shape_cast %6 : vector<1x1152x256xbf16> to vector<1152x256xbf16>
    %cst_6 = arith.constant dense<0.000000e+00> : vector<16x256xf32>
    %8 = tpu.matmul %5, %7, %cst_6 {dimension_numbers = #tpu.dot_dimension_numbers<[1], [0], [0], [1], [0, 0, 1, 1], [], []>} : vector<16x1152xbf16>, vector<1152x256xbf16>, vector<16x256xf32> -> vector<16x256xf32>
    %c0_7 = arith.constant 0 : index
    %c0_8 = arith.constant 0 : index
    %c0_9 = arith.constant 0 : index
    %9 = vector.load %arg4[%c0_7, %c0_8, %c0_9] : memref<1x1x256xf32, #tpu.memory_space<vmem>>, vector<1x1x256xf32>
    %10 = vector.shape_cast %9 : vector<1x1x256xf32> to vector<1x256xf32>
    %11 = vector.broadcast %10 : vector<1x256xf32> to vector<16x256xf32>
    %12 = arith.addf %8, %11 : vector<16x256xf32>
    %cst_10 = arith.constant dense<0.000000e+00> : vector<16xf32>
    %13 = vector.multi_reduction <add>, %12, %cst_10 [1] : vector<16x256xf32> to vector<16xf32>
    %14 = vector.shape_cast %13 : vector<16xf32> to vector<16x1xf32>
    %cst_11 = arith.constant 2.560000e+02 : f32
    %15 = vector.broadcast %cst_11 : f32 to vector<16x1xf32>
    %16 = arith.divf %14, %15 : vector<16x1xf32>
    %17 = vector.broadcast %16 : vector<16x1xf32> to vector<16x256xf32>
    %18 = arith.subf %12, %17 : vector<16x256xf32>
    %19 = vector.broadcast %16 : vector<16x1xf32> to vector<16x256xf32>
    %20 = arith.subf %12, %19 : vector<16x256xf32>
    %21 = arith.mulf %18, %20 : vector<16x256xf32>
    %cst_12 = arith.constant dense<0.000000e+00> : vector<16xf32>
    %22 = vector.multi_reduction <add>, %21, %cst_12 [1] : vector<16x256xf32> to vector<16xf32>
    %23 = vector.shape_cast %22 : vector<16xf32> to vector<16x1xf32>
    %cst_13 = arith.constant 2.560000e+02 : f32
    %24 = vector.broadcast %cst_13 : f32 to vector<16x1xf32>
    %25 = arith.divf %23, %24 : vector<16x1xf32>
    %26 = vector.broadcast %16 : vector<16x1xf32> to vector<16x256xf32>
    %27 = arith.subf %12, %26 : vector<16x256xf32>
    %cst_14 = arith.constant 9.99999974E-6 : f32
    %28 = vector.broadcast %cst_14 : f32 to vector<16x1xf32>
    %29 = arith.addf %25, %28 : vector<16x1xf32>
    %30 = math.rsqrt %29 : vector<16x1xf32>
    %31 = vector.broadcast %30 : vector<16x1xf32> to vector<16x256xf32>
    %32 = arith.mulf %27, %31 : vector<16x256xf32>
    %c0_15 = arith.constant 0 : index
    %c0_16 = arith.constant 0 : index
    %c0_17 = arith.constant 0 : index
    %33 = vector.load %arg5[%c0_15, %c0_16, %c0_17] : memref<1x1x256xf32, #tpu.memory_space<vmem>>, vector<1x1x256xf32>
    %34 = vector.shape_cast %33 : vector<1x1x256xf32> to vector<1x256xf32>
    %35 = vector.broadcast %34 : vector<1x256xf32> to vector<16x256xf32>
    %36 = arith.mulf %32, %35 : vector<16x256xf32>
    %c0_18 = arith.constant 0 : index
    %c0_19 = arith.constant 0 : index
    %c0_20 = arith.constant 0 : index
    %37 = vector.load %arg6[%c0_18, %c0_19, %c0_20] : memref<1x1x256xf32, #tpu.memory_space<vmem>>, vector<1x1x256xf32>
    %38 = vector.shape_cast %37 : vector<1x1x256xf32> to vector<1x256xf32>
    %39 = vector.broadcast %38 : vector<1x256xf32> to vector<16x256xf32>
    %40 = arith.addf %36, %39 : vector<16x256xf32>
    %cst_21 = arith.constant 0.000000e+00 : f32
    %41 = vector.broadcast %cst_21 : f32 to vector<16x256xf32>
    %42 = arith.maximumf %40, %41 : vector<16x256xf32>
    %43 = arith.truncf %42 : vector<16x256xf32> to vector<16x256xbf16>
    %c0_22 = arith.constant 0 : index
    %c0_23 = arith.constant 0 : index
    %c0_24 = arith.constant 0 : index
    %44 = vector.load %arg7[%c0_22, %c0_23, %c0_24] : memref<1x256x384xbf16, #tpu.memory_space<vmem>>, vector<1x256x384xbf16>
    %45 = vector.shape_cast %44 : vector<1x256x384xbf16> to vector<256x384xbf16>
    %cst_25 = arith.constant dense<0.000000e+00> : vector<16x384xf32>
    %46 = tpu.matmul %43, %45, %cst_25 {dimension_numbers = #tpu.dot_dimension_numbers<[1], [0], [0], [1], [0, 0, 1, 1], [], []>} : vector<16x256xbf16>, vector<256x384xbf16>, vector<16x384xf32> -> vector<16x384xf32>
    %47 = vector.extract_strided_slice %46 {offsets = [0, 0], sizes = [16, 128], strides = [1, 1]} : vector<16x384xf32> to vector<16x128xf32>
    %48 = vector.extract_strided_slice %46 {offsets = [0, 128], sizes = [16, 128], strides = [1, 1]} : vector<16x384xf32> to vector<16x128xf32>
    %49 = vector.extract_strided_slice %46 {offsets = [0, 256], sizes = [16, 128], strides = [1, 1]} : vector<16x384xf32> to vector<16x128xf32>
    %50 = tpu.iota {dimensions = array<i32: 0>} : vector<16x1xi32>
    %c8_i32 = arith.constant 8 : i32
    %c0_i32 = arith.constant 0 : i32
    %51 = arith.cmpi eq, %c8_i32, %c0_i32 : i32
    %c1_i32 = arith.constant 1 : i32
    %52 = arith.select %51, %c1_i32, %c8_i32 : i32
    %53 = vector.broadcast %52 : i32 to vector<16x1xi32>
    %54 = arith.remsi %50, %53 : vector<16x1xi32>
    %c0_i32_26 = arith.constant 0 : i32
    %55 = vector.broadcast %c0_i32_26 : i32 to vector<16x1xi32>
    %56 = arith.cmpi ne, %54, %55 : vector<16x1xi32>
    %c0_i32_27 = arith.constant 0 : i32
    %57 = vector.broadcast %c0_i32_27 : i32 to vector<16x1xi32>
    %58 = arith.cmpi slt, %54, %57 : vector<16x1xi32>
    %c0_i32_28 = arith.constant 0 : i32
    %59 = arith.cmpi slt, %52, %c0_i32_28 : i32
    %60 = vector.broadcast %59 : i1 to vector<16x1xi1>
    %61 = vector.broadcast %60 : vector<16x1xi1> to vector<16x1xi1>
    %62 = arith.xori %58, %61 : vector<16x1xi1>
    %63 = arith.andi %62, %56 : vector<16x1xi1>
    %64 = vector.broadcast %52 : i32 to vector<16x1xi32>
    %65 = arith.addi %54, %64 : vector<16x1xi32>
    %66 = arith.select %63, %65, %54 : vector<16x1xi1>, vector<16x1xi32>
    %c0_i32_29 = arith.constant 0 : i32
    %67 = vector.broadcast %c0_i32_29 : i32 to vector<16x1xi32>
    %68 = arith.cmpi eq, %66, %67 : vector<16x1xi32>
    %c1_i32_30 = arith.constant 1 : i32
    %69 = tpu.dynamic_rotate %47 by %c1_i32_30 dim 0 : vector<16x128xf32>, i32 -> vector<16x128xf32>
    %cst_31 = arith.constant 0.000000e+00 : f32
    %70 = vector.shape_cast %68 : vector<16x1xi1> to vector<16x1xi1>
    %71 = vector.broadcast %70 : vector<16x1xi1> to vector<16x128xi1>
    %72 = vector.broadcast %cst_31 : f32 to vector<16x128xf32>
    %73 = arith.select %71, %72, %69 : vector<16x128xi1>, vector<16x128xf32>
    %c7_i32 = arith.constant 7 : i32
    %74 = vector.broadcast %c7_i32 : i32 to vector<16x1xi32>
    %75 = arith.cmpi eq, %66, %74 : vector<16x1xi32>
    %c15_i32 = arith.constant 15 : i32
    %76 = tpu.dynamic_rotate %49 by %c15_i32 dim 0 : vector<16x128xf32>, i32 -> vector<16x128xf32>
    %cst_32 = arith.constant 0.000000e+00 : f32
    %77 = vector.shape_cast %75 : vector<16x1xi1> to vector<16x1xi1>
    %78 = vector.broadcast %77 : vector<16x1xi1> to vector<16x128xi1>
    %79 = vector.broadcast %cst_32 : f32 to vector<16x128xf32>
    %80 = arith.select %78, %79, %76 : vector<16x128xi1>, vector<16x128xf32>
    %81 = arith.addf %73, %48 : vector<16x128xf32>
    %82 = arith.addf %81, %80 : vector<16x128xf32>
    %c0_33 = arith.constant 0 : index
    %c0_34 = arith.constant 0 : index
    %c0_35 = arith.constant 0 : index
    %83 = vector.load %arg8[%c0_33, %c0_34, %c0_35] : memref<1x1x128xf32, #tpu.memory_space<vmem>>, vector<1x1x128xf32>
    %84 = vector.shape_cast %83 : vector<1x1x128xf32> to vector<1x128xf32>
    %85 = vector.broadcast %84 : vector<1x128xf32> to vector<16x128xf32>
    %86 = arith.addf %82, %85 : vector<16x128xf32>
    %c0_36 = arith.constant 0 : index
    %c0_37 = arith.constant 0 : index
    %c0_38 = arith.constant 0 : index
    %87 = vector.load %arg9[%c0_36, %c0_37, %c0_38] : memref<1x1x128xf32, #tpu.memory_space<vmem>>, vector<1x1x128xf32>
    %88 = vector.shape_cast %87 : vector<1x1x128xf32> to vector<1x128xf32>
    %89 = vector.broadcast %88 : vector<1x128xf32> to vector<16x128xf32>
    %90 = arith.mulf %86, %89 : vector<16x128xf32>
    %c0_39 = arith.constant 0 : index
    %c0_40 = arith.constant 0 : index
    %c0_41 = arith.constant 0 : index
    %91 = vector.load %arg10[%c0_39, %c0_40, %c0_41] : memref<1x1x128xf32, #tpu.memory_space<vmem>>, vector<1x1x128xf32>
    %92 = vector.shape_cast %91 : vector<1x1x128xf32> to vector<1x128xf32>
    %93 = vector.broadcast %92 : vector<1x128xf32> to vector<16x128xf32>
    %94 = arith.addf %90, %93 : vector<16x128xf32>
    %cst_42 = arith.constant 5.000000e-01 : f32
    %95 = vector.broadcast %cst_42 : f32 to vector<16x128xf32>
    %96 = arith.mulf %95, %94 : vector<16x128xf32>
    %cst_43 = arith.constant 0.707106769 : f32
    %97 = vector.broadcast %cst_43 : f32 to vector<16x128xf32>
    %98 = arith.mulf %94, %97 : vector<16x128xf32>
    %99 = math.absf %98 : vector<16x128xf32>
    %cst_44 = arith.constant 0.327591091 : f32
    %100 = vector.broadcast %cst_44 : f32 to vector<16x128xf32>
    %101 = arith.mulf %100, %99 : vector<16x128xf32>
    %cst_45 = arith.constant 1.000000e+00 : f32
    %102 = vector.broadcast %cst_45 : f32 to vector<16x128xf32>
    %103 = arith.addf %102, %101 : vector<16x128xf32>
    %104 = tpu.reciprocal %103 : vector<16x128xf32> -> vector<16x128xf32>
    %cst_46 = arith.constant 1.06140542 : f32
    %105 = vector.broadcast %cst_46 : f32 to vector<16x128xf32>
    %106 = arith.mulf %105, %104 : vector<16x128xf32>
    %cst_47 = arith.constant -1.45315206 : f32
    %107 = vector.broadcast %cst_47 : f32 to vector<16x128xf32>
    %108 = arith.addf %106, %107 : vector<16x128xf32>
    %109 = arith.mulf %108, %104 : vector<16x128xf32>
    %cst_48 = arith.constant 1.42141378 : f32
    %110 = vector.broadcast %cst_48 : f32 to vector<16x128xf32>
    %111 = arith.addf %109, %110 : vector<16x128xf32>
    %112 = arith.mulf %111, %104 : vector<16x128xf32>
    %cst_49 = arith.constant -0.284496725 : f32
    %113 = vector.broadcast %cst_49 : f32 to vector<16x128xf32>
    %114 = arith.addf %112, %113 : vector<16x128xf32>
    %115 = arith.mulf %114, %104 : vector<16x128xf32>
    %cst_50 = arith.constant 0.254829586 : f32
    %116 = vector.broadcast %cst_50 : f32 to vector<16x128xf32>
    %117 = arith.addf %115, %116 : vector<16x128xf32>
    %118 = arith.mulf %117, %104 : vector<16x128xf32>
    %cst_51 = arith.constant 0.000000e+00 : f32
    %119 = vector.broadcast %cst_51 : f32 to vector<16x128xf32>
    %120 = arith.subf %119, %99 : vector<16x128xf32>
    %121 = arith.mulf %120, %99 : vector<16x128xf32>
    %122 = math.exp %121 : vector<16x128xf32>
    %123 = arith.mulf %118, %122 : vector<16x128xf32>
    %cst_52 = arith.constant 1.000000e+00 : f32
    %124 = vector.broadcast %cst_52 : f32 to vector<16x128xf32>
    %125 = arith.subf %124, %123 : vector<16x128xf32>
    %cst_53 = arith.constant 0.000000e+00 : f32
    %126 = vector.broadcast %cst_53 : f32 to vector<16x128xf32>
    %127 = arith.cmpf oge, %98, %126 : vector<16x128xf32>
    %cst_54 = arith.constant 0.000000e+00 : f32
    %128 = vector.broadcast %cst_54 : f32 to vector<16x128xf32>
    %129 = arith.subf %128, %125 : vector<16x128xf32>
    %130 = arith.select %127, %125, %129 : vector<16x128xi1>, vector<16x128xf32>
    %cst_55 = arith.constant 1.000000e+00 : f32
    %131 = vector.broadcast %cst_55 : f32 to vector<16x128xf32>
    %132 = arith.addf %131, %130 : vector<16x128xf32>
    %133 = arith.mulf %96, %132 : vector<16x128xf32>
    %134 = vector.shape_cast %133 : vector<16x128xf32> to vector<4x4x128xf32>
    %cst_56 = arith.constant dense<0xFF800000> : vector<4x128xf32>
    %135 = vector.multi_reduction <maximumf>, %134, %cst_56 [1] : vector<4x4x128xf32> to vector<4x128xf32>
    %136 = arith.truncf %135 : vector<4x128xf32> to vector<4x128xbf16>
    %c0_57 = arith.constant 0 : index
    %c0_58 = arith.constant 0 : index
    %c0_59 = arith.constant 0 : index
    %137 = vector.load %arg11[%c0_57, %c0_58, %c0_59] : memref<1x128x256xbf16, #tpu.memory_space<vmem>>, vector<1x128x256xbf16>
    %138 = vector.shape_cast %137 : vector<1x128x256xbf16> to vector<128x256xbf16>
    %cst_60 = arith.constant dense<0.000000e+00> : vector<4x256xf32>
    %139 = tpu.matmul %136, %138, %cst_60 {dimension_numbers = #tpu.dot_dimension_numbers<[1], [0], [0], [1], [0, 0, 1, 1], [], []>} : vector<4x128xbf16>, vector<128x256xbf16>, vector<4x256xf32> -> vector<4x256xf32>
    %c0_61 = arith.constant 0 : index
    %c0_62 = arith.constant 0 : index
    %c0_63 = arith.constant 0 : index
    %140 = vector.load %arg12[%c0_61, %c0_62, %c0_63] : memref<1x1x256xf32, #tpu.memory_space<vmem>>, vector<1x1x256xf32>
    %141 = vector.shape_cast %140 : vector<1x1x256xf32> to vector<1x256xf32>
    %142 = vector.broadcast %141 : vector<1x256xf32> to vector<4x256xf32>
    %143 = arith.addf %139, %142 : vector<4x256xf32>
    %cst_64 = arith.constant 5.000000e-01 : f32
    %144 = vector.broadcast %cst_64 : f32 to vector<4x256xf32>
    %145 = arith.mulf %144, %143 : vector<4x256xf32>
    %cst_65 = arith.constant 0.707106769 : f32
    %146 = vector.broadcast %cst_65 : f32 to vector<4x256xf32>
    %147 = arith.mulf %143, %146 : vector<4x256xf32>
    %148 = math.absf %147 : vector<4x256xf32>
    %cst_66 = arith.constant 0.327591091 : f32
    %149 = vector.broadcast %cst_66 : f32 to vector<4x256xf32>
    %150 = arith.mulf %149, %148 : vector<4x256xf32>
    %cst_67 = arith.constant 1.000000e+00 : f32
    %151 = vector.broadcast %cst_67 : f32 to vector<4x256xf32>
    %152 = arith.addf %151, %150 : vector<4x256xf32>
    %153 = tpu.reciprocal %152 : vector<4x256xf32> -> vector<4x256xf32>
    %cst_68 = arith.constant 1.06140542 : f32
    %154 = vector.broadcast %cst_68 : f32 to vector<4x256xf32>
    %155 = arith.mulf %154, %153 : vector<4x256xf32>
    %cst_69 = arith.constant -1.45315206 : f32
    %156 = vector.broadcast %cst_69 : f32 to vector<4x256xf32>
    %157 = arith.addf %155, %156 : vector<4x256xf32>
    %158 = arith.mulf %157, %153 : vector<4x256xf32>
    %cst_70 = arith.constant 1.42141378 : f32
    %159 = vector.broadcast %cst_70 : f32 to vector<4x256xf32>
    %160 = arith.addf %158, %159 : vector<4x256xf32>
    %161 = arith.mulf %160, %153 : vector<4x256xf32>
    %cst_71 = arith.constant -0.284496725 : f32
    %162 = vector.broadcast %cst_71 : f32 to vector<4x256xf32>
    %163 = arith.addf %161, %162 : vector<4x256xf32>
    %164 = arith.mulf %163, %153 : vector<4x256xf32>
    %cst_72 = arith.constant 0.254829586 : f32
    %165 = vector.broadcast %cst_72 : f32 to vector<4x256xf32>
    %166 = arith.addf %164, %165 : vector<4x256xf32>
    %167 = arith.mulf %166, %153 : vector<4x256xf32>
    %cst_73 = arith.constant 0.000000e+00 : f32
    %168 = vector.broadcast %cst_73 : f32 to vector<4x256xf32>
    %169 = arith.subf %168, %148 : vector<4x256xf32>
    %170 = arith.mulf %169, %148 : vector<4x256xf32>
    %171 = math.exp %170 : vector<4x256xf32>
    %172 = arith.mulf %167, %171 : vector<4x256xf32>
    %cst_74 = arith.constant 1.000000e+00 : f32
    %173 = vector.broadcast %cst_74 : f32 to vector<4x256xf32>
    %174 = arith.subf %173, %172 : vector<4x256xf32>
    %cst_75 = arith.constant 0.000000e+00 : f32
    %175 = vector.broadcast %cst_75 : f32 to vector<4x256xf32>
    %176 = arith.cmpf oge, %147, %175 : vector<4x256xf32>
    %cst_76 = arith.constant 0.000000e+00 : f32
    %177 = vector.broadcast %cst_76 : f32 to vector<4x256xf32>
    %178 = arith.subf %177, %174 : vector<4x256xf32>
    %179 = arith.select %176, %174, %178 : vector<4x256xi1>, vector<4x256xf32>
    %cst_77 = arith.constant 1.000000e+00 : f32
    %180 = vector.broadcast %cst_77 : f32 to vector<4x256xf32>
    %181 = arith.addf %180, %179 : vector<4x256xf32>
    %182 = arith.mulf %145, %181 : vector<4x256xf32>
    %183 = vector.shape_cast %182 : vector<4x256xf32> to vector<2x2x256xf32>
    %cst_78 = arith.constant dense<0.000000e+00> : vector<2x256xf32>
    %184 = vector.multi_reduction <add>, %183, %cst_78 [1] : vector<2x2x256xf32> to vector<2x256xf32>
    %cst_79 = arith.constant 5.000000e-01 : f32
    %185 = vector.broadcast %cst_79 : f32 to vector<2x256xf32>
    %186 = arith.mulf %184, %185 : vector<2x256xf32>
    %187 = arith.truncf %186 : vector<2x256xf32> to vector<2x256xbf16>
    %c0_80 = arith.constant 0 : index
    %c0_81 = arith.constant 0 : index
    %c0_82 = arith.constant 0 : index
    %188 = vector.load %arg13[%c0_80, %c0_81, %c0_82] : memref<1x2x256xbf16, #tpu.memory_space<vmem>>, vector<1x2x256xbf16>
    %189 = vector.shape_cast %188 : vector<1x2x256xbf16> to vector<2x256xbf16>
    %190 = vector.shape_cast %187 : vector<2x256xbf16> to vector<1x2x256xbf16>
    tpu.vector_store %arg13[%c0_80, %c0_81, %c0_82], %190 {strides = array<i32>} : memref<1x2x256xbf16, #tpu.memory_space<vmem>>, vector<1x2x256xbf16>,
    return
  }
  func.func @transform_0(%arg0: i32, %arg1: i32) -> (i32, i32, i32, i32) {
    %c0_i32 = arith.constant 0 : i32
    %c0_i32_0 = arith.constant 0 : i32
    %c0_i32_1 = arith.constant 0 : i32
    return %arg1, %arg0, %c0_i32, %c0_i32_0 : i32, i32, i32, i32
  }
  func.func @transform_1(%arg0: i32, %arg1: i32) -> (i32, i32, i32) {
    %c0_i32 = arith.constant 0 : i32
    %c0_i32_0 = arith.constant 0 : i32
    %c0_i32_1 = arith.constant 0 : i32
    return %arg0, %c0_i32, %c0_i32_0 : i32, i32, i32
  }
  func.func @transform_2(%arg0: i32, %arg1: i32) -> (i32, i32, i32) {
    %c0_i32 = arith.constant 0 : i32
    %c0_i32_0 = arith.constant 0 : i32
    %c0_i32_1 = arith.constant 0 : i32
    return %arg0, %c0_i32, %c0_i32_0 : i32, i32, i32
  }
  func.func @transform_3(%arg0: i32, %arg1: i32) -> (i32, i32, i32) {
    %c0_i32 = arith.constant 0 : i32
    %c0_i32_0 = arith.constant 0 : i32
    %c0_i32_1 = arith.constant 0 : i32
    return %arg0, %c0_i32, %c0_i32_0 : i32, i32, i32
  }
  func.func @transform_4(%arg0: i32, %arg1: i32) -> (i32, i32, i32) {
    %c0_i32 = arith.constant 0 : i32
    %c0_i32_0 = arith.constant 0 : i32
    %c0_i32_1 = arith.constant 0 : i32
    return %arg0, %c0_i32, %c0_i32_0 : i32, i32, i32
  }
  func.func @transform_5(%arg0: i32, %arg1: i32) -> (i32, i32, i32) {
    %c0_i32 = arith.constant 0 : i32
    %c0_i32_0 = arith.constant 0 : i32
    %c0_i32_1 = arith.constant 0 : i32
    return %arg0, %c0_i32, %c0_i32_0 : i32, i32, i32
  }
  func.func @transform_6(%arg0: i32, %arg1: i32) -> (i32, i32, i32) {
    %c0_i32 = arith.constant 0 : i32
    %c0_i32_0 = arith.constant 0 : i32
    %c0_i32_1 = arith.constant 0 : i32
    return %arg0, %c0_i32, %c0_i32_0 : i32, i32, i32
  }
  func.func @transform_7(%arg0: i32, %arg1: i32) -> (i32, i32, i32) {
    %c0_i32 = arith.constant 0 : i32
    %c0_i32_0 = arith.constant 0 : i32
    %c0_i32_1 = arith.constant 0 : i32
    return %arg0, %c0_i32, %c0_i32_0 : i32, i32, i32
  }
  func.func @transform_8(%arg0: i32, %arg1: i32) -> (i32, i32, i32) {
    %c0_i32 = arith.constant 0 : i32
    %c0_i32_0 = arith.constant 0 : i32
    %c0_i32_1 = arith.constant 0 : i32
    return %arg0, %c0_i32, %c0_i32_0 : i32, i32, i32
  }
  func.func @transform_9(%arg0: i32, %arg1: i32) -> (i32, i32, i32) {
    %c0_i32 = arith.constant 0 : i32
    %c0_i32_0 = arith.constant 0 : i32
    %c0_i32_1 = arith.constant 0 : i32
    return %arg0, %c0_i32, %c0_i32_0 : i32, i32, i32
  }
  func.func @transform_10(%arg0: i32, %arg1: i32) -> (i32, i32, i32) {
    %c0_i32 = arith.constant 0 : i32
    %c0_i32_0 = arith.constant 0 : i32
    %c0_i32_1 = arith.constant 0 : i32
    return %arg0, %c0_i32, %c0_i32_0 : i32, i32, i32
  }
  func.func @transform_11(%arg0: i32, %arg1: i32) -> (i32, i32, i32) {
    %c0_i32 = arith.constant 0 : i32
    %c0_i32_0 = arith.constant 0 : i32
    return %arg0, %arg1, %c0_i32 : i32, i32, i32
  }
}

module attributes {stable_mosaic.version = 11 : i64} {
  func.func @_transformer_classifier_kernel(%arg0: i32, %arg1: memref<1x2x256xbf16, #tpu.memory_space<vmem>>, %arg2: memref<256x768xbf16, #tpu.memory_space<vmem>>, %arg3: memref<1x768xf32, #tpu.memory_space<vmem>>, %arg4: memref<256x256xbf16, #tpu.memory_space<vmem>>, %arg5: memref<1x256xf32, #tpu.memory_space<vmem>>, %arg6: memref<1x256xf32, #tpu.memory_space<vmem>>, %arg7: memref<1x256xf32, #tpu.memory_space<vmem>>, %arg8: memref<256x256xbf16, #tpu.memory_space<vmem>>, %arg9: memref<1x256xf32, #tpu.memory_space<vmem>>, %arg10: memref<1x256x128xbf16, #tpu.memory_space<vmem>>, %arg11: memref<1x2x128xf32, #tpu.memory_space<vmem>>) attributes {dimension_semantics = [#tpu.dimension_semantics<parallel>], iteration_bounds = array<i64: 4>, scalar_prefetch = 0 : i64, scratch_operands = 0 : i64, tpu.core_type = #tpu.core_type<tc>, window_params = [{transform_indices = @transform_0, window_bounds = array<i64: 1, 2, 256>}, {pipeline_mode = #tpu.pipeline_mode<synchronous>, transform_indices = @transform_1, window_bounds = array<i64: 256, 768>}, {pipeline_mode = #tpu.pipeline_mode<synchronous>, transform_indices = @transform_2, window_bounds = array<i64: 1, 768>}, {pipeline_mode = #tpu.pipeline_mode<synchronous>, transform_indices = @transform_3, window_bounds = array<i64: 256, 256>}, {pipeline_mode = #tpu.pipeline_mode<synchronous>, transform_indices = @transform_4, window_bounds = array<i64: 1, 256>}, {pipeline_mode = #tpu.pipeline_mode<synchronous>, transform_indices = @transform_5, window_bounds = array<i64: 1, 256>}, {pipeline_mode = #tpu.pipeline_mode<synchronous>, transform_indices = @transform_6, window_bounds = array<i64: 1, 256>}, {pipeline_mode = #tpu.pipeline_mode<synchronous>, transform_indices = @transform_7, window_bounds = array<i64: 256, 256>}, {pipeline_mode = #tpu.pipeline_mode<synchronous>, transform_indices = @transform_8, window_bounds = array<i64: 1, 256>}, {transform_indices = @transform_9, window_bounds = array<i64: 1, 256, 128>}, {transform_indices = @transform_10, window_bounds = array<i64: 1, 2, 128>}]} {
    %c0 = arith.constant 0 : index
    %c0_0 = arith.constant 0 : index
    %c0_1 = arith.constant 0 : index
    %0 = vector.load %arg1[%c0, %c0_0, %c0_1] : memref<1x2x256xbf16, #tpu.memory_space<vmem>>, vector<1x2x256xbf16>
    %1 = vector.shape_cast %0 : vector<1x2x256xbf16> to vector<2x256xbf16>
    %2 = arith.extf %1 : vector<2x256xbf16> to vector<2x256xf32>
    %c0_2 = arith.constant 0 : index
    %c0_3 = arith.constant 0 : index
    %3 = vector.load %arg2[%c0_2, %c0_3] : memref<256x768xbf16, #tpu.memory_space<vmem>>, vector<256x768xbf16>
    %cst = arith.constant dense<0.000000e+00> : vector<2x768xf32>
    %4 = tpu.matmul %1, %3, %cst {dimension_numbers = #tpu.dot_dimension_numbers<[1], [0], [0], [1], [0, 0, 1, 1], [], []>} : vector<2x256xbf16>, vector<256x768xbf16>, vector<2x768xf32> -> vector<2x768xf32>
    %c0_4 = arith.constant 0 : index
    %c0_5 = arith.constant 0 : index
    %5 = vector.load %arg3[%c0_4, %c0_5] : memref<1x768xf32, #tpu.memory_space<vmem>>, vector<1x768xf32>
    %6 = vector.broadcast %5 : vector<1x768xf32> to vector<2x768xf32>
    %7 = arith.addf %4, %6 : vector<2x768xf32>
    %8 = vector.extract_strided_slice %7 {offsets = [0, 0], sizes = [2, 256], strides = [1, 1]} : vector<2x768xf32> to vector<2x256xf32>
    %9 = vector.extract_strided_slice %7 {offsets = [0, 256], sizes = [2, 256], strides = [1, 1]} : vector<2x768xf32> to vector<2x256xf32>
    %10 = vector.extract_strided_slice %7 {offsets = [0, 512], sizes = [2, 256], strides = [1, 1]} : vector<2x768xf32> to vector<2x256xf32>
    %11 = vector.extract_strided_slice %8 {offsets = [0, 0], sizes = [2, 32], strides = [1, 1]} : vector<2x256xf32> to vector<2x32xf32>
    %12 = arith.truncf %11 : vector<2x32xf32> to vector<2x32xbf16>
    %13 = vector.extract_strided_slice %9 {offsets = [0, 0], sizes = [2, 32], strides = [1, 1]} : vector<2x256xf32> to vector<2x32xf32>
    %14 = arith.truncf %13 : vector<2x32xf32> to vector<2x32xbf16>
    %15 = vector.extract_strided_slice %10 {offsets = [0, 0], sizes = [2, 32], strides = [1, 1]} : vector<2x256xf32> to vector<2x32xf32>
    %16 = arith.truncf %15 : vector<2x32xf32> to vector<2x32xbf16>
    %cst_6 = arith.constant dense<0.000000e+00> : vector<2x2xf32>
    %17 = tpu.matmul %12, %14, %cst_6 {dimension_numbers = #tpu.dot_dimension_numbers<[1], [1], [0], [0], [0, 0, 1, 0], [], []>} : vector<2x32xbf16>, vector<2x32xbf16>, vector<2x2xf32> -> vector<2x2xf32>
    %cst_7 = arith.constant dense<0xFF800000> : vector<2xf32>
    %18 = vector.multi_reduction <maximumf>, %17, %cst_7 [1] : vector<2x2xf32> to vector<2xf32>
    %19 = vector.shape_cast %18 : vector<2xf32> to vector<2x1xf32>
    %20 = vector.broadcast %19 : vector<2x1xf32> to vector<2x2xf32>
    %21 = arith.subf %17, %20 : vector<2x2xf32>
    %22 = math.exp %21 : vector<2x2xf32>
    %cst_8 = arith.constant dense<0.000000e+00> : vector<2xf32>
    %23 = vector.multi_reduction <add>, %22, %cst_8 [1] : vector<2x2xf32> to vector<2xf32>
    %24 = vector.shape_cast %23 : vector<2xf32> to vector<2x1xf32>
    %25 = tpu.reciprocal %24 {approx = true} : vector<2x1xf32> -> vector<2x1xf32>
    %26 = vector.broadcast %25 : vector<2x1xf32> to vector<2x2xf32>
    %27 = arith.mulf %22, %26 : vector<2x2xf32>
    %28 = arith.truncf %27 : vector<2x2xf32> to vector<2x2xbf16>
    %cst_9 = arith.constant dense<0.000000e+00> : vector<2x32xf32>
    %29 = tpu.matmul %28, %16, %cst_9 {dimension_numbers = #tpu.dot_dimension_numbers<[1], [0], [0], [1], [0, 0, 1, 1], [], []>} : vector<2x2xbf16>, vector<2x32xbf16>, vector<2x32xf32> -> vector<2x32xf32>
    %30 = vector.extract_strided_slice %8 {offsets = [0, 32], sizes = [2, 32], strides = [1, 1]} : vector<2x256xf32> to vector<2x32xf32>
    %31 = arith.truncf %30 : vector<2x32xf32> to vector<2x32xbf16>
    %32 = vector.extract_strided_slice %9 {offsets = [0, 32], sizes = [2, 32], strides = [1, 1]} : vector<2x256xf32> to vector<2x32xf32>
    %33 = arith.truncf %32 : vector<2x32xf32> to vector<2x32xbf16>
    %34 = vector.extract_strided_slice %10 {offsets = [0, 32], sizes = [2, 32], strides = [1, 1]} : vector<2x256xf32> to vector<2x32xf32>
    %35 = arith.truncf %34 : vector<2x32xf32> to vector<2x32xbf16>
    %cst_10 = arith.constant dense<0.000000e+00> : vector<2x2xf32>
    %36 = tpu.matmul %31, %33, %cst_10 {dimension_numbers = #tpu.dot_dimension_numbers<[1], [1], [0], [0], [0, 0, 1, 0], [], []>} : vector<2x32xbf16>, vector<2x32xbf16>, vector<2x2xf32> -> vector<2x2xf32>
    %cst_11 = arith.constant dense<0xFF800000> : vector<2xf32>
    %37 = vector.multi_reduction <maximumf>, %36, %cst_11 [1] : vector<2x2xf32> to vector<2xf32>
    %38 = vector.shape_cast %37 : vector<2xf32> to vector<2x1xf32>
    %39 = vector.broadcast %38 : vector<2x1xf32> to vector<2x2xf32>
    %40 = arith.subf %36, %39 : vector<2x2xf32>
    %41 = math.exp %40 : vector<2x2xf32>
    %cst_12 = arith.constant dense<0.000000e+00> : vector<2xf32>
    %42 = vector.multi_reduction <add>, %41, %cst_12 [1] : vector<2x2xf32> to vector<2xf32>
    %43 = vector.shape_cast %42 : vector<2xf32> to vector<2x1xf32>
    %44 = tpu.reciprocal %43 {approx = true} : vector<2x1xf32> -> vector<2x1xf32>
    %45 = vector.broadcast %44 : vector<2x1xf32> to vector<2x2xf32>
    %46 = arith.mulf %41, %45 : vector<2x2xf32>
    %47 = arith.truncf %46 : vector<2x2xf32> to vector<2x2xbf16>
    %cst_13 = arith.constant dense<0.000000e+00> : vector<2x32xf32>
    %48 = tpu.matmul %47, %35, %cst_13 {dimension_numbers = #tpu.dot_dimension_numbers<[1], [0], [0], [1], [0, 0, 1, 1], [], []>} : vector<2x2xbf16>, vector<2x32xbf16>, vector<2x32xf32> -> vector<2x32xf32>
    %49 = vector.extract_strided_slice %8 {offsets = [0, 64], sizes = [2, 32], strides = [1, 1]} : vector<2x256xf32> to vector<2x32xf32>
    %50 = arith.truncf %49 : vector<2x32xf32> to vector<2x32xbf16>
    %51 = vector.extract_strided_slice %9 {offsets = [0, 64], sizes = [2, 32], strides = [1, 1]} : vector<2x256xf32> to vector<2x32xf32>
    %52 = arith.truncf %51 : vector<2x32xf32> to vector<2x32xbf16>
    %53 = vector.extract_strided_slice %10 {offsets = [0, 64], sizes = [2, 32], strides = [1, 1]} : vector<2x256xf32> to vector<2x32xf32>
    %54 = arith.truncf %53 : vector<2x32xf32> to vector<2x32xbf16>
    %cst_14 = arith.constant dense<0.000000e+00> : vector<2x2xf32>
    %55 = tpu.matmul %50, %52, %cst_14 {dimension_numbers = #tpu.dot_dimension_numbers<[1], [1], [0], [0], [0, 0, 1, 0], [], []>} : vector<2x32xbf16>, vector<2x32xbf16>, vector<2x2xf32> -> vector<2x2xf32>
    %cst_15 = arith.constant dense<0xFF800000> : vector<2xf32>
    %56 = vector.multi_reduction <maximumf>, %55, %cst_15 [1] : vector<2x2xf32> to vector<2xf32>
    %57 = vector.shape_cast %56 : vector<2xf32> to vector<2x1xf32>
    %58 = vector.broadcast %57 : vector<2x1xf32> to vector<2x2xf32>
    %59 = arith.subf %55, %58 : vector<2x2xf32>
    %60 = math.exp %59 : vector<2x2xf32>
    %cst_16 = arith.constant dense<0.000000e+00> : vector<2xf32>
    %61 = vector.multi_reduction <add>, %60, %cst_16 [1] : vector<2x2xf32> to vector<2xf32>
    %62 = vector.shape_cast %61 : vector<2xf32> to vector<2x1xf32>
    %63 = tpu.reciprocal %62 {approx = true} : vector<2x1xf32> -> vector<2x1xf32>
    %64 = vector.broadcast %63 : vector<2x1xf32> to vector<2x2xf32>
    %65 = arith.mulf %60, %64 : vector<2x2xf32>
    %66 = arith.truncf %65 : vector<2x2xf32> to vector<2x2xbf16>
    %cst_17 = arith.constant dense<0.000000e+00> : vector<2x32xf32>
    %67 = tpu.matmul %66, %54, %cst_17 {dimension_numbers = #tpu.dot_dimension_numbers<[1], [0], [0], [1], [0, 0, 1, 1], [], []>} : vector<2x2xbf16>, vector<2x32xbf16>, vector<2x32xf32> -> vector<2x32xf32>
    %68 = vector.extract_strided_slice %8 {offsets = [0, 96], sizes = [2, 32], strides = [1, 1]} : vector<2x256xf32> to vector<2x32xf32>
    %69 = arith.truncf %68 : vector<2x32xf32> to vector<2x32xbf16>
    %70 = vector.extract_strided_slice %9 {offsets = [0, 96], sizes = [2, 32], strides = [1, 1]} : vector<2x256xf32> to vector<2x32xf32>
    %71 = arith.truncf %70 : vector<2x32xf32> to vector<2x32xbf16>
    %72 = vector.extract_strided_slice %10 {offsets = [0, 96], sizes = [2, 32], strides = [1, 1]} : vector<2x256xf32> to vector<2x32xf32>
    %73 = arith.truncf %72 : vector<2x32xf32> to vector<2x32xbf16>
    %cst_18 = arith.constant dense<0.000000e+00> : vector<2x2xf32>
    %74 = tpu.matmul %69, %71, %cst_18 {dimension_numbers = #tpu.dot_dimension_numbers<[1], [1], [0], [0], [0, 0, 1, 0], [], []>} : vector<2x32xbf16>, vector<2x32xbf16>, vector<2x2xf32> -> vector<2x2xf32>
    %cst_19 = arith.constant dense<0xFF800000> : vector<2xf32>
    %75 = vector.multi_reduction <maximumf>, %74, %cst_19 [1] : vector<2x2xf32> to vector<2xf32>
    %76 = vector.shape_cast %75 : vector<2xf32> to vector<2x1xf32>
    %77 = vector.broadcast %76 : vector<2x1xf32> to vector<2x2xf32>
    %78 = arith.subf %74, %77 : vector<2x2xf32>
    %79 = math.exp %78 : vector<2x2xf32>
    %cst_20 = arith.constant dense<0.000000e+00> : vector<2xf32>
    %80 = vector.multi_reduction <add>, %79, %cst_20 [1] : vector<2x2xf32> to vector<2xf32>
    %81 = vector.shape_cast %80 : vector<2xf32> to vector<2x1xf32>
    %82 = tpu.reciprocal %81 {approx = true} : vector<2x1xf32> -> vector<2x1xf32>
    %83 = vector.broadcast %82 : vector<2x1xf32> to vector<2x2xf32>
    %84 = arith.mulf %79, %83 : vector<2x2xf32>
    %85 = arith.truncf %84 : vector<2x2xf32> to vector<2x2xbf16>
    %cst_21 = arith.constant dense<0.000000e+00> : vector<2x32xf32>
    %86 = tpu.matmul %85, %73, %cst_21 {dimension_numbers = #tpu.dot_dimension_numbers<[1], [0], [0], [1], [0, 0, 1, 1], [], []>} : vector<2x2xbf16>, vector<2x32xbf16>, vector<2x32xf32> -> vector<2x32xf32>
    %87 = vector.extract_strided_slice %8 {offsets = [0, 128], sizes = [2, 32], strides = [1, 1]} : vector<2x256xf32> to vector<2x32xf32>
    %88 = arith.truncf %87 : vector<2x32xf32> to vector<2x32xbf16>
    %89 = vector.extract_strided_slice %9 {offsets = [0, 128], sizes = [2, 32], strides = [1, 1]} : vector<2x256xf32> to vector<2x32xf32>
    %90 = arith.truncf %89 : vector<2x32xf32> to vector<2x32xbf16>
    %91 = vector.extract_strided_slice %10 {offsets = [0, 128], sizes = [2, 32], strides = [1, 1]} : vector<2x256xf32> to vector<2x32xf32>
    %92 = arith.truncf %91 : vector<2x32xf32> to vector<2x32xbf16>
    %cst_22 = arith.constant dense<0.000000e+00> : vector<2x2xf32>
    %93 = tpu.matmul %88, %90, %cst_22 {dimension_numbers = #tpu.dot_dimension_numbers<[1], [1], [0], [0], [0, 0, 1, 0], [], []>} : vector<2x32xbf16>, vector<2x32xbf16>, vector<2x2xf32> -> vector<2x2xf32>
    %cst_23 = arith.constant dense<0xFF800000> : vector<2xf32>
    %94 = vector.multi_reduction <maximumf>, %93, %cst_23 [1] : vector<2x2xf32> to vector<2xf32>
    %95 = vector.shape_cast %94 : vector<2xf32> to vector<2x1xf32>
    %96 = vector.broadcast %95 : vector<2x1xf32> to vector<2x2xf32>
    %97 = arith.subf %93, %96 : vector<2x2xf32>
    %98 = math.exp %97 : vector<2x2xf32>
    %cst_24 = arith.constant dense<0.000000e+00> : vector<2xf32>
    %99 = vector.multi_reduction <add>, %98, %cst_24 [1] : vector<2x2xf32> to vector<2xf32>
    %100 = vector.shape_cast %99 : vector<2xf32> to vector<2x1xf32>
    %101 = tpu.reciprocal %100 {approx = true} : vector<2x1xf32> -> vector<2x1xf32>
    %102 = vector.broadcast %101 : vector<2x1xf32> to vector<2x2xf32>
    %103 = arith.mulf %98, %102 : vector<2x2xf32>
    %104 = arith.truncf %103 : vector<2x2xf32> to vector<2x2xbf16>
    %cst_25 = arith.constant dense<0.000000e+00> : vector<2x32xf32>
    %105 = tpu.matmul %104, %92, %cst_25 {dimension_numbers = #tpu.dot_dimension_numbers<[1], [0], [0], [1], [0, 0, 1, 1], [], []>} : vector<2x2xbf16>, vector<2x32xbf16>, vector<2x32xf32> -> vector<2x32xf32>
    %106 = vector.extract_strided_slice %8 {offsets = [0, 160], sizes = [2, 32], strides = [1, 1]} : vector<2x256xf32> to vector<2x32xf32>
    %107 = arith.truncf %106 : vector<2x32xf32> to vector<2x32xbf16>
    %108 = vector.extract_strided_slice %9 {offsets = [0, 160], sizes = [2, 32], strides = [1, 1]} : vector<2x256xf32> to vector<2x32xf32>
    %109 = arith.truncf %108 : vector<2x32xf32> to vector<2x32xbf16>
    %110 = vector.extract_strided_slice %10 {offsets = [0, 160], sizes = [2, 32], strides = [1, 1]} : vector<2x256xf32> to vector<2x32xf32>
    %111 = arith.truncf %110 : vector<2x32xf32> to vector<2x32xbf16>
    %cst_26 = arith.constant dense<0.000000e+00> : vector<2x2xf32>
    %112 = tpu.matmul %107, %109, %cst_26 {dimension_numbers = #tpu.dot_dimension_numbers<[1], [1], [0], [0], [0, 0, 1, 0], [], []>} : vector<2x32xbf16>, vector<2x32xbf16>, vector<2x2xf32> -> vector<2x2xf32>
    %cst_27 = arith.constant dense<0xFF800000> : vector<2xf32>
    %113 = vector.multi_reduction <maximumf>, %112, %cst_27 [1] : vector<2x2xf32> to vector<2xf32>
    %114 = vector.shape_cast %113 : vector<2xf32> to vector<2x1xf32>
    %115 = vector.broadcast %114 : vector<2x1xf32> to vector<2x2xf32>
    %116 = arith.subf %112, %115 : vector<2x2xf32>
    %117 = math.exp %116 : vector<2x2xf32>
    %cst_28 = arith.constant dense<0.000000e+00> : vector<2xf32>
    %118 = vector.multi_reduction <add>, %117, %cst_28 [1] : vector<2x2xf32> to vector<2xf32>
    %119 = vector.shape_cast %118 : vector<2xf32> to vector<2x1xf32>
    %120 = tpu.reciprocal %119 {approx = true} : vector<2x1xf32> -> vector<2x1xf32>
    %121 = vector.broadcast %120 : vector<2x1xf32> to vector<2x2xf32>
    %122 = arith.mulf %117, %121 : vector<2x2xf32>
    %123 = arith.truncf %122 : vector<2x2xf32> to vector<2x2xbf16>
    %cst_29 = arith.constant dense<0.000000e+00> : vector<2x32xf32>
    %124 = tpu.matmul %123, %111, %cst_29 {dimension_numbers = #tpu.dot_dimension_numbers<[1], [0], [0], [1], [0, 0, 1, 1], [], []>} : vector<2x2xbf16>, vector<2x32xbf16>, vector<2x32xf32> -> vector<2x32xf32>
    %125 = vector.extract_strided_slice %8 {offsets = [0, 192], sizes = [2, 32], strides = [1, 1]} : vector<2x256xf32> to vector<2x32xf32>
    %126 = arith.truncf %125 : vector<2x32xf32> to vector<2x32xbf16>
    %127 = vector.extract_strided_slice %9 {offsets = [0, 192], sizes = [2, 32], strides = [1, 1]} : vector<2x256xf32> to vector<2x32xf32>
    %128 = arith.truncf %127 : vector<2x32xf32> to vector<2x32xbf16>
    %129 = vector.extract_strided_slice %10 {offsets = [0, 192], sizes = [2, 32], strides = [1, 1]} : vector<2x256xf32> to vector<2x32xf32>
    %130 = arith.truncf %129 : vector<2x32xf32> to vector<2x32xbf16>
    %cst_30 = arith.constant dense<0.000000e+00> : vector<2x2xf32>
    %131 = tpu.matmul %126, %128, %cst_30 {dimension_numbers = #tpu.dot_dimension_numbers<[1], [1], [0], [0], [0, 0, 1, 0], [], []>} : vector<2x32xbf16>, vector<2x32xbf16>, vector<2x2xf32> -> vector<2x2xf32>
    %cst_31 = arith.constant dense<0xFF800000> : vector<2xf32>
    %132 = vector.multi_reduction <maximumf>, %131, %cst_31 [1] : vector<2x2xf32> to vector<2xf32>
    %133 = vector.shape_cast %132 : vector<2xf32> to vector<2x1xf32>
    %134 = vector.broadcast %133 : vector<2x1xf32> to vector<2x2xf32>
    %135 = arith.subf %131, %134 : vector<2x2xf32>
    %136 = math.exp %135 : vector<2x2xf32>
    %cst_32 = arith.constant dense<0.000000e+00> : vector<2xf32>
    %137 = vector.multi_reduction <add>, %136, %cst_32 [1] : vector<2x2xf32> to vector<2xf32>
    %138 = vector.shape_cast %137 : vector<2xf32> to vector<2x1xf32>
    %139 = tpu.reciprocal %138 {approx = true} : vector<2x1xf32> -> vector<2x1xf32>
    %140 = vector.broadcast %139 : vector<2x1xf32> to vector<2x2xf32>
    %141 = arith.mulf %136, %140 : vector<2x2xf32>
    %142 = arith.truncf %141 : vector<2x2xf32> to vector<2x2xbf16>
    %cst_33 = arith.constant dense<0.000000e+00> : vector<2x32xf32>
    %143 = tpu.matmul %142, %130, %cst_33 {dimension_numbers = #tpu.dot_dimension_numbers<[1], [0], [0], [1], [0, 0, 1, 1], [], []>} : vector<2x2xbf16>, vector<2x32xbf16>, vector<2x32xf32> -> vector<2x32xf32>
    %144 = vector.extract_strided_slice %8 {offsets = [0, 224], sizes = [2, 32], strides = [1, 1]} : vector<2x256xf32> to vector<2x32xf32>
    %145 = arith.truncf %144 : vector<2x32xf32> to vector<2x32xbf16>
    %146 = vector.extract_strided_slice %9 {offsets = [0, 224], sizes = [2, 32], strides = [1, 1]} : vector<2x256xf32> to vector<2x32xf32>
    %147 = arith.truncf %146 : vector<2x32xf32> to vector<2x32xbf16>
    %148 = vector.extract_strided_slice %10 {offsets = [0, 224], sizes = [2, 32], strides = [1, 1]} : vector<2x256xf32> to vector<2x32xf32>
    %149 = arith.truncf %148 : vector<2x32xf32> to vector<2x32xbf16>
    %cst_34 = arith.constant dense<0.000000e+00> : vector<2x2xf32>
    %150 = tpu.matmul %145, %147, %cst_34 {dimension_numbers = #tpu.dot_dimension_numbers<[1], [1], [0], [0], [0, 0, 1, 0], [], []>} : vector<2x32xbf16>, vector<2x32xbf16>, vector<2x2xf32> -> vector<2x2xf32>
    %cst_35 = arith.constant dense<0xFF800000> : vector<2xf32>
    %151 = vector.multi_reduction <maximumf>, %150, %cst_35 [1] : vector<2x2xf32> to vector<2xf32>
    %152 = vector.shape_cast %151 : vector<2xf32> to vector<2x1xf32>
    %153 = vector.broadcast %152 : vector<2x1xf32> to vector<2x2xf32>
    %154 = arith.subf %150, %153 : vector<2x2xf32>
    %155 = math.exp %154 : vector<2x2xf32>
    %cst_36 = arith.constant dense<0.000000e+00> : vector<2xf32>
    %156 = vector.multi_reduction <add>, %155, %cst_36 [1] : vector<2x2xf32> to vector<2xf32>
    %157 = vector.shape_cast %156 : vector<2xf32> to vector<2x1xf32>
    %158 = tpu.reciprocal %157 {approx = true} : vector<2x1xf32> -> vector<2x1xf32>
    %159 = vector.broadcast %158 : vector<2x1xf32> to vector<2x2xf32>
    %160 = arith.mulf %155, %159 : vector<2x2xf32>
    %161 = arith.truncf %160 : vector<2x2xf32> to vector<2x2xbf16>
    %cst_37 = arith.constant dense<0.000000e+00> : vector<2x32xf32>
    %162 = tpu.matmul %161, %149, %cst_37 {dimension_numbers = #tpu.dot_dimension_numbers<[1], [0], [0], [1], [0, 0, 1, 1], [], []>} : vector<2x2xbf16>, vector<2x32xbf16>, vector<2x32xf32> -> vector<2x32xf32>
    %163 = tpu.concatenate %29, %48, %67, %86, %105, %124, %143, %162 in 1 : vector<2x32xf32>, vector<2x32xf32>, vector<2x32xf32>, vector<2x32xf32>, vector<2x32xf32>, vector<2x32xf32>, vector<2x32xf32>, vector<2x32xf32> -> vector<2x256xf32>
    %164 = arith.truncf %163 : vector<2x256xf32> to vector<2x256xbf16>
    %c0_38 = arith.constant 0 : index
    %c0_39 = arith.constant 0 : index
    %165 = vector.load %arg4[%c0_38, %c0_39] : memref<256x256xbf16, #tpu.memory_space<vmem>>, vector<256x256xbf16>
    %cst_40 = arith.constant dense<0.000000e+00> : vector<2x256xf32>
    %166 = tpu.matmul %164, %165, %cst_40 {dimension_numbers = #tpu.dot_dimension_numbers<[1], [0], [0], [1], [0, 0, 1, 1], [], []>} : vector<2x256xbf16>, vector<256x256xbf16>, vector<2x256xf32> -> vector<2x256xf32>
    %c0_41 = arith.constant 0 : index
    %c0_42 = arith.constant 0 : index
    %167 = vector.load %arg5[%c0_41, %c0_42] : memref<1x256xf32, #tpu.memory_space<vmem>>, vector<1x256xf32>
    %168 = vector.broadcast %167 : vector<1x256xf32> to vector<2x256xf32>
    %169 = arith.addf %166, %168 : vector<2x256xf32>
    %170 = arith.addf %2, %169 : vector<2x256xf32>
    %cst_43 = arith.constant dense<0.000000e+00> : vector<2xf32>
    %171 = vector.multi_reduction <add>, %170, %cst_43 [1] : vector<2x256xf32> to vector<2xf32>
    %172 = vector.shape_cast %171 : vector<2xf32> to vector<2x1xf32>
    %cst_44 = arith.constant 2.560000e+02 : f32
    %173 = vector.broadcast %cst_44 : f32 to vector<2x1xf32>
    %174 = arith.divf %172, %173 : vector<2x1xf32>
    %175 = vector.broadcast %174 : vector<2x1xf32> to vector<2x256xf32>
    %176 = arith.subf %170, %175 : vector<2x256xf32>
    %177 = vector.broadcast %174 : vector<2x1xf32> to vector<2x256xf32>
    %178 = arith.subf %170, %177 : vector<2x256xf32>
    %179 = arith.mulf %176, %178 : vector<2x256xf32>
    %cst_45 = arith.constant dense<0.000000e+00> : vector<2xf32>
    %180 = vector.multi_reduction <add>, %179, %cst_45 [1] : vector<2x256xf32> to vector<2xf32>
    %181 = vector.shape_cast %180 : vector<2xf32> to vector<2x1xf32>
    %cst_46 = arith.constant 2.560000e+02 : f32
    %182 = vector.broadcast %cst_46 : f32 to vector<2x1xf32>
    %183 = arith.divf %181, %182 : vector<2x1xf32>
    %184 = vector.broadcast %174 : vector<2x1xf32> to vector<2x256xf32>
    %185 = arith.subf %170, %184 : vector<2x256xf32>
    %cst_47 = arith.constant 9.99999974E-6 : f32
    %186 = vector.broadcast %cst_47 : f32 to vector<2x1xf32>
    %187 = arith.addf %183, %186 : vector<2x1xf32>
    %188 = math.rsqrt %187 : vector<2x1xf32>
    %189 = vector.broadcast %188 : vector<2x1xf32> to vector<2x256xf32>
    %190 = arith.mulf %185, %189 : vector<2x256xf32>
    %c0_48 = arith.constant 0 : index
    %c0_49 = arith.constant 0 : index
    %191 = vector.load %arg6[%c0_48, %c0_49] : memref<1x256xf32, #tpu.memory_space<vmem>>, vector<1x256xf32>
    %192 = vector.broadcast %191 : vector<1x256xf32> to vector<2x256xf32>
    %193 = arith.mulf %190, %192 : vector<2x256xf32>
    %c0_50 = arith.constant 0 : index
    %c0_51 = arith.constant 0 : index
    %194 = vector.load %arg7[%c0_50, %c0_51] : memref<1x256xf32, #tpu.memory_space<vmem>>, vector<1x256xf32>
    %195 = vector.broadcast %194 : vector<1x256xf32> to vector<2x256xf32>
    %196 = arith.addf %193, %195 : vector<2x256xf32>
    %197 = arith.truncf %196 : vector<2x256xf32> to vector<2x256xbf16>
    %c0_52 = arith.constant 0 : index
    %c0_53 = arith.constant 0 : index
    %198 = vector.load %arg8[%c0_52, %c0_53] : memref<256x256xbf16, #tpu.memory_space<vmem>>, vector<256x256xbf16>
    %cst_54 = arith.constant dense<0.000000e+00> : vector<2x256xf32>
    %199 = tpu.matmul %197, %198, %cst_54 {dimension_numbers = #tpu.dot_dimension_numbers<[1], [0], [0], [1], [0, 0, 1, 1], [], []>} : vector<2x256xbf16>, vector<256x256xbf16>, vector<2x256xf32> -> vector<2x256xf32>
    %c0_55 = arith.constant 0 : index
    %c0_56 = arith.constant 0 : index
    %200 = vector.load %arg9[%c0_55, %c0_56] : memref<1x256xf32, #tpu.memory_space<vmem>>, vector<1x256xf32>
    %201 = vector.broadcast %200 : vector<1x256xf32> to vector<2x256xf32>
    %202 = arith.addf %199, %201 : vector<2x256xf32>
    %cst_57 = arith.constant 5.000000e-01 : f32
    %203 = vector.broadcast %cst_57 : f32 to vector<2x256xf32>
    %204 = arith.mulf %203, %202 : vector<2x256xf32>
    %cst_58 = arith.constant 0.707106769 : f32
    %205 = vector.broadcast %cst_58 : f32 to vector<2x256xf32>
    %206 = arith.mulf %202, %205 : vector<2x256xf32>
    %207 = math.absf %206 : vector<2x256xf32>
    %cst_59 = arith.constant 0.327591091 : f32
    %208 = vector.broadcast %cst_59 : f32 to vector<2x256xf32>
    %209 = arith.mulf %208, %207 : vector<2x256xf32>
    %cst_60 = arith.constant 1.000000e+00 : f32
    %210 = vector.broadcast %cst_60 : f32 to vector<2x256xf32>
    %211 = arith.addf %210, %209 : vector<2x256xf32>
    %212 = tpu.reciprocal %211 : vector<2x256xf32> -> vector<2x256xf32>
    %cst_61 = arith.constant 1.06140542 : f32
    %213 = vector.broadcast %cst_61 : f32 to vector<2x256xf32>
    %214 = arith.mulf %213, %212 : vector<2x256xf32>
    %cst_62 = arith.constant -1.45315206 : f32
    %215 = vector.broadcast %cst_62 : f32 to vector<2x256xf32>
    %216 = arith.addf %214, %215 : vector<2x256xf32>
    %217 = arith.mulf %216, %212 : vector<2x256xf32>
    %cst_63 = arith.constant 1.42141378 : f32
    %218 = vector.broadcast %cst_63 : f32 to vector<2x256xf32>
    %219 = arith.addf %217, %218 : vector<2x256xf32>
    %220 = arith.mulf %219, %212 : vector<2x256xf32>
    %cst_64 = arith.constant -0.284496725 : f32
    %221 = vector.broadcast %cst_64 : f32 to vector<2x256xf32>
    %222 = arith.addf %220, %221 : vector<2x256xf32>
    %223 = arith.mulf %222, %212 : vector<2x256xf32>
    %cst_65 = arith.constant 0.254829586 : f32
    %224 = vector.broadcast %cst_65 : f32 to vector<2x256xf32>
    %225 = arith.addf %223, %224 : vector<2x256xf32>
    %226 = arith.mulf %225, %212 : vector<2x256xf32>
    %cst_66 = arith.constant 0.000000e+00 : f32
    %227 = vector.broadcast %cst_66 : f32 to vector<2x256xf32>
    %228 = arith.subf %227, %207 : vector<2x256xf32>
    %229 = arith.mulf %228, %207 : vector<2x256xf32>
    %230 = math.exp %229 : vector<2x256xf32>
    %231 = arith.mulf %226, %230 : vector<2x256xf32>
    %cst_67 = arith.constant 1.000000e+00 : f32
    %232 = vector.broadcast %cst_67 : f32 to vector<2x256xf32>
    %233 = arith.subf %232, %231 : vector<2x256xf32>
    %cst_68 = arith.constant 0.000000e+00 : f32
    %234 = vector.broadcast %cst_68 : f32 to vector<2x256xf32>
    %235 = arith.cmpf oge, %206, %234 : vector<2x256xf32>
    %cst_69 = arith.constant 0.000000e+00 : f32
    %236 = vector.broadcast %cst_69 : f32 to vector<2x256xf32>
    %237 = arith.subf %236, %233 : vector<2x256xf32>
    %238 = arith.select %235, %233, %237 : vector<2x256xi1>, vector<2x256xf32>
    %cst_70 = arith.constant 1.000000e+00 : f32
    %239 = vector.broadcast %cst_70 : f32 to vector<2x256xf32>
    %240 = arith.addf %239, %238 : vector<2x256xf32>
    %241 = arith.mulf %204, %240 : vector<2x256xf32>
    %242 = arith.addf %196, %241 : vector<2x256xf32>
    %243 = arith.truncf %242 : vector<2x256xf32> to vector<2x256xbf16>
    %c0_71 = arith.constant 0 : index
    %c0_72 = arith.constant 0 : index
    %c0_73 = arith.constant 0 : index
    %244 = vector.load %arg10[%c0_71, %c0_72, %c0_73] : memref<1x256x128xbf16, #tpu.memory_space<vmem>>, vector<1x256x128xbf16>
    %245 = vector.shape_cast %244 : vector<1x256x128xbf16> to vector<256x128xbf16>
    %cst_74 = arith.constant dense<0.000000e+00> : vector<2x128xf32>
    %246 = tpu.matmul %243, %245, %cst_74 {dimension_numbers = #tpu.dot_dimension_numbers<[1], [0], [0], [1], [0, 0, 1, 1], [], []>} : vector<2x256xbf16>, vector<256x128xbf16>, vector<2x128xf32> -> vector<2x128xf32>
    %c0_75 = arith.constant 0 : index
    %c0_76 = arith.constant 0 : index
    %c0_77 = arith.constant 0 : index
    %247 = vector.load %arg11[%c0_75, %c0_76, %c0_77] : memref<1x2x128xf32, #tpu.memory_space<vmem>>, vector<1x2x128xf32>
    %248 = vector.shape_cast %247 : vector<1x2x128xf32> to vector<2x128xf32>
    %249 = vector.shape_cast %246 : vector<2x128xf32> to vector<1x2x128xf32>
    tpu.vector_store %arg11[%c0_75, %c0_76, %c0_77], %249 {strides = array<i32>} : memref<1x2x128xf32, #tpu.memory_space<vmem>>, vector<1x2x128xf32>,
    return
  }
  func.func @transform_0(%arg0: i32) -> (i32, i32, i32) {
    %c0_i32 = arith.constant 0 : i32
    %c0_i32_0 = arith.constant 0 : i32
    %c0_i32_1 = arith.constant 0 : i32
    return %arg0, %c0_i32, %c0_i32_0 : i32, i32, i32
  }
  func.func @transform_1(%arg0: i32) -> (i32, i32) {
    %c0_i32 = arith.constant 0 : i32
    %c0_i32_0 = arith.constant 0 : i32
    %c0_i32_1 = arith.constant 0 : i32
    return %c0_i32, %c0_i32_0 : i32, i32
  }
  func.func @transform_2(%arg0: i32) -> (i32, i32) {
    %c0_i32 = arith.constant 0 : i32
    %c0_i32_0 = arith.constant 0 : i32
    %c0_i32_1 = arith.constant 0 : i32
    return %c0_i32, %c0_i32_0 : i32, i32
  }
  func.func @transform_3(%arg0: i32) -> (i32, i32) {
    %c0_i32 = arith.constant 0 : i32
    %c0_i32_0 = arith.constant 0 : i32
    %c0_i32_1 = arith.constant 0 : i32
    return %c0_i32, %c0_i32_0 : i32, i32
  }
  func.func @transform_4(%arg0: i32) -> (i32, i32) {
    %c0_i32 = arith.constant 0 : i32
    %c0_i32_0 = arith.constant 0 : i32
    %c0_i32_1 = arith.constant 0 : i32
    return %c0_i32, %c0_i32_0 : i32, i32
  }
  func.func @transform_5(%arg0: i32) -> (i32, i32) {
    %c0_i32 = arith.constant 0 : i32
    %c0_i32_0 = arith.constant 0 : i32
    %c0_i32_1 = arith.constant 0 : i32
    return %c0_i32, %c0_i32_0 : i32, i32
  }
  func.func @transform_6(%arg0: i32) -> (i32, i32) {
    %c0_i32 = arith.constant 0 : i32
    %c0_i32_0 = arith.constant 0 : i32
    %c0_i32_1 = arith.constant 0 : i32
    return %c0_i32, %c0_i32_0 : i32, i32
  }
  func.func @transform_7(%arg0: i32) -> (i32, i32) {
    %c0_i32 = arith.constant 0 : i32
    %c0_i32_0 = arith.constant 0 : i32
    %c0_i32_1 = arith.constant 0 : i32
    return %c0_i32, %c0_i32_0 : i32, i32
  }
  func.func @transform_8(%arg0: i32) -> (i32, i32) {
    %c0_i32 = arith.constant 0 : i32
    %c0_i32_0 = arith.constant 0 : i32
    %c0_i32_1 = arith.constant 0 : i32
    return %c0_i32, %c0_i32_0 : i32, i32
  }
  func.func @transform_9(%arg0: i32) -> (i32, i32, i32) {
    %c0_i32 = arith.constant 0 : i32
    %c0_i32_0 = arith.constant 0 : i32
    %c0_i32_1 = arith.constant 0 : i32
    return %arg0, %c0_i32, %c0_i32_0 : i32, i32, i32
  }
  func.func @transform_10(%arg0: i32) -> (i32, i32, i32) {
    %c0_i32 = arith.constant 0 : i32
    %c0_i32_0 = arith.constant 0 : i32
    %c0_i32_1 = arith.constant 0 : i32
    return %arg0, %c0_i32, %c0_i32_0 : i32, i32, i32
  }
}

</mosaic_0001>

<llo_original>
// kernel: mul.15
$region0: #{mul.15}
  #allocation0 [shape = 's32[1]{0}', space=sflag, size = 0x4, scoped, tag = 'scoped memory for mul.15']
  %s0 = inlined_call_operand.vmem [shape: f32[768], index: 0, kind: input, shape index: {}]
  %s1 = inlined_call_operand.vmem [shape: f32[768], index: 1, kind: input, shape index: {}]
  %s2 = inlined_call_operand.vmem [shape: f32[768], index: 2, kind: output, shape index: {}]
  %v3 = vld [vmem:[%s0] sm:$0x3f]
  %v4 = vld [vmem:[%s1] sm:$0x3f]
  %5 = xla_tuple %v3, %v4
  %6 = xla_tuple %5
  %v7 = vmul.f32 %v3, %v4
  %8 = xla_tuple %v7
  %9 = vst [vmem:[%s2] sm:$0xff] %v7

// kernel: forward.2
$region0: #{forward.2}
  #allocation0 [shape = 'u32[]', space=smem, size = 0x4, offset = 0x4, fixed_abs, tag = 'smem constant byte address 0x4 - core index']
  #allocation1 [shape = 'u32[144,128]{1,0:T(1,128)}', space=vmem, size = 0x12000, scoped, tag = 'internal scratch']
  %s0 = inlined_call_operand.vmem [shape: f32[2,4,8,1071], index: 0, kind: input, shape index: {}]
  %s1 = inlined_call_operand.vmem [shape: bf16[4,1152,256], index: 1, kind: input, shape index: {}]
  %s2 = inlined_call_operand.vmem [shape: f32[4,1,256], index: 2, kind: input, shape index: {}]
  %s3 = inlined_call_operand.vmem [shape: f32[4,1,256], index: 3, kind: input, shape index: {}]
  %s4 = inlined_call_operand.vmem [shape: f32[4,1,256], index: 4, kind: input, shape index: {}]
  %s5 = inlined_call_operand.vmem [shape: bf16[4,256,384], index: 5, kind: input, shape index: {}]
  %s6 = inlined_call_operand.vmem [shape: f32[4,1,128], index: 6, kind: input, shape index: {}]
  %s7 = inlined_call_operand.vmem [shape: f32[4,1,128], index: 7, kind: input, shape index: {}]
  %s8 = inlined_call_operand.vmem [shape: f32[4,1,128], index: 8, kind: input, shape index: {}]
  %s9 = inlined_call_operand.vmem [shape: bf16[4,128,256], index: 9, kind: input, shape index: {}]
  %s10 = inlined_call_operand.vmem [shape: f32[4,1,256], index: 10, kind: input, shape index: {}]
  %s11 = inlined_call_operand.vmem [shape: bf16[4,2,256], index: 11, kind: output, shape index: {}]
  %s12 = sld [smem:[#allocation0]]
  $region100: #{forward.2} parent=0
    _
  %s14 = ssub.s32 1, %s12
  %s15 = scalar_select 0, %s14, %s12
  $region1: #{forward.2} parent=0
    #allocation2 [shape = 'u8[147456]{0}', space=vmem, size = 0x24000, scoped, tag = 'input window, operand 0']
    loop: start=0, step=1, limit=6
    $region2: #{forward.2} parent=1 // loop_pre_header
      _
    $region3: #{forward.2} parent=1 // loop_header
      %s17 = sphi 0, %s21
      %p18 = scmp.ge.s32.totalorder %s17, 6
      %s24 = sphi 0, %s36
      %s25 = sphi 0, %s32
      %s26 = sphi 0, %s24
      %s27 = sphi 0, %s25
      %s28 = sphi 0, %s26
      %s29 = sphi 0, %s27
      %s41 = sphi 0, %s43
      %s44 = sphi 0, %s41
      %s45 = sphi 0, %s44
      %s61 = sphi 0, %s45
      %s67 = sphi 0, %s69
      %s70 = sphi 0, %s67
      %s71 = sphi 0, %s70
      %s87 = sphi 0, %s71
      %s93 = sphi 0, %s95
      %s96 = sphi 0, %s93
      %s97 = sphi 0, %s96
      %s113 = sphi 0, %s97
      %s119 = sphi 0, %s121
      %s122 = sphi 0, %s119
      %s123 = sphi 0, %s122
      %s139 = sphi 0, %s123
      %s145 = sphi 0, %s147
      %s148 = sphi 0, %s145
      %s149 = sphi 0, %s148
      %s165 = sphi 0, %s149
      %s171 = sphi 0, %s173
      %s174 = sphi 0, %s171
      %s175 = sphi 0, %s174
      %s191 = sphi 0, %s175
      %s197 = sphi 0, %s199
      %s200 = sphi 0, %s197
      %s201 = sphi 0, %s200
      %s217 = sphi 0, %s201
      %s223 = sphi 0, %s225
      %s226 = sphi 0, %s223
      %s227 = sphi 0, %s226
      %s243 = sphi 0, %s227
      %s249 = sphi 0, %s251
      %s252 = sphi 0, %s249
      %s253 = sphi 0, %s252
      %s269 = sphi 0, %s253
      %s275 = sphi 0, %s277
      %s278 = sphi 0, %s275
      %s279 = sphi 0, %s278
      %s295 = sphi 0, %s279
      %s301 = sphi 0, %s303
      %s304 = sphi 0, %s301
      %s305 = sphi 0, %s304
      %s321 = sphi 0, %s305
      %s329 = sphi 0, %s331
      %s332 = sphi 0, %s329
      %s333 = sphi 0, %s332
      %s349 = sphi 0, %s333
    $region4: #{forward.2} parent=1 // loop_header_branch
      %20 = sbr.rel (%p18) target = $region8
    $region5: #{forward.2} parent=1 // loop_body
      %s22 = ssub.s32 %s17, 1
      %s23 = ssub.s32 %s17, 2
      %s30 = sadd.s32 1, %s25
      %p31 = scmp.ge.s32.totalorder %s30, 1
      %s32 = scalar_select %p31, 0, %s30
      %s33 = sadd.s32 1, %s24
      %s34 = scalar_select %p31, %s33, %s24
      %p35 = scmp.ge.s32.totalorder %s34, 4
      %s36 = scalar_select %p35, 0, %s34
      %s37 = ssub.s32 %s25, %s32
      %s38 = ssub.s32 %s24, %s36
      %s39 = sor.u32 %s37, %s38
      %p40 = scmp.eq.s32.totalorder %s39, 0
      %s42 = sadd.s32 %s41, 1
      %s43 = scalar_select %p40, %s41, %s42
      %p46 = pneg %p40
      %p47 = scmp.eq.s32.totalorder %s17, 3
      %p48 = por %p46, %p47
      %p49 = scmp.ne.s32.totalorder %s41, %s44
      %p50 = scmp.eq.s32.totalorder %s17, 0
      %p51 = por %p49, %p50
      %p52 = scmp.ne.s32.totalorder %s41, %s44
      %p53 = scmp.eq.s32.totalorder %s22, 3
      %p54 = por %p52, %p53
      %p55 = scmp.ne.s32.totalorder %s44, %s45
      %p56 = scmp.eq.s32.totalorder %s22, 0
      %p57 = por %p55, %p56
      %p58 = scmp.ne.s32.totalorder %s44, %s45
      %p59 = scmp.eq.s32.totalorder %s23, 3
      %p60 = por %p58, %p59
      %p62 = scmp.ne.s32.totalorder %s45, %s61
      %p63 = scmp.eq.s32.totalorder %s23, 0
      %p64 = por %p62, %p63
      %s65 = ssub.s32 %s24, %s36
      %p66 = scmp.eq.s32.totalorder %s65, 0
      %s68 = sadd.s32 %s67, 1
      %s69 = scalar_select %p66, %s67, %s68
      %p72 = pneg %p66
      %p73 = scmp.eq.s32.totalorder %s17, 3
      %p74 = por %p72, %p73
      %p75 = scmp.ne.s32.totalorder %s67, %s70
      %p76 = scmp.eq.s32.totalorder %s17, 0
      %p77 = por %p75, %p76
      %p78 = scmp.ne.s32.totalorder %s67, %s70
      %p79 = scmp.eq.s32.totalorder %s22, 3
      %p80 = por %p78, %p79
      %p81 = scmp.ne.s32.totalorder %s70, %s71
      %p82 = scmp.eq.s32.totalorder %s22, 0
      %p83 = por %p81, %p82
      %p84 = scmp.ne.s32.totalorder %s70, %s71
      %p85 = scmp.eq.s32.totalorder %s23, 3
      %p86 = por %p84, %p85
      %p88 = scmp.ne.s32.totalorder %s71, %s87
      %p89 = scmp.eq.s32.totalorder %s23, 0
      %p90 = por %p88, %p89
      %s91 = ssub.s32 %s24, %s36
      %p92 = scmp.eq.s32.totalorder %s91, 0
      %s94 = sadd.s32 %s93, 1
      %s95 = scalar_select %p92, %s93, %s94
      %p98 = pneg %p92
      %p99 = scmp.eq.s32.totalorder %s17, 3
      %p100 = por %p98, %p99
      %p101 = scmp.ne.s32.totalorder %s93, %s96
      %p102 = scmp.eq.s32.totalorder %s17, 0
      %p103 = por %p101, %p102
      %p104 = scmp.ne.s32.totalorder %s93, %s96
      %p105 = scmp.eq.s32.totalorder %s22, 3
      %p106 = por %p104, %p105
      %p107 = scmp.ne.s32.totalorder %s96, %s97
      %p108 = scmp.eq.s32.totalorder %s22, 0
      %p109 = por %p107, %p108
      %p110 = scmp.ne.s32.totalorder %s96, %s97
      %p111 = scmp.eq.s32.totalorder %s23, 3
      %p112 = por %p110, %p111
      %p114 = scmp.ne.s32.totalorder %s97, %s113
      %p115 = scmp.eq.s32.totalorder %s23, 0
      %p116 = por %p114, %p115
      %s117 = ssub.s32 %s24, %s36
      %p118 = scmp.eq.s32.totalorder %s117, 0
      %s120 = sadd.s32 %s119, 1
      %s121 = scalar_select %p118, %s119, %s120
      %p124 = pneg %p118
      %p125 = scmp.eq.s32.totalorder %s17, 3
      %p126 = por %p124, %p125
      %p127 = scmp.ne.s32.totalorder %s119, %s122
      %p128 = scmp.eq.s32.totalorder %s17, 0
      %p129 = por %p127, %p128
      %p130 = scmp.ne.s32.totalorder %s119, %s122
      %p131 = scmp.eq.s32.totalorder %s22, 3
      %p132 = por %p130, %p131
      %p133 = scmp.ne.s32.totalorder %s122, %s123
      %p134 = scmp.eq.s32.totalorder %s22, 0
      %p135 = por %p133, %p134
      %p136 = scmp.ne.s32.totalorder %s122, %s123
      %p137 = scmp.eq.s32.totalorder %s23, 3
      %p138 = por %p136, %p137
      %p140 = scmp.ne.s32.totalorder %s123, %s139
      %p141 = scmp.eq.s32.totalorder %s23, 0
      %p142 = por %p140, %p141
      %s143 = ssub.s32 %s24, %s36
      %p144 = scmp.eq.s32.totalorder %s143, 0
      %s146 = sadd.s32 %s145, 1
      %s147 = scalar_select %p144, %s145, %s146
      %p150 = pneg %p144
      %p151 = scmp.eq.s32.totalorder %s17, 3
      %p152 = por %p150, %p151
      %p153 = scmp.ne.s32.totalorder %s145, %s148
      %p154 = scmp.eq.s32.totalorder %s17, 0
      %p155 = por %p153, %p154
      %p156 = scmp.ne.s32.totalorder %s145, %s148
      %p157 = scmp.eq.s32.totalorder %s22, 3
      %p158 = por %p156, %p157
      %p159 = scmp.ne.s32.totalorder %s148, %s149
      %p160 = scmp.eq.s32.totalorder %s22, 0
      %p161 = por %p159, %p160
      %p162 = scmp.ne.s32.totalorder %s148, %s149
      %p163 = scmp.eq.s32.totalorder %s23, 3
      %p164 = por %p162, %p163
      %p166 = scmp.ne.s32.totalorder %s149, %s165
      %p167 = scmp.eq.s32.totalorder %s23, 0
      %p168 = por %p166, %p167
      %s169 = ssub.s32 %s24, %s36
      %p170 = scmp.eq.s32.totalorder %s169, 0
      %s172 = sadd.s32 %s171, 1
      %s173 = scalar_select %p170, %s171, %s172
      %p176 = pneg %p170
      %p177 = scmp.eq.s32.totalorder %s17, 3
      %p178 = por %p176, %p177
      %p179 = scmp.ne.s32.totalorder %s171, %s174
      %p180 = scmp.eq.s32.totalorder %s17, 0
      %p181 = por %p179, %p180
      %p182 = scmp.ne.s32.totalorder %s171, %s174
      %p183 = scmp.eq.s32.totalorder %s22, 3
      %p184 = por %p182, %p183
      %p185 = scmp.ne.s32.totalorder %s174, %s175
      %p186 = scmp.eq.s32.totalorder %s22, 0
      %p187 = por %p185, %p186
      %p188 = scmp.ne.s32.totalorder %s174, %s175
      %p189 = scmp.eq.s32.totalorder %s23, 3
      %p190 = por %p188, %p189
      %p192 = scmp.ne.s32.totalorder %s175, %s191
      %p193 = scmp.eq.s32.totalorder %s23, 0
      %p194 = por %p192, %p193
      %s195 = ssub.s32 %s24, %s36
      %p196 = scmp.eq.s32.totalorder %s195, 0
      %s198 = sadd.s32 %s197, 1
      %s199 = scalar_select %p196, %s197, %s198
      %p202 = pneg %p196
      %p203 = scmp.eq.s32.totalorder %s17, 3
      %p204 = por %p202, %p203
      %p205 = scmp.ne.s32.totalorder %s197, %s200
      %p206 = scmp.eq.s32.totalorder %s17, 0
      %p207 = por %p205, %p206
      %p208 = scmp.ne.s32.totalorder %s197, %s200
      %p209 = scmp.eq.s32.totalorder %s22, 3
      %p210 = por %p208, %p209
      %p211 = scmp.ne.s32.totalorder %s200, %s201
      %p212 = scmp.eq.s32.totalorder %s22, 0
      %p213 = por %p211, %p212
      %p214 = scmp.ne.s32.totalorder %s200, %s201
      %p215 = scmp.eq.s32.totalorder %s23, 3
      %p216 = por %p214, %p215
      %p218 = scmp.ne.s32.totalorder %s201, %s217
      %p219 = scmp.eq.s32.totalorder %s23, 0
      %p220 = por %p218, %p219
      %s221 = ssub.s32 %s24, %s36
      %p222 = scmp.eq.s32.totalorder %s221, 0
      %s224 = sadd.s32 %s223, 1
      %s225 = scalar_select %p222, %s223, %s224
      %p228 = pneg %p222
      %p229 = scmp.eq.s32.totalorder %s17, 3
      %p230 = por %p228, %p229
      %p231 = scmp.ne.s32.totalorder %s223, %s226
      %p232 = scmp.eq.s32.totalorder %s17, 0
      %p233 = por %p231, %p232
      %p234 = scmp.ne.s32.totalorder %s223, %s226
      %p235 = scmp.eq.s32.totalorder %s22, 3
      %p236 = por %p234, %p235
      %p237 = scmp.ne.s32.totalorder %s226, %s227
      %p238 = scmp.eq.s32.totalorder %s22, 0
      %p239 = por %p237, %p238
      %p240 = scmp.ne.s32.totalorder %s226, %s227
      %p241 = scmp.eq.s32.totalorder %s23, 3
      %p242 = por %p240, %p241
      %p244 = scmp.ne.s32.totalorder %s227, %s243
      %p245 = scmp.eq.s32.totalorder %s23, 0
      %p246 = por %p244, %p245
      %s247 = ssub.s32 %s24, %s36
      %p248 = scmp.eq.s32.totalorder %s247, 0
      %s250 = sadd.s32 %s249, 1
      %s251 = scalar_select %p248, %s249, %s250
      %p254 = pneg %p248
      %p255 = scmp.eq.s32.totalorder %s17, 3
      %p256 = por %p254, %p255
      %p257 = scmp.ne.s32.totalorder %s249, %s252
      %p258 = scmp.eq.s32.totalorder %s17, 0
      %p259 = por %p257, %p258
      %p260 = scmp.ne.s32.totalorder %s249, %s252
      %p261 = scmp.eq.s32.totalorder %s22, 3
      %p262 = por %p260, %p261
      %p263 = scmp.ne.s32.totalorder %s252, %s253
      %p264 = scmp.eq.s32.totalorder %s22, 0
      %p265 = por %p263, %p264
      %p266 = scmp.ne.s32.totalorder %s252, %s253
      %p267 = scmp.eq.s32.totalorder %s23, 3
      %p268 = por %p266, %p267
      %p270 = scmp.ne.s32.totalorder %s253, %s269
      %p271 = scmp.eq.s32.totalorder %s23, 0
      %p272 = por %p270, %p271
      %s273 = ssub.s32 %s24, %s36
      %p274 = scmp.eq.s32.totalorder %s273, 0
      %s276 = sadd.s32 %s275, 1
      %s277 = scalar_select %p274, %s275, %s276
      %p280 = pneg %p274
      %p281 = scmp.eq.s32.totalorder %s17, 3
      %p282 = por %p280, %p281
      %p283 = scmp.ne.s32.totalorder %s275, %s278
      %p284 = scmp.eq.s32.totalorder %s17, 0
      %p285 = por %p283, %p284
      %p286 = scmp.ne.s32.totalorder %s275, %s278
      %p287 = scmp.eq.s32.totalorder %s22, 3
      %p288 = por %p286, %p287
      %p289 = scmp.ne.s32.totalorder %s278, %s279
      %p290 = scmp.eq.s32.totalorder %s22, 0
      %p291 = por %p289, %p290
      %p292 = scmp.ne.s32.totalorder %s278, %s279
      %p293 = scmp.eq.s32.totalorder %s23, 3
      %p294 = por %p292, %p293
      %p296 = scmp.ne.s32.totalorder %s279, %s295
      %p297 = scmp.eq.s32.totalorder %s23, 0
      %p298 = por %p296, %p297
      %s299 = ssub.s32 %s24, %s36
      %p300 = scmp.eq.s32.totalorder %s299, 0
      %s302 = sadd.s32 %s301, 1
      %s303 = scalar_select %p300, %s301, %s302
      %p306 = pneg %p300
      %p307 = scmp.eq.s32.totalorder %s17, 3
      %p308 = por %p306, %p307
      %p309 = scmp.ne.s32.totalorder %s301, %s304
      %p310 = scmp.eq.s32.totalorder %s17, 0
      %p311 = por %p309, %p310
      %p312 = scmp.ne.s32.totalorder %s301, %s304
      %p313 = scmp.eq.s32.totalorder %s22, 3
      %p314 = por %p312, %p313
      %p315 = scmp.ne.s32.totalorder %s304, %s305
      %p316 = scmp.eq.s32.totalorder %s22, 0
      %p317 = por %p315, %p316
      %p318 = scmp.ne.s32.totalorder %s304, %s305
      %p319 = scmp.eq.s32.totalorder %s23, 3
      %p320 = por %p318, %p319
      %p322 = scmp.ne.s32.totalorder %s305, %s321
      %p323 = scmp.eq.s32.totalorder %s23, 0
      %p324 = por %p322, %p323
      %s325 = ssub.s32 %s24, %s36
      %s326 = ssub.s32 %s25, %s32
      %s327 = sor.u32 %s325, %s326
      %p328 = scmp.eq.s32.totalorder %s327, 0
      %s330 = sadd.s32 %s329, 1
      %s331 = scalar_select %p328, %s329, %s330
      %p334 = pneg %p328
      %p335 = scmp.eq.s32.totalorder %s17, 3
      %p336 = por %p334, %p335
      %p337 = scmp.ne.s32.totalorder %s329, %s332
      %p338 = scmp.eq.s32.totalorder %s17, 0
      %p339 = por %p337, %p338
      %p340 = scmp.ne.s32.totalorder %s329, %s332
      %p341 = scmp.eq.s32.totalorder %s22, 3
      %p342 = por %p340, %p341
      %p343 = scmp.ne.s32.totalorder %s332, %s333
      %p344 = scmp.eq.s32.totalorder %s22, 0
      %p345 = por %p343, %p344
      %p346 = scmp.ne.s32.totalorder %s332, %s333
      %p347 = scmp.eq.s32.totalorder %s23, 3
      %p348 = por %p346, %p347
      %p350 = scmp.ne.s32.totalorder %s333, %s349
      %p351 = scmp.eq.s32.totalorder %s23, 0
      %p352 = por %p350, %p351
      %p353 = scmp.le.s32.totalorder 1, %s17
      %p354 = scmp.lt.s32.totalorder %s17, 5
      %p355 = pnand %p353, %p354
      %p356 = pneg %p355
      // Predicated region
      $region9: #{forward.2} parent=5 // pred_check
        _
      $region10: #{forward.2} parent=5 // pred_check_branch
        %358 = sbr.rel (%p355) target = $region12
      $region11: #{forward.2} parent=5 // pred_region
        %s359 = ssub.s32 %s17, 1
      $region12: #{forward.2} parent=5 // pred_fallthru
        _
      %p360 = scmp.lt.s32.totalorder %s17, 4
      // Predicated region
      $region13: #{forward.2} parent=5 // pred_check
        %p361 = pneg %p360
      $region14: #{forward.2} parent=5 // pred_check_branch
        %363 = sbr.rel (%p361) target = $region16
      $region15: #{forward.2} parent=5 // pred_region
        // Predicated region
        $region17: #{forward.2} parent=15 // pred_check
          %p364 = pneg %p51
        $region18: #{forward.2} parent=15 // pred_check_branch
          %366 = sbr.rel (%p364) target = $region20
        $region19: #{forward.2} parent=15 // pred_region
          %s367 = sand.u32 %s41, 1
          %s368 = sand.u32 %s41, 1
          %s369 = smul.addr %s368, 144
          %s370 = scalar_lea.vmem [#allocation2], %s369
          %s371 = smul.u32 2, %s25
          %s372 = smul.addr %s24, 9
          %s373 = smul.addr %s371, 36
          %s374 = sadd.s32 %s372, %s373
          %s375 = smul.addr %s374, 8
          %s376 = scalar_lea.vmem %s0, %s375
          // Predicated region
          $region21: #{forward.2} parent=19 // pred_check
            _
          $region22: #{forward.2} parent=19 // pred_check_branch
            %378 = sbr.rel (0) target = $region24
          $region23: #{forward.2} parent=19 // pred_region
            // Predicated region
            $region25: #{forward.2} parent=23 // pred_check
              _
            $region26: #{forward.2} parent=23 // pred_check_branch
              %380 = sbr.rel (0) target = $region28
            $region27: #{forward.2} parent=23 // pred_region
              loop: start=0, step=1, limit=1
              $region29: #{forward.2} parent=27 // loop_pre_header
                _
              $region30: #{forward.2} parent=27 // loop_header
                %s382 = sphi 0, %s386
                %p383 = scmp.ge.s32.totalorder %s382, 1
                %s387 = sphi %s376, %s376
                %s388 = sphi %s370, %s370
              $region31: #{forward.2} parent=27 // loop_header_branch
                %385 = sbr.rel (%p383) target = $region35
              $region32: #{forward.2} parent=27 // loop_body
                %v389 = vld [vmem:[%s387] sm:$0xff]
                %390 = vst [vmem:[%s388] sm:$0xff] %v389
                %v391 = vld [vmem:[%s387 + $0x8] sm:$0xff]
                %392 = vst [vmem:[%s388 + $0x8] sm:$0xff] %v391
                %v393 = vld [vmem:[%s387 + $0x10] sm:$0xff]
                %394 = vst [vmem:[%s388 + $0x10] sm:$0xff] %v393
                %v395 = vld [vmem:[%s387 + $0x18] sm:$0xff]
                %396 = vst [vmem:[%s388 + $0x18] sm:$0xff] %v395
                %v397 = vld [vmem:[%s387 + $0x20] sm:$0xff]
                %398 = vst [vmem:[%s388 + $0x20] sm:$0xff] %v397
                %v399 = vld [vmem:[%s387 + $0x28] sm:$0xff]
                %400 = vst [vmem:[%s388 + $0x28] sm:$0xff] %v399
                %v401 = vld [vmem:[%s387 + $0x30] sm:$0xff]
                %402 = vst [vmem:[%s388 + $0x30] sm:$0xff] %v401
                %v403 = vld [vmem:[%s387 + $0x38] sm:$0xff]
                %404 = vst [vmem:[%s388 + $0x38] sm:$0xff] %v403
                %v405 = vld [vmem:[%s387 + $0x40] sm:$0xff]
                %406 = vst [vmem:[%s388 + $0x40] sm:$0xff] %v405
                %v407 = vld [vmem:[%s387 + $0x120] sm:$0xff]
                %408 = vst [vmem:[%s388 + $0x48] sm:$0xff] %v407
                %v409 = vld [vmem:[%s387 + $0x128] sm:$0xff]
                %410 = vst [vmem:[%s388 + $0x50] sm:$0xff] %v409
                %v411 = vld [vmem:[%s387 + $0x130] sm:$0xff]
                %412 = vst [vmem:[%s388 + $0x58] sm:$0xff] %v411
                %v413 = vld [vmem:[%s387 + $0x138] sm:$0xff]
                %414 = vst [vmem:[%s388 + $0x60] sm:$0xff] %v413
                %v415 = vld [vmem:[%s387 + $0x140] sm:$0xff]
                %416 = vst [vmem:[%s388 + $0x68] sm:$0xff] %v415
                %v417 = vld [vmem:[%s387 + $0x148] sm:$0xff]
                %418 = vst [vmem:[%s388 + $0x70] sm:$0xff] %v417
                %v419 = vld [vmem:[%s387 + $0x150] sm:$0xff]
                %420 = vst [vmem:[%s388 + $0x78] sm:$0xff] %v419
                %v421 = vld [vmem:[%s387 + $0x158] sm:$0xff]
                %422 = vst [vmem:[%s388 + $0x80] sm:$0xff] %v421
                %v423 = vld [vmem:[%s387 + $0x160] sm:$0xff]
                %424 = vst [vmem:[%s388 + $0x88] sm:$0xff] %v423
              $region33: #{forward.2} parent=27 // loop_footer
                %s386 = sadd.s32 1, %s382
              $region34: #{forward.2} parent=27 // loop_footer_branch
                %381 = sbr.rel target = $region30
              $region35: #{forward.2} parent=27 // loop_exit
                _
            $region28: #{forward.2} parent=23 // pred_fallthru
              _
            // Predicated region
            $region36: #{forward.2} parent=23 // pred_check
              _
            $region37: #{forward.2} parent=23 // pred_check_branch
              %426 = sbr.rel target = $region39
            $region38: #{forward.2} parent=23 // pred_region
              _
            $region39: #{forward.2} parent=23 // pred_fallthru
              _
          $region24: #{forward.2} parent=19 // pred_fallthru
            _
          %427 = vnop
        $region20: #{forward.2} parent=15 // pred_fallthru
          _
        // Predicated region
        $region40: #{forward.2} parent=15 // pred_check
          %p428 = pneg %p77
        $region41: #{forward.2} parent=15 // pred_check_branch
          %430 = sbr.rel (%p428) target = $region43
        $region42: #{forward.2} parent=15 // pred_region
          %p431 = scmp.lt.s32.totalorder %s24, 3
          %s432 = scalar_select %p431, %s24, 3
          %s433 = smul.addr %s432, 288
          %s434 = smul.addr %s433, 4
          %s435 = scalar_lea.vmem %s1, %s434
        $region43: #{forward.2} parent=15 // pred_fallthru
          _
        // Predicated region
        $region44: #{forward.2} parent=15 // pred_check
          %p436 = pneg %p103
        $region45: #{forward.2} parent=15 // pred_check_branch
          %438 = sbr.rel (%p436) target = $region47
        $region46: #{forward.2} parent=15 // pred_region
          %p439 = scmp.lt.s32.totalorder %s24, 3
          %s440 = scalar_select %p439, %s24, 3
          %s441 = smul.addr %s440, 2
          %s442 = scalar_lea.vmem %s2, %s441
        $region47: #{forward.2} parent=15 // pred_fallthru
          _
        // Predicated region
        $region48: #{forward.2} parent=15 // pred_check
          %p443 = pneg %p129
        $region49: #{forward.2} parent=15 // pred_check_branch
          %445 = sbr.rel (%p443) target = $region51
        $region50: #{forward.2} parent=15 // pred_region
          %p446 = scmp.lt.s32.totalorder %s24, 3
          %s447 = scalar_select %p446, %s24, 3
          %s448 = smul.addr %s447, 2
          %s449 = scalar_lea.vmem %s3, %s448
        $region51: #{forward.2} parent=15 // pred_fallthru
          _
        // Predicated region
        $region52: #{forward.2} parent=15 // pred_check
          %p450 = pneg %p155
        $region53: #{forward.2} parent=15 // pred_check_branch
          %452 = sbr.rel (%p450) target = $region55
        $region54: #{forward.2} parent=15 // pred_region
          %p453 = scmp.lt.s32.totalorder %s24, 3
          %s454 = scalar_select %p453, %s24, 3
          %s455 = smul.addr %s454, 2
          %s456 = scalar_lea.vmem %s4, %s455
        $region55: #{forward.2} parent=15 // pred_fallthru
          _
        // Predicated region
        $region56: #{forward.2} parent=15 // pred_check
          %p457 = pneg %p181
        $region57: #{forward.2} parent=15 // pred_check_branch
          %459 = sbr.rel (%p457) target = $region59
        $region58: #{forward.2} parent=15 // pred_region
          %p460 = scmp.lt.s32.totalorder %s24, 3
          %s461 = scalar_select %p460, %s24, 3
          %s462 = smul.addr %s461, 96
          %s463 = smul.addr %s462, 4
          %s464 = scalar_lea.vmem %s5, %s463
        $region59: #{forward.2} parent=15 // pred_fallthru
          _
        // Predicated region
        $region60: #{forward.2} parent=15 // pred_check
          %p465 = pneg %p207
        $region61: #{forward.2} parent=15 // pred_check_branch
          %467 = sbr.rel (%p465) target = $region63
        $region62: #{forward.2} parent=15 // pred_region
          %p468 = scmp.lt.s32.totalorder %s24, 3
          %s469 = scalar_select %p468, %s24, 3
          %s470 = scalar_lea.vmem %s6, %s469
        $region63: #{forward.2} parent=15 // pred_fallthru
          _
        // Predicated region
        $region64: #{forward.2} parent=15 // pred_check
          %p471 = pneg %p233
        $region65: #{forward.2} parent=15 // pred_check_branch
          %473 = sbr.rel (%p471) target = $region67
        $region66: #{forward.2} parent=15 // pred_region
          %p474 = scmp.lt.s32.totalorder %s24, 3
          %s475 = scalar_select %p474, %s24, 3
          %s476 = scalar_lea.vmem %s7, %s475
        $region67: #{forward.2} parent=15 // pred_fallthru
          _
        // Predicated region
        $region68: #{forward.2} parent=15 // pred_check
          %p477 = pneg %p259
        $region69: #{forward.2} parent=15 // pred_check_branch
          %479 = sbr.rel (%p477) target = $region71
        $region70: #{forward.2} parent=15 // pred_region
          %p480 = scmp.lt.s32.totalorder %s24, 3
          %s481 = scalar_select %p480, %s24, 3
          %s482 = scalar_lea.vmem %s8, %s481
        $region71: #{forward.2} parent=15 // pred_fallthru
          _
        // Predicated region
        $region72: #{forward.2} parent=15 // pred_check
          %p483 = pneg %p285
        $region73: #{forward.2} parent=15 // pred_check_branch
          %485 = sbr.rel (%p483) target = $region75
        $region74: #{forward.2} parent=15 // pred_region
          %p486 = scmp.lt.s32.totalorder %s24, 3
          %s487 = scalar_select %p486, %s24, 3
          %s488 = smul.addr %s487, 32
          %s489 = smul.addr %s488, 4
          %s490 = scalar_lea.vmem %s9, %s489
        $region75: #{forward.2} parent=15 // pred_fallthru
          _
        // Predicated region
        $region76: #{forward.2} parent=15 // pred_check
          %p491 = pneg %p311
        $region77: #{forward.2} parent=15 // pred_check_branch
          %493 = sbr.rel (%p491) target = $region79
        $region78: #{forward.2} parent=15 // pred_region
          %p494 = scmp.lt.s32.totalorder %s24, 3
          %s495 = scalar_select %p494, %s24, 3
          %s496 = smul.addr %s495, 2
          %s497 = scalar_lea.vmem %s10, %s496
        $region79: #{forward.2} parent=15 // pred_fallthru
          _
      $region16: #{forward.2} parent=5 // pred_fallthru
        _
      %p498 = scmp.le.s32.totalorder 1, %s17
      %p499 = scmp.lt.s32.totalorder %s17, 5
      %p500 = pnand %p498, %p499
      %p501 = pneg %p500
      // Predicated region
      $region80: #{forward.2} parent=5 // pred_check
        _
      $region81: #{forward.2} parent=5 // pred_check_branch
        %503 = sbr.rel (%p500) target = $region83
      $region82: #{forward.2} parent=5 // pred_region
        %s504 = ssub.s32 %s17, 1
        %s505 = sand.u32 %s44, 1
        %s506 = sand.u32 %s44, 1
        %s507 = smul.addr %s506, 144
        %s508 = scalar_lea.vmem [#allocation2], %s507
        // Predicated region
        $region84: #{forward.2} parent=82 // pred_check
          %p509 = pneg %p57
        $region85: #{forward.2} parent=82 // pred_check_branch
          %511 = sbr.rel (%p509) target = $region87
        $region86: #{forward.2} parent=82 // pred_region
          _
        $region87: #{forward.2} parent=82 // pred_fallthru
          _
        %s512 = sand.u32 %s44, 1
        %s513 = sand.u32 %s44, 1
        %s514 = smul.addr %s513, 144
        %s515 = scalar_lea.vmem [#allocation2], %s514
        %p516 = pneg %p57
        %p517 = pneg %p54
        %p518 = scmp.lt.s32.totalorder %s26, 3
        %s519 = scalar_select %p518, %s26, 3
        %s520 = smul.addr %s519, 288
        %s521 = smul.addr %s520, 4
        %s522 = scalar_lea.vmem %s1, %s521
        %p523 = pneg %p83
        %p524 = pneg %p80
        %p525 = scmp.lt.s32.totalorder %s26, 3
        %s526 = scalar_select %p525, %s26, 3
        %s527 = smul.addr %s526, 2
        %s528 = scalar_lea.vmem %s2, %s527
        %p529 = pneg %p109
        %p530 = pneg %p106
        %p531 = scmp.lt.s32.totalorder %s26, 3
        %s532 = scalar_select %p531, %s26, 3
        %s533 = smul.addr %s532, 2
        %s534 = scalar_lea.vmem %s3, %s533
        %p535 = pneg %p135
        %p536 = pneg %p132
        %p537 = scmp.lt.s32.totalorder %s26, 3
        %s538 = scalar_select %p537, %s26, 3
        %s539 = smul.addr %s538, 2
        %s540 = scalar_lea.vmem %s4, %s539
        %p541 = pneg %p161
        %p542 = pneg %p158
        %p543 = scmp.lt.s32.totalorder %s26, 3
        %s544 = scalar_select %p543, %s26, 3
        %s545 = smul.addr %s544, 96
        %s546 = smul.addr %s545, 4
        %s547 = scalar_lea.vmem %s5, %s546
        %p548 = pneg %p187
        %p549 = pneg %p184
        %p550 = scmp.lt.s32.totalorder %s26, 3
        %s551 = scalar_select %p550, %s26, 3
        %s552 = scalar_lea.vmem %s6, %s551
        %p553 = pneg %p213
        %p554 = pneg %p210
        %p555 = scmp.lt.s32.totalorder %s26, 3
        %s556 = scalar_select %p555, %s26, 3
        %s557 = scalar_lea.vmem %s7, %s556
        %p558 = pneg %p239
        %p559 = pneg %p236
        %p560 = scmp.lt.s32.totalorder %s26, 3
        %s561 = scalar_select %p560, %s26, 3
        %s562 = scalar_lea.vmem %s8, %s561
        %p563 = pneg %p265
        %p564 = pneg %p262
        %p565 = scmp.lt.s32.totalorder %s26, 3
        %s566 = scalar_select %p565, %s26, 3
        %s567 = smul.addr %s566, 32
        %s568 = smul.addr %s567, 4
        %s569 = scalar_lea.vmem %s9, %s568
        %p570 = pneg %p291
        %p571 = pneg %p288
        %p572 = scmp.lt.s32.totalorder %s26, 3
        %s573 = scalar_select %p572, %s26, 3
        %s574 = smul.addr %s573, 2
        %s575 = scalar_lea.vmem %s10, %s574
        %p576 = pneg %p317
        %p577 = pneg %p314
        %p578 = pneg %p345
        %p579 = pneg %p342
        %p580 = scmp.lt.s32.totalorder %s26, 3
        %s581 = scalar_select %p580, %s26, 3
        %p582 = scmp.lt.s32.totalorder %s27, 0
        %s583 = scalar_select %p582, %s27, 0
        %s584 = smul.addr %s583, 2
        %s585 = smul.addr %s581, 2
        %s586 = sadd.s32 %s584, %s585
        %s587 = scalar_lea.vmem %s11, %s586
        %s588 = smul.u32 2, %s27
        %p589 = scmp.lt.s32.totalorder %s26, 3
        %s590 = scalar_select %p589, %s26, 3
        %s591 = smul.addr %s590, 288
        %s592 = smul.addr %s591, 4
        %s593 = scalar_lea.vmem %s1, %s592
        %p594 = scmp.lt.s32.totalorder %s26, 3
        %s595 = scalar_select %p594, %s26, 3
        %s596 = smul.addr %s595, 2
        %s597 = scalar_lea.vmem %s2, %s596
        %p598 = scmp.lt.s32.totalorder %s26, 3
        %s599 = scalar_select %p598, %s26, 3
        %s600 = smul.addr %s599, 2
        %s601 = scalar_lea.vmem %s3, %s600
        %p602 = scmp.lt.s32.totalorder %s26, 3
        %s603 = scalar_select %p602, %s26, 3
        %s604 = smul.addr %s603, 2
        %s605 = scalar_lea.vmem %s4, %s604
        %p606 = scmp.lt.s32.totalorder %s26, 3
        %s607 = scalar_select %p606, %s26, 3
        %s608 = smul.addr %s607, 96
        %s609 = smul.addr %s608, 4
        %s610 = scalar_lea.vmem %s5, %s609
        %p611 = scmp.lt.s32.totalorder %s26, 3
        %s612 = scalar_select %p611, %s26, 3
        %s613 = scalar_lea.vmem %s6, %s612
        %p614 = scmp.lt.s32.totalorder %s26, 3
        %s615 = scalar_select %p614, %s26, 3
        %s616 = scalar_lea.vmem %s7, %s615
        %p617 = scmp.lt.s32.totalorder %s26, 3
        %s618 = scalar_select %p617, %s26, 3
        %s619 = scalar_lea.vmem %s8, %s618
        %p620 = scmp.lt.s32.totalorder %s26, 3
        %s621 = scalar_select %p620, %s26, 3
        %s622 = smul.addr %s621, 32
        %s623 = smul.addr %s622, 4
        %s624 = scalar_lea.vmem %s9, %s623
        %p625 = scmp.lt.s32.totalorder %s26, 3
        %s626 = scalar_select %p625, %s26, 3
        %s627 = smul.addr %s626, 2
        %s628 = scalar_lea.vmem %s10, %s627
        %p629 = scmp.lt.s32.totalorder %s26, 3
        %s630 = scalar_select %p629, %s26, 3
        %p631 = scmp.lt.s32.totalorder %s27, 0
        %s632 = scalar_select %p631, %s27, 0
        %s633 = smul.addr %s632, 2
        %s634 = smul.addr %s630, 2
        %s635 = sadd.s32 %s633, %s634
        %s636 = scalar_lea.vmem %s11, %s635
        %v638 = vld [vmem:[%s508] sm:$0xff]
        %v639 = vld [vmem:[%s508 + $0x8] sm:$0xff]
        %v640 = vld [vmem:[%s508 + $0x10] sm:$0xff]
        %v641 = vld [vmem:[%s508 + $0x18] sm:$0xff]
        %v642 = vld [vmem:[%s508 + $0x20] sm:$0xff]
        %v643 = vld [vmem:[%s508 + $0x28] sm:$0xff]
        %v644 = vld [vmem:[%s508 + $0x30] sm:$0xff]
        %v645 = vld [vmem:[%s508 + $0x38] sm:$0xff]
        %v646 = vld [vmem:[%s508 + $0x40] sm:$0xff]
        %v647 = vld [vmem:[%s508 + $0x48] sm:$0xff]
        %v648 = vld [vmem:[%s508 + $0x50] sm:$0xff]
        %v649 = vld [vmem:[%s508 + $0x58] sm:$0xff]
        %v650 = vld [vmem:[%s508 + $0x60] sm:$0xff]
        %v651 = vld [vmem:[%s508 + $0x68] sm:$0xff]
        %v652 = vld [vmem:[%s508 + $0x70] sm:$0xff]
        %v653 = vld [vmem:[%s508 + $0x78] sm:$0xff]
        %v654 = vld [vmem:[%s508 + $0x80] sm:$0xff]
        %v655 = vld [vmem:[%s508 + $0x88] sm:$0xff]
        %v656 = vpack.c.bf16 %v647, %v638
        %v657 = vpack.c.bf16 %v648, %v639
        %v658 = vpack.c.bf16 %v649, %v640
        %v659 = vpack.c.bf16 %v650, %v641
        %v660 = vpack.c.bf16 %v651, %v642
        %v661 = vpack.c.bf16 %v652, %v643
        %v662 = vpack.c.bf16 %v653, %v644
        %v663 = vpack.c.bf16 %v654, %v645
        %v664 = vpack.c.bf16 %v655, %v646
        %vm665 = vcmask 384000
        %v668 = vsel %vm665, %v664, 0
        %v670 = vld [vmem:[%s593] sm:$0xff]
        %v671 = vld [vmem:[%s593 + $0x8] sm:$0xff]
        %v672 = vld [vmem:[%s593 + $0x10] sm:$0xff]
        %v673 = vld [vmem:[%s593 + $0x18] sm:$0xff]
        %v674 = vld [vmem:[%s593 + $0x20] sm:$0xff]
        %v675 = vld [vmem:[%s593 + $0x28] sm:$0xff]
        %v676 = vld [vmem:[%s593 + $0x30] sm:$0xff]
        %v677 = vld [vmem:[%s593 + $0x38] sm:$0xff]
        %v678 = vld [vmem:[%s593 + $0x40] sm:$0xff]
        %v679 = vld [vmem:[%s593 + $0x48] sm:$0xff]
        %v680 = vld [vmem:[%s593 + $0x50] sm:$0xff]
        %v681 = vld [vmem:[%s593 + $0x58] sm:$0xff]
        %v682 = vld [vmem:[%s593 + $0x60] sm:$0xff]
        %v683 = vld [vmem:[%s593 + $0x68] sm:$0xff]
        %v684 = vld [vmem:[%s593 + $0x70] sm:$0xff]
        %v685 = vld [vmem:[%s593 + $0x78] sm:$0xff]
        %v686 = vld [vmem:[%s593 + $0x80] sm:$0xff]
        %v687 = vld [vmem:[%s593 + $0x88] sm:$0xff]
        %v688 = vld [vmem:[%s593 + $0x90] sm:$0xff]
        %v689 = vld [vmem:[%s593 + $0x98] sm:$0xff]
        %v690 = vld [vmem:[%s593 + $0xa0] sm:$0xff]
        %v691 = vld [vmem:[%s593 + $0xa8] sm:$0xff]
        %v692 = vld [vmem:[%s593 + $0xb0] sm:$0xff]
        %v693 = vld [vmem:[%s593 + $0xb8] sm:$0xff]
        %v694 = vld [vmem:[%s593 + $0xc0] sm:$0xff]
        %v695 = vld [vmem:[%s593 + $0xc8] sm:$0xff]
        %v696 = vld [vmem:[%s593 + $0xd0] sm:$0xff]
        %v697 = vld [vmem:[%s593 + $0xd8] sm:$0xff]
        %v698 = vld [vmem:[%s593 + $0xe0] sm:$0xff]
        %v699 = vld [vmem:[%s593 + $0xe8] sm:$0xff]
        %v700 = vld [vmem:[%s593 + $0xf0] sm:$0xff]
        %v701 = vld [vmem:[%s593 + $0xf8] sm:$0xff]
        %v702 = vld [vmem:[%s593 + $0x100] sm:$0xff]
        %v703 = vld [vmem:[%s593 + $0x108] sm:$0xff]
        %v704 = vld [vmem:[%s593 + $0x110] sm:$0xff]
        %v705 = vld [vmem:[%s593 + $0x118] sm:$0xff]
        %v706 = vld [vmem:[%s593 + $0x120] sm:$0xff]
        %v707 = vld [vmem:[%s593 + $0x128] sm:$0xff]
        %v708 = vld [vmem:[%s593 + $0x130] sm:$0xff]
        %v709 = vld [vmem:[%s593 + $0x138] sm:$0xff]
        %v710 = vld [vmem:[%s593 + $0x140] sm:$0xff]
        %v711 = vld [vmem:[%s593 + $0x148] sm:$0xff]
        %v712 = vld [vmem:[%s593 + $0x150] sm:$0xff]
        %v713 = vld [vmem:[%s593 + $0x158] sm:$0xff]
        %v714 = vld [vmem:[%s593 + $0x160] sm:$0xff]
        %v715 = vld [vmem:[%s593 + $0x168] sm:$0xff]
        %v716 = vld [vmem:[%s593 + $0x170] sm:$0xff]
        %v717 = vld [vmem:[%s593 + $0x178] sm:$0xff]
        %v718 = vld [vmem:[%s593 + $0x180] sm:$0xff]
        %v719 = vld [vmem:[%s593 + $0x188] sm:$0xff]
        %v720 = vld [vmem:[%s593 + $0x190] sm:$0xff]
        %v721 = vld [vmem:[%s593 + $0x198] sm:$0xff]
        %v722 = vld [vmem:[%s593 + $0x1a0] sm:$0xff]
        %v723 = vld [vmem:[%s593 + $0x1a8] sm:$0xff]
        %v724 = vld [vmem:[%s593 + $0x1b0] sm:$0xff]
        %v725 = vld [vmem:[%s593 + $0x1b8] sm:$0xff]
        %v726 = vld [vmem:[%s593 + $0x1c0] sm:$0xff]
        %v727 = vld [vmem:[%s593 + $0x1c8] sm:$0xff]
        %v728 = vld [vmem:[%s593 + $0x1d0] sm:$0xff]
        %v729 = vld [vmem:[%s593 + $0x1d8] sm:$0xff]
        %v730 = vld [vmem:[%s593 + $0x1e0] sm:$0xff]
        %v731 = vld [vmem:[%s593 + $0x1e8] sm:$0xff]
        %v732 = vld [vmem:[%s593 + $0x1f0] sm:$0xff]
        %v733 = vld [vmem:[%s593 + $0x1f8] sm:$0xff]
        %v734 = vld [vmem:[%s593 + $0x200] sm:$0xff]
        %v735 = vld [vmem:[%s593 + $0x208] sm:$0xff]
        %v736 = vld [vmem:[%s593 + $0x210] sm:$0xff]
        %v737 = vld [vmem:[%s593 + $0x218] sm:$0xff]
        %v738 = vld [vmem:[%s593 + $0x220] sm:$0xff]
        %v739 = vld [vmem:[%s593 + $0x228] sm:$0xff]
        %v740 = vld [vmem:[%s593 + $0x230] sm:$0xff]
        %v741 = vld [vmem:[%s593 + $0x238] sm:$0xff]
        %v742 = vld [vmem:[%s593 + $0x240] sm:$0xff]
        %v743 = vld [vmem:[%s593 + $0x248] sm:$0xff]
        %v744 = vld [vmem:[%s593 + $0x250] sm:$0xff]
        %v745 = vld [vmem:[%s593 + $0x258] sm:$0xff]
        %v746 = vld [vmem:[%s593 + $0x260] sm:$0xff]
        %v747 = vld [vmem:[%s593 + $0x268] sm:$0xff]
        %v748 = vld [vmem:[%s593 + $0x270] sm:$0xff]
        %v749 = vld [vmem:[%s593 + $0x278] sm:$0xff]
        %v750 = vld [vmem:[%s593 + $0x280] sm:$0xff]
        %v751 = vld [vmem:[%s593 + $0x288] sm:$0xff]
        %v752 = vld [vmem:[%s593 + $0x290] sm:$0xff]
        %v753 = vld [vmem:[%s593 + $0x298] sm:$0xff]
        %v754 = vld [vmem:[%s593 + $0x2a0] sm:$0xff]
        %v755 = vld [vmem:[%s593 + $0x2a8] sm:$0xff]
        %v756 = vld [vmem:[%s593 + $0x2b0] sm:$0xff]
        %v757 = vld [vmem:[%s593 + $0x2b8] sm:$0xff]
        %v758 = vld [vmem:[%s593 + $0x2c0] sm:$0xff]
        %v759 = vld [vmem:[%s593 + $0x2c8] sm:$0xff]
        %v760 = vld [vmem:[%s593 + $0x2d0] sm:$0xff]
        %v761 = vld [vmem:[%s593 + $0x2d8] sm:$0xff]
        %v762 = vld [vmem:[%s593 + $0x2e0] sm:$0xff]
        %v763 = vld [vmem:[%s593 + $0x2e8] sm:$0xff]
        %v764 = vld [vmem:[%s593 + $0x2f0] sm:$0xff]
        %v765 = vld [vmem:[%s593 + $0x2f8] sm:$0xff]
        %v766 = vld [vmem:[%s593 + $0x300] sm:$0xff]
        %v767 = vld [vmem:[%s593 + $0x308] sm:$0xff]
        %v768 = vld [vmem:[%s593 + $0x310] sm:$0xff]
        %v769 = vld [vmem:[%s593 + $0x318] sm:$0xff]
        %v770 = vld [vmem:[%s593 + $0x320] sm:$0xff]
        %v771 = vld [vmem:[%s593 + $0x328] sm:$0xff]
        %v772 = vld [vmem:[%s593 + $0x330] sm:$0xff]
        %v773 = vld [vmem:[%s593 + $0x338] sm:$0xff]
        %v774 = vld [vmem:[%s593 + $0x340] sm:$0xff]
        %v775 = vld [vmem:[%s593 + $0x348] sm:$0xff]
        %v776 = vld [vmem:[%s593 + $0x350] sm:$0xff]
        %v777 = vld [vmem:[%s593 + $0x358] sm:$0xff]
        %v778 = vld [vmem:[%s593 + $0x360] sm:$0xff]
        %v779 = vld [vmem:[%s593 + $0x368] sm:$0xff]
        %v780 = vld [vmem:[%s593 + $0x370] sm:$0xff]
        %v781 = vld [vmem:[%s593 + $0x378] sm:$0xff]
        %v782 = vld [vmem:[%s593 + $0x380] sm:$0xff]
        %v783 = vld [vmem:[%s593 + $0x388] sm:$0xff]
        %v784 = vld [vmem:[%s593 + $0x390] sm:$0xff]
        %v785 = vld [vmem:[%s593 + $0x398] sm:$0xff]
        %v786 = vld [vmem:[%s593 + $0x3a0] sm:$0xff]
        %v787 = vld [vmem:[%s593 + $0x3a8] sm:$0xff]
        %v788 = vld [vmem:[%s593 + $0x3b0] sm:$0xff]
        %v789 = vld [vmem:[%s593 + $0x3b8] sm:$0xff]
        %v790 = vld [vmem:[%s593 + $0x3c0] sm:$0xff]
        %v791 = vld [vmem:[%s593 + $0x3c8] sm:$0xff]
        %v792 = vld [vmem:[%s593 + $0x3d0] sm:$0xff]
        %v793 = vld [vmem:[%s593 + $0x3d8] sm:$0xff]
        %v794 = vld [vmem:[%s593 + $0x3e0] sm:$0xff]
        %v795 = vld [vmem:[%s593 + $0x3e8] sm:$0xff]
        %v796 = vld [vmem:[%s593 + $0x3f0] sm:$0xff]
        %v797 = vld [vmem:[%s593 + $0x3f8] sm:$0xff]
        %v798 = vld [vmem:[%s593 + $0x400] sm:$0xff]
        %v799 = vld [vmem:[%s593 + $0x408] sm:$0xff]
        %v800 = vld [vmem:[%s593 + $0x410] sm:$0xff]
        %v801 = vld [vmem:[%s593 + $0x418] sm:$0xff]
        %v802 = vld [vmem:[%s593 + $0x420] sm:$0xff]
        %v803 = vld [vmem:[%s593 + $0x428] sm:$0xff]
        %v804 = vld [vmem:[%s593 + $0x430] sm:$0xff]
        %v805 = vld [vmem:[%s593 + $0x438] sm:$0xff]
        %v806 = vld [vmem:[%s593 + $0x440] sm:$0xff]
        %v807 = vld [vmem:[%s593 + $0x448] sm:$0xff]
        %v808 = vld [vmem:[%s593 + $0x450] sm:$0xff]
        %v809 = vld [vmem:[%s593 + $0x458] sm:$0xff]
        %v810 = vld [vmem:[%s593 + $0x460] sm:$0xff]
        %v811 = vld [vmem:[%s593 + $0x468] sm:$0xff]
        %v812 = vld [vmem:[%s593 + $0x470] sm:$0xff]
        %v813 = vld [vmem:[%s593 + $0x478] sm:$0xff]
        %v814 = vld [vmem:[%s597] sm:$0x3]
        %v816 = vlaneseq
        %v817 = vshrl.u32 %v816, 7
        %v818 = vsub.s32 0, %v817
        %v819 = vrot.slane %v814, %v818
        %v820 = vlaneseq
        %v821 = vshrl.u32 %v820, 7
        %v822 = vsub.s32 1, %v821
        %v823 = vrot.slane %v814, %v822
        %v970 = vunpack.c.l.b16 %v670
        %v971 = vunpack.c.h.b16 %v670
        %v972 = vunpack.c.l.b16 %v671
        %v973 = vunpack.c.h.b16 %v671
        %v974 = vunpack.c.l.b16 %v672
        %v975 = vunpack.c.h.b16 %v672
        %v976 = vunpack.c.l.b16 %v673
        %v977 = vunpack.c.h.b16 %v673
        %v978 = vunpack.c.l.b16 %v674
        %v979 = vunpack.c.h.b16 %v674
        %v980 = vunpack.c.l.b16 %v675
        %v981 = vunpack.c.h.b16 %v675
        %v982 = vunpack.c.l.b16 %v676
        %v983 = vunpack.c.h.b16 %v676
        %v984 = vunpack.c.l.b16 %v677
        %v985 = vunpack.c.h.b16 %v677
        %v986 = vunpack.c.l.b16 %v678
        %v987 = vunpack.c.h.b16 %v678
        %v988 = vunpack.c.l.b16 %v679
        %v989 = vunpack.c.h.b16 %v679
        %v990 = vunpack.c.l.b16 %v680
        %v991 = vunpack.c.h.b16 %v680
        %v992 = vunpack.c.l.b16 %v681
        %v993 = vunpack.c.h.b16 %v681
        %v994 = vunpack.c.l.b16 %v682
        %v995 = vunpack.c.h.b16 %v682
        %v996 = vunpack.c.l.b16 %v683
        %v997 = vunpack.c.h.b16 %v683
        %v998 = vunpack.c.l.b16 %v684
        %v999 = vunpack.c.h.b16 %v684
        %v1000 = vunpack.c.l.b16 %v685
        %v1001 = vunpack.c.h.b16 %v685
        %v1002 = vunpack.c.l.b16 %v686
        %v1003 = vunpack.c.h.b16 %v686
        %v1004 = vunpack.c.l.b16 %v687
        %v1005 = vunpack.c.h.b16 %v687
        %v1006 = vunpack.c.l.b16 %v688
        %v1007 = vunpack.c.h.b16 %v688
        %v1008 = vunpack.c.l.b16 %v689
        %v1009 = vunpack.c.h.b16 %v689
        %v1010 = vunpack.c.l.b16 %v690
        %v1011 = vunpack.c.h.b16 %v690
        %v1012 = vunpack.c.l.b16 %v691
        %v1013 = vunpack.c.h.b16 %v691
        %v1014 = vunpack.c.l.b16 %v692
        %v1015 = vunpack.c.h.b16 %v692
        %v1016 = vunpack.c.l.b16 %v693
        %v1017 = vunpack.c.h.b16 %v693
        %v1018 = vunpack.c.l.b16 %v694
        %v1019 = vunpack.c.h.b16 %v694
        %v1020 = vunpack.c.l.b16 %v695
        %v1021 = vunpack.c.h.b16 %v695
        %v1022 = vunpack.c.l.b16 %v696
        %v1023 = vunpack.c.h.b16 %v696
        %v1024 = vunpack.c.l.b16 %v697
        %v1025 = vunpack.c.h.b16 %v697
        %v1026 = vunpack.c.l.b16 %v698
        %v1027 = vunpack.c.h.b16 %v698
        %v1028 = vunpack.c.l.b16 %v699
        %v1029 = vunpack.c.h.b16 %v699
        %v1030 = vunpack.c.l.b16 %v700
        %v1031 = vunpack.c.h.b16 %v700
        %v1032 = vunpack.c.l.b16 %v701
        %v1033 = vunpack.c.h.b16 %v701
        %v1034 = vunpack.c.l.b16 %v702
        %v1035 = vunpack.c.h.b16 %v702
        %v1036 = vunpack.c.l.b16 %v703
        %v1037 = vunpack.c.h.b16 %v703
        %v1038 = vunpack.c.l.b16 %v704
        %v1039 = vunpack.c.h.b16 %v704
        %v1040 = vunpack.c.l.b16 %v705
        %v1041 = vunpack.c.h.b16 %v705
        %v1042 = vunpack.c.l.b16 %v706
        %v1043 = vunpack.c.h.b16 %v706
        %v1044 = vunpack.c.l.b16 %v707
        %v1045 = vunpack.c.h.b16 %v707
        %v1046 = vunpack.c.l.b16 %v708
        %v1047 = vunpack.c.h.b16 %v708
        %v1048 = vunpack.c.l.b16 %v709
        %v1049 = vunpack.c.h.b16 %v709
        %v1050 = vunpack.c.l.b16 %v710
        %v1051 = vunpack.c.h.b16 %v710
        %v1052 = vunpack.c.l.b16 %v711
        %v1053 = vunpack.c.h.b16 %v711
        %v1054 = vunpack.c.l.b16 %v712
        %v1055 = vunpack.c.h.b16 %v712
        %v1056 = vunpack.c.l.b16 %v713
        %v1057 = vunpack.c.h.b16 %v713
        %v1058 = vunpack.c.l.b16 %v714
        %v1059 = vunpack.c.h.b16 %v714
        %v1060 = vunpack.c.l.b16 %v715
        %v1061 = vunpack.c.h.b16 %v715
        %v1062 = vunpack.c.l.b16 %v716
        %v1063 = vunpack.c.h.b16 %v716
        %v1064 = vunpack.c.l.b16 %v717
        %v1065 = vunpack.c.h.b16 %v717
        %v1066 = vunpack.c.l.b16 %v718
        %v1067 = vunpack.c.h.b16 %v718
        %v1068 = vunpack.c.l.b16 %v719
        %v1069 = vunpack.c.h.b16 %v719
        %v1070 = vunpack.c.l.b16 %v720
        %v1071 = vunpack.c.h.b16 %v720
        %v1072 = vunpack.c.l.b16 %v721
        %v1073 = vunpack.c.h.b16 %v721
        %v1074 = vunpack.c.l.b16 %v722
        %v1075 = vunpack.c.h.b16 %v722
        %v1076 = vunpack.c.l.b16 %v723
        %v1077 = vunpack.c.h.b16 %v723
        %v1078 = vunpack.c.l.b16 %v724
        %v1079 = vunpack.c.h.b16 %v724
        %v1080 = vunpack.c.l.b16 %v725
        %v1081 = vunpack.c.h.b16 %v725
        %v1082 = vunpack.c.l.b16 %v726
        %v1083 = vunpack.c.h.b16 %v726
        %v1084 = vunpack.c.l.b16 %v727
        %v1085 = vunpack.c.h.b16 %v727
        %v1086 = vunpack.c.l.b16 %v728
        %v1087 = vunpack.c.h.b16 %v728
        %v1088 = vunpack.c.l.b16 %v729
        %v1089 = vunpack.c.h.b16 %v729
        %v1090 = vunpack.c.l.b16 %v730
        %v1091 = vunpack.c.h.b16 %v730
        %v1092 = vunpack.c.l.b16 %v731
        %v1093 = vunpack.c.h.b16 %v731
        %v1094 = vunpack.c.l.b16 %v732
        %v1095 = vunpack.c.h.b16 %v732
        %v1096 = vunpack.c.l.b16 %v733
        %v1097 = vunpack.c.h.b16 %v733
        %v1098 = vunpack.c.l.b16 %v734
        %v1099 = vunpack.c.h.b16 %v734
        %v1100 = vunpack.c.l.b16 %v735
        %v1101 = vunpack.c.h.b16 %v735
        %v1102 = vunpack.c.l.b16 %v736
        %v1103 = vunpack.c.h.b16 %v736
        %v1104 = vunpack.c.l.b16 %v737
        %v1105 = vunpack.c.h.b16 %v737
        %v1106 = vunpack.c.l.b16 %v738
        %v1107 = vunpack.c.h.b16 %v738
        %v1108 = vunpack.c.l.b16 %v739
        %v1109 = vunpack.c.h.b16 %v739
        %v1110 = vunpack.c.l.b16 %v740
        %v1111 = vunpack.c.h.b16 %v740
        %v1112 = vunpack.c.l.b16 %v741
        %v1113 = vunpack.c.h.b16 %v741
        %v1114 = vunpack.c.l.b16 %v742
        %v1115 = vunpack.c.h.b16 %v742
        %v1116 = vunpack.c.l.b16 %v743
        %v1117 = vunpack.c.h.b16 %v743
        %v1118 = vunpack.c.l.b16 %v744
        %v1119 = vunpack.c.h.b16 %v744
        %v1120 = vunpack.c.l.b16 %v745
        %v1121 = vunpack.c.h.b16 %v745
        %v1122 = vunpack.c.l.b16 %v746
        %v1123 = vunpack.c.h.b16 %v746
        %v1124 = vunpack.c.l.b16 %v747
        %v1125 = vunpack.c.h.b16 %v747
        %v1126 = vunpack.c.l.b16 %v748
        %v1127 = vunpack.c.h.b16 %v748
        %v1128 = vunpack.c.l.b16 %v749
        %v1129 = vunpack.c.h.b16 %v749
        %v1130 = vunpack.c.l.b16 %v750
        %v1131 = vunpack.c.h.b16 %v750
        %v1132 = vunpack.c.l.b16 %v751
        %v1133 = vunpack.c.h.b16 %v751
        %v1134 = vunpack.c.l.b16 %v752
        %v1135 = vunpack.c.h.b16 %v752
        %v1136 = vunpack.c.l.b16 %v753
        %v1137 = vunpack.c.h.b16 %v753
        %v1138 = vunpack.c.l.b16 %v754
        %v1139 = vunpack.c.h.b16 %v754
        %v1140 = vunpack.c.l.b16 %v755
        %v1141 = vunpack.c.h.b16 %v755
        %v1142 = vunpack.c.l.b16 %v756
        %v1143 = vunpack.c.h.b16 %v756
        %v1144 = vunpack.c.l.b16 %v757
        %v1145 = vunpack.c.h.b16 %v757
        %v1146 = vunpack.c.l.b16 %v758
        %v1147 = vunpack.c.h.b16 %v758
        %v1148 = vunpack.c.l.b16 %v759
        %v1149 = vunpack.c.h.b16 %v759
        %v1150 = vunpack.c.l.b16 %v760
        %v1151 = vunpack.c.h.b16 %v760
        %v1152 = vunpack.c.l.b16 %v761
        %v1153 = vunpack.c.h.b16 %v761
        %v1154 = vunpack.c.l.b16 %v762
        %v1155 = vunpack.c.h.b16 %v762
        %v1156 = vunpack.c.l.b16 %v763
        %v1157 = vunpack.c.h.b16 %v763
        %v1158 = vunpack.c.l.b16 %v764
        %v1159 = vunpack.c.h.b16 %v764
        %v1160 = vunpack.c.l.b16 %v765
        %v1161 = vunpack.c.h.b16 %v765
        %v1162 = vunpack.c.l.b16 %v766
        %v1163 = vunpack.c.h.b16 %v766
        %v1164 = vunpack.c.l.b16 %v767
        %v1165 = vunpack.c.h.b16 %v767
        %v1166 = vunpack.c.l.b16 %v768
        %v1167 = vunpack.c.h.b16 %v768
        %v1168 = vunpack.c.l.b16 %v769
        %v1169 = vunpack.c.h.b16 %v769
        %v1170 = vunpack.c.l.b16 %v770
        %v1171 = vunpack.c.h.b16 %v770
        %v1172 = vunpack.c.l.b16 %v771
        %v1173 = vunpack.c.h.b16 %v771
        %v1174 = vunpack.c.l.b16 %v772
        %v1175 = vunpack.c.h.b16 %v772
        %v1176 = vunpack.c.l.b16 %v773
        %v1177 = vunpack.c.h.b16 %v773
        %v1178 = vunpack.c.l.b16 %v774
        %v1179 = vunpack.c.h.b16 %v774
        %v1180 = vunpack.c.l.b16 %v775
        %v1181 = vunpack.c.h.b16 %v775
        %v1182 = vunpack.c.l.b16 %v776
        %v1183 = vunpack.c.h.b16 %v776
        %v1184 = vunpack.c.l.b16 %v777
        %v1185 = vunpack.c.h.b16 %v777
        %v1186 = vunpack.c.l.b16 %v778
        %v1187 = vunpack.c.h.b16 %v778
        %v1188 = vunpack.c.l.b16 %v779
        %v1189 = vunpack.c.h.b16 %v779
        %v1190 = vunpack.c.l.b16 %v780
        %v1191 = vunpack.c.h.b16 %v780
        %v1192 = vunpack.c.l.b16 %v781
        %v1193 = vunpack.c.h.b16 %v781
        %v1194 = vunpack.c.l.b16 %v782
        %v1195 = vunpack.c.h.b16 %v782
        %v1196 = vunpack.c.l.b16 %v783
        %v1197 = vunpack.c.h.b16 %v783
        %v1198 = vunpack.c.l.b16 %v784
        %v1199 = vunpack.c.h.b16 %v784
        %v1200 = vunpack.c.l.b16 %v785
        %v1201 = vunpack.c.h.b16 %v785
        %v1202 = vunpack.c.l.b16 %v786
        %v1203 = vunpack.c.h.b16 %v786
        %v1204 = vunpack.c.l.b16 %v787
        %v1205 = vunpack.c.h.b16 %v787
        %v1206 = vunpack.c.l.b16 %v788
        %v1207 = vunpack.c.h.b16 %v788
        %v1208 = vunpack.c.l.b16 %v789
        %v1209 = vunpack.c.h.b16 %v789
        %v1210 = vunpack.c.l.b16 %v790
        %v1211 = vunpack.c.h.b16 %v790
        %v1212 = vunpack.c.l.b16 %v791
        %v1213 = vunpack.c.h.b16 %v791
        %v1214 = vunpack.c.l.b16 %v792
        %v1215 = vunpack.c.h.b16 %v792
        %v1216 = vunpack.c.l.b16 %v793
        %v1217 = vunpack.c.h.b16 %v793
        %v1218 = vunpack.c.l.b16 %v794
        %v1219 = vunpack.c.h.b16 %v794
        %v1220 = vunpack.c.l.b16 %v795
        %v1221 = vunpack.c.h.b16 %v795
        %v1222 = vunpack.c.l.b16 %v796
        %v1223 = vunpack.c.h.b16 %v796
        %v1224 = vunpack.c.l.b16 %v797
        %v1225 = vunpack.c.h.b16 %v797
        %v1226 = vunpack.c.l.b16 %v798
        %v1227 = vunpack.c.h.b16 %v798
        %v1228 = vunpack.c.l.b16 %v799
        %v1229 = vunpack.c.h.b16 %v799
        %v1230 = vunpack.c.l.b16 %v800
        %v1231 = vunpack.c.h.b16 %v800
        %v1232 = vunpack.c.l.b16 %v801
        %v1233 = vunpack.c.h.b16 %v801
        %v1234 = vunpack.c.l.b16 %v802
        %v1235 = vunpack.c.h.b16 %v802
        %v1236 = vunpack.c.l.b16 %v803
        %v1237 = vunpack.c.h.b16 %v803
        %v1238 = vunpack.c.l.b16 %v804
        %v1239 = vunpack.c.h.b16 %v804
        %v1240 = vunpack.c.l.b16 %v805
        %v1241 = vunpack.c.h.b16 %v805
        %v1242 = vunpack.c.l.b16 %v806
        %v1243 = vunpack.c.h.b16 %v806
        %v1244 = vunpack.c.l.b16 %v807
        %v1245 = vunpack.c.h.b16 %v807
        %v1246 = vunpack.c.l.b16 %v808
        %v1247 = vunpack.c.h.b16 %v808
        %v1248 = vunpack.c.l.b16 %v809
        %v1249 = vunpack.c.h.b16 %v809
        %v1250 = vunpack.c.l.b16 %v810
        %v1251 = vunpack.c.h.b16 %v810
        %v1252 = vunpack.c.l.b16 %v811
        %v1253 = vunpack.c.h.b16 %v811
        %v1254 = vunpack.c.l.b16 %v812
        %v1255 = vunpack.c.h.b16 %v812
        %v1256 = vunpack.c.l.b16 %v813
        %v1257 = vunpack.c.h.b16 %v813
        %v1258 = vpack.c.b16 %v972, %v970
        %v1259 = vpack.c.b16 %v973, %v971
        %v1260 = vpack.c.b16 %v976, %v974
        %v1261 = vpack.c.b16 %v977, %v975
        %v1262 = vpack.c.b16 %v980, %v978
        %v1263 = vpack.c.b16 %v981, %v979
        %v1264 = vpack.c.b16 %v984, %v982
        %v1265 = vpack.c.b16 %v985, %v983
        %v1266 = vpack.c.b16 %v988, %v986
        %v1267 = vpack.c.b16 %v989, %v987
        %v1268 = vpack.c.b16 %v992, %v990
        %v1269 = vpack.c.b16 %v993, %v991
        %v1270 = vpack.c.b16 %v996, %v994
        %v1271 = vpack.c.b16 %v997, %v995
        %v1272 = vpack.c.b16 %v1000, %v998
        %v1273 = vpack.c.b16 %v1001, %v999
        %v1274 = vpack.c.b16 %v1004, %v1002
        %v1275 = vpack.c.b16 %v1005, %v1003
        %v1276 = vpack.c.b16 %v1008, %v1006
        %v1277 = vpack.c.b16 %v1009, %v1007
        %v1278 = vpack.c.b16 %v1012, %v1010
        %v1279 = vpack.c.b16 %v1013, %v1011
        %v1280 = vpack.c.b16 %v1016, %v1014
        %v1281 = vpack.c.b16 %v1017, %v1015
        %v1282 = vpack.c.b16 %v1020, %v1018
        %v1283 = vpack.c.b16 %v1021, %v1019
        %v1284 = vpack.c.b16 %v1024, %v1022
        %v1285 = vpack.c.b16 %v1025, %v1023
        %v1286 = vpack.c.b16 %v1028, %v1026
        %v1287 = vpack.c.b16 %v1029, %v1027
        %v1288 = vpack.c.b16 %v1032, %v1030
        %v1289 = vpack.c.b16 %v1033, %v1031
        %v1290 = vpack.c.b16 %v1036, %v1034
        %v1291 = vpack.c.b16 %v1037, %v1035
        %v1292 = vpack.c.b16 %v1040, %v1038
        %v1293 = vpack.c.b16 %v1041, %v1039
        %v1294 = vpack.c.b16 %v1044, %v1042
        %v1295 = vpack.c.b16 %v1045, %v1043
        %v1296 = vpack.c.b16 %v1048, %v1046
        %v1297 = vpack.c.b16 %v1049, %v1047
        %v1298 = vpack.c.b16 %v1052, %v1050
        %v1299 = vpack.c.b16 %v1053, %v1051
        %v1300 = vpack.c.b16 %v1056, %v1054
        %v1301 = vpack.c.b16 %v1057, %v1055
        %v1302 = vpack.c.b16 %v1060, %v1058
        %v1303 = vpack.c.b16 %v1061, %v1059
        %v1304 = vpack.c.b16 %v1064, %v1062
        %v1305 = vpack.c.b16 %v1065, %v1063
        %v1306 = vpack.c.b16 %v1068, %v1066
        %v1307 = vpack.c.b16 %v1069, %v1067
        %v1308 = vpack.c.b16 %v1072, %v1070
        %v1309 = vpack.c.b16 %v1073, %v1071
        %v1310 = vpack.c.b16 %v1076, %v1074
        %v1311 = vpack.c.b16 %v1077, %v1075
        %v1312 = vpack.c.b16 %v1080, %v1078
        %v1313 = vpack.c.b16 %v1081, %v1079
        %v1314 = vpack.c.b16 %v1084, %v1082
        %v1315 = vpack.c.b16 %v1085, %v1083
        %v1316 = vpack.c.b16 %v1088, %v1086
        %v1317 = vpack.c.b16 %v1089, %v1087
        %v1318 = vpack.c.b16 %v1092, %v1090
        %v1319 = vpack.c.b16 %v1093, %v1091
        %v1320 = vpack.c.b16 %v1096, %v1094
        %v1321 = vpack.c.b16 %v1097, %v1095
        %v1322 = vpack.c.b16 %v1100, %v1098
        %v1323 = vpack.c.b16 %v1101, %v1099
        %v1324 = vpack.c.b16 %v1104, %v1102
        %v1325 = vpack.c.b16 %v1105, %v1103
        %v1326 = vpack.c.b16 %v1108, %v1106
        %v1327 = vpack.c.b16 %v1109, %v1107
        %v1328 = vpack.c.b16 %v1112, %v1110
        %v1329 = vpack.c.b16 %v1113, %v1111
        %v1330 = vpack.c.b16 %v1116, %v1114
        %v1331 = vpack.c.b16 %v1117, %v1115
        %v1332 = vpack.c.b16 %v1120, %v1118
        %v1333 = vpack.c.b16 %v1121, %v1119
        %v1334 = vpack.c.b16 %v1124, %v1122
        %v1335 = vpack.c.b16 %v1125, %v1123
        %v1336 = vpack.c.b16 %v1128, %v1126
        %v1337 = vpack.c.b16 %v1129, %v1127
        %v1338 = vpack.c.b16 %v1132, %v1130
        %v1339 = vpack.c.b16 %v1133, %v1131
        %v1340 = vpack.c.b16 %v1136, %v1134
        %v1341 = vpack.c.b16 %v1137, %v1135
        %v1342 = vpack.c.b16 %v1140, %v1138
        %v1343 = vpack.c.b16 %v1141, %v1139
        %v1344 = vpack.c.b16 %v1144, %v1142
        %v1345 = vpack.c.b16 %v1145, %v1143
        %v1346 = vpack.c.b16 %v1148, %v1146
        %v1347 = vpack.c.b16 %v1149, %v1147
        %v1348 = vpack.c.b16 %v1152, %v1150
        %v1349 = vpack.c.b16 %v1153, %v1151
        %v1350 = vpack.c.b16 %v1156, %v1154
        %v1351 = vpack.c.b16 %v1157, %v1155
        %v1352 = vpack.c.b16 %v1160, %v1158
        %v1353 = vpack.c.b16 %v1161, %v1159
        %v1354 = vpack.c.b16 %v1164, %v1162
        %v1355 = vpack.c.b16 %v1165, %v1163
        %v1356 = vpack.c.b16 %v1168, %v1166
        %v1357 = vpack.c.b16 %v1169, %v1167
        %v1358 = vpack.c.b16 %v1172, %v1170
        %v1359 = vpack.c.b16 %v1173, %v1171
        %v1360 = vpack.c.b16 %v1176, %v1174
        %v1361 = vpack.c.b16 %v1177, %v1175
        %v1362 = vpack.c.b16 %v1180, %v1178
        %v1363 = vpack.c.b16 %v1181, %v1179
        %v1364 = vpack.c.b16 %v1184, %v1182
        %v1365 = vpack.c.b16 %v1185, %v1183
        %v1366 = vpack.c.b16 %v1188, %v1186
        %v1367 = vpack.c.b16 %v1189, %v1187
        %v1368 = vpack.c.b16 %v1192, %v1190
        %v1369 = vpack.c.b16 %v1193, %v1191
        %v1370 = vpack.c.b16 %v1196, %v1194
        %v1371 = vpack.c.b16 %v1197, %v1195
        %v1372 = vpack.c.b16 %v1200, %v1198
        %v1373 = vpack.c.b16 %v1201, %v1199
        %v1374 = vpack.c.b16 %v1204, %v1202
        %v1375 = vpack.c.b16 %v1205, %v1203
        %v1376 = vpack.c.b16 %v1208, %v1206
        %v1377 = vpack.c.b16 %v1209, %v1207
        %v1378 = vpack.c.b16 %v1212, %v1210
        %v1379 = vpack.c.b16 %v1213, %v1211
        %v1380 = vpack.c.b16 %v1216, %v1214
        %v1381 = vpack.c.b16 %v1217, %v1215
        %v1382 = vpack.c.b16 %v1220, %v1218
        %v1383 = vpack.c.b16 %v1221, %v1219
        %v1384 = vpack.c.b16 %v1224, %v1222
        %v1385 = vpack.c.b16 %v1225, %v1223
        %v1386 = vpack.c.b16 %v1228, %v1226
        %v1387 = vpack.c.b16 %v1229, %v1227
        %v1388 = vpack.c.b16 %v1232, %v1230
        %v1389 = vpack.c.b16 %v1233, %v1231
        %v1390 = vpack.c.b16 %v1236, %v1234
        %v1391 = vpack.c.b16 %v1237, %v1235
        %v1392 = vpack.c.b16 %v1240, %v1238
        %v1393 = vpack.c.b16 %v1241, %v1239
        %v1394 = vpack.c.b16 %v1244, %v1242
        %v1395 = vpack.c.b16 %v1245, %v1243
        %v1396 = vpack.c.b16 %v1248, %v1246
        %v1397 = vpack.c.b16 %v1249, %v1247
        %v1398 = vpack.c.b16 %v1252, %v1250
        %v1399 = vpack.c.b16 %v1253, %v1251
        %v1400 = vpack.c.b16 %v1256, %v1254
        %v1401 = vpack.c.b16 %v1257, %v1255
        %1546 = vmatprep.subr.bf16.mxu0 %v1273
        %1547 = vmatpush1.bf16.msra.mxu0 %v1272
        %1548 = vmatprep.subr.bf16.mxu0 %v1271
        %1549 = vmatpush1.bf16.msra.mxu0 %v1270
        %1550 = vmatprep.subr.bf16.mxu0 %v1269
        %1551 = vmatpush1.bf16.msra.mxu0 %v1268
        %1552 = vmatprep.subr.bf16.mxu0 %v1267
        %1553 = vmatpush1.bf16.msra.mxu0 %v1266
        %1554 = vmatprep.subr.bf16.mxu0 %v1265
        %1555 = vmatpush1.bf16.msra.mxu0 %v1264
        %1556 = vmatprep.subr.bf16.mxu0 %v1263
        %1557 = vmatpush1.bf16.msra.mxu0 %v1262
        %1558 = vmatprep.subr.bf16.mxu0 %v1261
        %1559 = vmatpush1.bf16.msra.mxu0 %v1260
        %1560 = vmatprep.subr.bf16.mxu0 %v1259
        %1561 = vmatpush1.bf16.msra.mxu0 %v1258
        %1562 = vmatprep.subr.bf16.mxu0 %v1289
        %1563 = vmatpush2.bf16.msra.mxu0 %v1288
        %1564 = vmatprep.subr.bf16.mxu0 %v1287
        %1565 = vmatpush2.bf16.msra.mxu0 %v1286
        %1566 = vmatprep.subr.bf16.mxu0 %v1285
        %1567 = vmatpush2.bf16.msra.mxu0 %v1284
        %1568 = vmatprep.subr.bf16.mxu0 %v1283
        %1569 = vmatpush2.bf16.msra.mxu0 %v1282
        %1570 = vmatprep.subr.bf16.mxu0 %v1281
        %1571 = vmatpush2.bf16.msra.mxu0 %v1280
        %1572 = vmatprep.subr.bf16.mxu0 %v1279
        %1573 = vmatpush2.bf16.msra.mxu0 %v1278
        %1574 = vmatprep.subr.bf16.mxu0 %v1277
        %1575 = vmatpush2.bf16.msra.mxu0 %v1276
        %1576 = vmatprep.subr.bf16.mxu0 %v1275
        %1577 = vmatpush2.bf16.msra.mxu0 %v1274
        %1578 = vmatprep.mubr.bf16.mxu0 %v657
        %1579 = vmatmul.mubr.bf16.gmra.mxu0 %v656
        %v1580 = vpop.f32.mrf.mxu0
        %v1581 = vadd.f32 %v819, %v1580
        %v1582 = vpop.f32.mrf.mxu0
        %v1583 = vadd.f32 %v823, %v1582
        %v1584 = vpop.f32.mrf.mxu0
        %v1585 = vadd.f32 %v819, %v1584
        %v1586 = vpop.f32.mrf.mxu0
        %v1587 = vadd.f32 %v823, %v1586
        %1588 = vdwg.mxu0
        %1589 = vmatprep.subr.bf16.mxu0 %v1305
        %1590 = vmatpush1.bf16.msra.mxu0 %v1304
        %1591 = vmatprep.subr.bf16.mxu0 %v1303
        %1592 = vmatpush1.bf16.msra.mxu0 %v1302
        %1593 = vmatprep.subr.bf16.mxu0 %v1301
        %1594 = vmatpush1.bf16.msra.mxu0 %v1300
        %1595 = vmatprep.subr.bf16.mxu0 %v1299
        %1596 = vmatpush1.bf16.msra.mxu0 %v1298
        %1597 = vmatprep.subr.bf16.mxu0 %v1297
        %1598 = vmatpush1.bf16.msra.mxu0 %v1296
        %1599 = vmatprep.subr.bf16.mxu0 %v1295
        %1600 = vmatpush1.bf16.msra.mxu0 %v1294
        %1601 = vmatprep.subr.bf16.mxu0 %v1293
        %1602 = vmatpush1.bf16.msra.mxu0 %v1292
        %1603 = vmatprep.subr.bf16.mxu0 %v1291
        %1604 = vmatpush1.bf16.msra.mxu0 %v1290
        %1605 = vmatprep.subr.bf16.mxu0 %v1321
        %1606 = vmatpush2.bf16.msra.mxu0 %v1320
        %1607 = vmatprep.subr.bf16.mxu0 %v1319
        %1608 = vmatpush2.bf16.msra.mxu0 %v1318
        %1609 = vmatprep.subr.bf16.mxu0 %v1317
        %1610 = vmatpush2.bf16.msra.mxu0 %v1316
        %1611 = vmatprep.subr.bf16.mxu0 %v1315
        %1612 = vmatpush2.bf16.msra.mxu0 %v1314
        %1613 = vmatprep.subr.bf16.mxu0 %v1313
        %1614 = vmatpush2.bf16.msra.mxu0 %v1312
        %1615 = vmatprep.subr.bf16.mxu0 %v1311
        %1616 = vmatpush2.bf16.msra.mxu0 %v1310
        %1617 = vmatprep.subr.bf16.mxu0 %v1309
        %1618 = vmatpush2.bf16.msra.mxu0 %v1308
        %1619 = vmatprep.subr.bf16.mxu0 %v1307
        %1620 = vmatpush2.bf16.msra.mxu0 %v1306
        %1621 = vmatprep.mubr.bf16.mxu0 %v659
        %1622 = vmatmul.mubr.bf16.gmra.mxu0 %v658
        %v1623 = vpop.f32.mrf.mxu0
        %v1624 = vadd.f32 %v1581, %v1623
        %v1625 = vpop.f32.mrf.mxu0
        %v1626 = vadd.f32 %v1583, %v1625
        %v1627 = vpop.f32.mrf.mxu0
        %v1628 = vadd.f32 %v1585, %v1627
        %v1629 = vpop.f32.mrf.mxu0
        %v1630 = vadd.f32 %v1587, %v1629
        %1631 = vdwg.mxu0
        %1632 = vmatprep.subr.bf16.mxu0 %v1337
        %1633 = vmatpush1.bf16.msra.mxu0 %v1336
        %1634 = vmatprep.subr.bf16.mxu0 %v1335
        %1635 = vmatpush1.bf16.msra.mxu0 %v1334
        %1636 = vmatprep.subr.bf16.mxu0 %v1333
        %1637 = vmatpush1.bf16.msra.mxu0 %v1332
        %1638 = vmatprep.subr.bf16.mxu0 %v1331
        %1639 = vmatpush1.bf16.msra.mxu0 %v1330
        %1640 = vmatprep.subr.bf16.mxu0 %v1329
        %1641 = vmatpush1.bf16.msra.mxu0 %v1328
        %1642 = vmatprep.subr.bf16.mxu0 %v1327
        %1643 = vmatpush1.bf16.msra.mxu0 %v1326
        %1644 = vmatprep.subr.bf16.mxu0 %v1325
        %1645 = vmatpush1.bf16.msra.mxu0 %v1324
        %1646 = vmatprep.subr.bf16.mxu0 %v1323
        %1647 = vmatpush1.bf16.msra.mxu0 %v1322
        %1648 = vmatprep.subr.bf16.mxu0 %v1353
        %1649 = vmatpush2.bf16.msra.mxu0 %v1352
        %1650 = vmatprep.subr.bf16.mxu0 %v1351
        %1651 = vmatpush2.bf16.msra.mxu0 %v1350
        %1652 = vmatprep.subr.bf16.mxu0 %v1349
        %1653 = vmatpush2.bf16.msra.mxu0 %v1348
        %1654 = vmatprep.subr.bf16.mxu0 %v1347
        %1655 = vmatpush2.bf16.msra.mxu0 %v1346
        %1656 = vmatprep.subr.bf16.mxu0 %v1345
        %1657 = vmatpush2.bf16.msra.mxu0 %v1344
        %1658 = vmatprep.subr.bf16.mxu0 %v1343
        %1659 = vmatpush2.bf16.msra.mxu0 %v1342
        %1660 = vmatprep.subr.bf16.mxu0 %v1341
        %1661 = vmatpush2.bf16.msra.mxu0 %v1340
        %1662 = vmatprep.subr.bf16.mxu0 %v1339
        %1663 = vmatpush2.bf16.msra.mxu0 %v1338
        %1664 = vmatprep.mubr.bf16.mxu0 %v661
        %1665 = vmatmul.mubr.bf16.gmra.mxu0 %v660
        %v1666 = vpop.f32.mrf.mxu0
        %v1667 = vadd.f32 %v1624, %v1666
        %v1668 = vpop.f32.mrf.mxu0
        %v1669 = vadd.f32 %v1626, %v1668
        %v1670 = vpop.f32.mrf.mxu0
        %v1671 = vadd.f32 %v1628, %v1670
        %v1672 = vpop.f32.mrf.mxu0
        %v1673 = vadd.f32 %v1630, %v1672
        %1674 = vdwg.mxu0
        %1675 = vmatprep.subr.bf16.mxu0 %v1369
        %1676 = vmatpush1.bf16.msra.mxu0 %v1368
        %1677 = vmatprep.subr.bf16.mxu0 %v1367
        %1678 = vmatpush1.bf16.msra.mxu0 %v1366
        %1679 = vmatprep.subr.bf16.mxu0 %v1365
        %1680 = vmatpush1.bf16.msra.mxu0 %v1364
        %1681 = vmatprep.subr.bf16.mxu0 %v1363
        %1682 = vmatpush1.bf16.msra.mxu0 %v1362
        %1683 = vmatprep.subr.bf16.mxu0 %v1361
        %1684 = vmatpush1.bf16.msra.mxu0 %v1360
        %1685 = vmatprep.subr.bf16.mxu0 %v1359
        %1686 = vmatpush1.bf16.msra.mxu0 %v1358
        %1687 = vmatprep.subr.bf16.mxu0 %v1357
        %1688 = vmatpush1.bf16.msra.mxu0 %v1356
        %1689 = vmatprep.subr.bf16.mxu0 %v1355
        %1690 = vmatpush1.bf16.msra.mxu0 %v1354
        %1691 = vmatprep.subr.bf16.mxu0 %v1385
        %1692 = vmatpush2.bf16.msra.mxu0 %v1384
        %1693 = vmatprep.subr.bf16.mxu0 %v1383
        %1694 = vmatpush2.bf16.msra.mxu0 %v1382
        %1695 = vmatprep.subr.bf16.mxu0 %v1381
        %1696 = vmatpush2.bf16.msra.mxu0 %v1380
        %1697 = vmatprep.subr.bf16.mxu0 %v1379
        %1698 = vmatpush2.bf16.msra.mxu0 %v1378
        %1699 = vmatprep.subr.bf16.mxu0 %v1377
        %1700 = vmatpush2.bf16.msra.mxu0 %v1376
        %1701 = vmatprep.subr.bf16.mxu0 %v1375
        %1702 = vmatpush2.bf16.msra.mxu0 %v1374
        %1703 = vmatprep.subr.bf16.mxu0 %v1373
        %1704 = vmatpush2.bf16.msra.mxu0 %v1372
        %1705 = vmatprep.subr.bf16.mxu0 %v1371
        %1706 = vmatpush2.bf16.msra.mxu0 %v1370
        %1707 = vmatprep.mubr.bf16.mxu0 %v663
        %1708 = vmatmul.mubr.bf16.gmra.mxu0 %v662
        %v1709 = vpop.f32.mrf.mxu0
        %v1710 = vadd.f32 %v1667, %v1709
        %v1711 = vpop.f32.mrf.mxu0
        %v1712 = vadd.f32 %v1669, %v1711
        %v1713 = vpop.f32.mrf.mxu0
        %v1714 = vadd.f32 %v1671, %v1713
        %v1715 = vpop.f32.mrf.mxu0
        %v1716 = vadd.f32 %v1673, %v1715
        %1717 = vdwg.mxu0
        %1718 = vmatprep.subr.bf16.mxu0 %v1401
        %1719 = vmatpush1.bf16.msra.mxu0 %v1400
        %1720 = vmatprep.subr.bf16.mxu0 %v1399
        %1721 = vmatpush1.bf16.msra.mxu0 %v1398
        %1722 = vmatprep.subr.bf16.mxu0 %v1397
        %1723 = vmatpush1.bf16.msra.mxu0 %v1396
        %1724 = vmatprep.subr.bf16.mxu0 %v1395
        %1725 = vmatpush1.bf16.msra.mxu0 %v1394
        %1726 = vmatprep.subr.bf16.mxu0 %v1393
        %1727 = vmatpush1.bf16.msra.mxu0 %v1392
        %1728 = vmatprep.subr.bf16.mxu0 %v1391
        %1729 = vmatpush1.bf16.msra.mxu0 %v1390
        %1730 = vmatprep.subr.bf16.mxu0 %v1389
        %1731 = vmatpush1.bf16.msra.mxu0 %v1388
        %1732 = vmatprep.subr.bf16.mxu0 %v1387
        %1733 = vmatpush1.bf16.msra.mxu0 %v1386
        %1734 = vmatprep.subr.bf16.mxu0 0
        %1735 = vmatpush2.bf16.msra.mxu0 0
        %1736 = vmatprep.subr.bf16.mxu0 0
        %1737 = vmatpush2.bf16.msra.mxu0 0
        %1738 = vmatprep.subr.bf16.mxu0 0
        %1739 = vmatpush2.bf16.msra.mxu0 0
        %1740 = vmatprep.subr.bf16.mxu0 0
        %1741 = vmatpush2.bf16.msra.mxu0 0
        %1742 = vmatprep.subr.bf16.mxu0 0
        %1743 = vmatpush2.bf16.msra.mxu0 0
        %1744 = vmatprep.subr.bf16.mxu0 0
        %1745 = vmatpush2.bf16.msra.mxu0 0
        %1746 = vmatprep.subr.bf16.mxu0 0
        %1747 = vmatpush2.bf16.msra.mxu0 0
        %1748 = vmatprep.subr.bf16.mxu0 0
        %1749 = vmatpush2.bf16.msra.mxu0 0
        %1750 = vmatprep.mubr.bf16.mxu0 0
        %1751 = vmatmul.mubr.bf16.gmra.mxu0 %v668
        %v1752 = vpop.f32.mrf.mxu0
        %v1753 = vadd.f32 %v1710, %v1752
        %v1754 = vpop.f32.mrf.mxu0
        %v1755 = vadd.f32 %v1712, %v1754
        %v1756 = vpop.f32.mrf.mxu0
        %v1757 = vadd.f32 %v1714, %v1756
        %v1758 = vpop.f32.mrf.mxu0
        %v1759 = vadd.f32 %v1716, %v1758
        %1760 = vdwg.mxu0
        %v1761 = vadd.f32 %v1753, %v1755
        %1762 = vadd.xlane.f32.xlu0 %v1761
        %v1763 = vpop.xlane.xlu0 %1762
        %v1764 = vadd.f32 %v1757, %v1759
        %1765 = vadd.xlane.f32.xlu0 %v1764
        %v1766 = vpop.xlane.xlu0 %1765
        %v1767 = vrcp.pop 256.0
        %v1768 = vmul.f32 %v1763, %v1767
        %v1769 = vmul.f32 %v1766, %v1767
        %v1770 = vsub.f32 %v1753, %v1768
        %v1771 = vsub.f32 %v1755, %v1768
        %v1772 = vsub.f32 %v1757, %v1769
        %v1773 = vsub.f32 %v1759, %v1769
        %v1774 = vmul.f32 %v1770, %v1770
        %v1775 = vmul.f32 %v1771, %v1771
        %v1776 = vmul.f32 %v1772, %v1772
        %v1777 = vmul.f32 %v1773, %v1773
        %v1778 = vadd.f32 %v1774, %v1775
        %1779 = vadd.xlane.f32.xlu0 %v1778
        %v1780 = vpop.xlane.xlu0 %1779
        %v1781 = vadd.f32 %v1776, %v1777
        %1782 = vadd.xlane.f32.xlu0 %v1781
        %v1783 = vpop.xlane.xlu0 %1782
        %v1784 = vmul.f32 %v1780, %v1767
        %v1785 = vmul.f32 %v1783, %v1767
        %v1786 = vadd.f32 %v1784, 1e-05
        %v1787 = vadd.f32 %v1785, 1e-05
        %v1788 = vrsqrt.pop %v1786
        %v1789 = vrsqrt.pop %v1787
        %v1790 = vmul.f32 %v1770, %v1788
        %v1791 = vmul.f32 %v1771, %v1788
        %v1792 = vmul.f32 %v1772, %v1789
        %v1793 = vmul.f32 %v1773, %v1789
        %v1794 = vld [vmem:[%s601] sm:$0x3]
        %v1796 = vlaneseq
        %v1797 = vshrl.u32 %v1796, 7
        %v1798 = vsub.s32 0, %v1797
        %v1799 = vrot.slane %v1794, %v1798
        %v1800 = vlaneseq
        %v1801 = vshrl.u32 %v1800, 7
        %v1802 = vsub.s32 1, %v1801
        %v1803 = vrot.slane %v1794, %v1802
        %v1806 = vmul.f32 %v1790, %v1799
        %v1807 = vmul.f32 %v1791, %v1803
        %v1808 = vmul.f32 %v1792, %v1799
        %v1809 = vmul.f32 %v1793, %v1803
        %v1810 = vld [vmem:[%s605] sm:$0x3]
        %v1812 = vlaneseq
        %v1813 = vshrl.u32 %v1812, 7
        %v1814 = vsub.s32 0, %v1813
        %v1815 = vrot.slane %v1810, %v1814
        %v1816 = vlaneseq
        %v1817 = vshrl.u32 %v1816, 7
        %v1818 = vsub.s32 1, %v1817
        %v1819 = vrot.slane %v1810, %v1818
        %v1822 = vadd.f32 %v1806, %v1815
        %v1823 = vadd.f32 %v1807, %v1819
        %v1824 = vadd.f32 %v1808, %v1815
        %v1825 = vadd.f32 %v1809, %v1819
        %v1826 = vmax.f32 %v1822, 0.0
        %v1827 = vmax.f32 %v1823, 0.0
        %v1828 = vmax.f32 %v1824, 0.0
        %v1829 = vmax.f32 %v1825, 0.0
        %v1830 = vpack.c.bf16 %v1828, %v1826
        %v1831 = vpack.c.bf16 %v1829, %v1827
        %v1832 = vld [vmem:[%s610] sm:$0xff]
        %v1833 = vld [vmem:[%s610 + $0x8] sm:$0xf]
        %v1834 = vld [vmem:[%s610 + $0xc] sm:$0xff]
        %v1835 = vld [vmem:[%s610 + $0x14] sm:$0xf]
        %v1836 = vld [vmem:[%s610 + $0x18] sm:$0xff]
        %v1837 = vld [vmem:[%s610 + $0x20] sm:$0xf]
        %v1838 = vld [vmem:[%s610 + $0x24] sm:$0xff]
        %v1839 = vld [vmem:[%s610 + $0x2c] sm:$0xf]
        %v1840 = vld [vmem:[%s610 + $0x30] sm:$0xff]
        %v1841 = vld [vmem:[%s610 + $0x38] sm:$0xf]
        %v1842 = vld [vmem:[%s610 + $0x3c] sm:$0xff]
        %v1843 = vld [vmem:[%s610 + $0x44] sm:$0xf]
        %v1844 = vld [vmem:[%s610 + $0x48] sm:$0xff]
        %v1845 = vld [vmem:[%s610 + $0x50] sm:$0xf]
        %v1846 = vld [vmem:[%s610 + $0x54] sm:$0xff]
        %v1847 = vld [vmem:[%s610 + $0x5c] sm:$0xf]
        %v1848 = vld [vmem:[%s610 + $0x60] sm:$0xff]
        %v1849 = vld [vmem:[%s610 + $0x68] sm:$0xf]
        %v1850 = vld [vmem:[%s610 + $0x6c] sm:$0xff]
        %v1851 = vld [vmem:[%s610 + $0x74] sm:$0xf]
        %v1852 = vld [vmem:[%s610 + $0x78] sm:$0xff]
        %v1853 = vld [vmem:[%s610 + $0x80] sm:$0xf]
        %v1854 = vld [vmem:[%s610 + $0x84] sm:$0xff]
        %v1855 = vld [vmem:[%s610 + $0x8c] sm:$0xf]
        %v1856 = vld [vmem:[%s610 + $0x90] sm:$0xff]
        %v1857 = vld [vmem:[%s610 + $0x98] sm:$0xf]
        %v1858 = vld [vmem:[%s610 + $0x9c] sm:$0xff]
        %v1859 = vld [vmem:[%s610 + $0xa4] sm:$0xf]
        %v1860 = vld [vmem:[%s610 + $0xa8] sm:$0xff]
        %v1861 = vld [vmem:[%s610 + $0xb0] sm:$0xf]
        %v1862 = vld [vmem:[%s610 + $0xb4] sm:$0xff]
        %v1863 = vld [vmem:[%s610 + $0xbc] sm:$0xf]
        %v1864 = vld [vmem:[%s610 + $0xc0] sm:$0xff]
        %v1865 = vld [vmem:[%s610 + $0xc8] sm:$0xf]
        %v1866 = vld [vmem:[%s610 + $0xcc] sm:$0xff]
        %v1867 = vld [vmem:[%s610 + $0xd4] sm:$0xf]
        %v1868 = vld [vmem:[%s610 + $0xd8] sm:$0xff]
        %v1869 = vld [vmem:[%s610 + $0xe0] sm:$0xf]
        %v1870 = vld [vmem:[%s610 + $0xe4] sm:$0xff]
        %v1871 = vld [vmem:[%s610 + $0xec] sm:$0xf]
        %v1872 = vld [vmem:[%s610 + $0xf0] sm:$0xff]
        %v1873 = vld [vmem:[%s610 + $0xf8] sm:$0xf]
        %v1874 = vld [vmem:[%s610 + $0xfc] sm:$0xff]
        %v1875 = vld [vmem:[%s610 + $0x104] sm:$0xf]
        %v1876 = vld [vmem:[%s610 + $0x108] sm:$0xff]
        %v1877 = vld [vmem:[%s610 + $0x110] sm:$0xf]
        %v1878 = vld [vmem:[%s610 + $0x114] sm:$0xff]
        %v1879 = vld [vmem:[%s610 + $0x11c] sm:$0xf]
        %v1880 = vld [vmem:[%s610 + $0x120] sm:$0xff]
        %v1881 = vld [vmem:[%s610 + $0x128] sm:$0xf]
        %v1882 = vld [vmem:[%s610 + $0x12c] sm:$0xff]
        %v1883 = vld [vmem:[%s610 + $0x134] sm:$0xf]
        %v1884 = vld [vmem:[%s610 + $0x138] sm:$0xff]
        %v1885 = vld [vmem:[%s610 + $0x140] sm:$0xf]
        %v1886 = vld [vmem:[%s610 + $0x144] sm:$0xff]
        %v1887 = vld [vmem:[%s610 + $0x14c] sm:$0xf]
        %v1888 = vld [vmem:[%s610 + $0x150] sm:$0xff]
        %v1889 = vld [vmem:[%s610 + $0x158] sm:$0xf]
        %v1890 = vld [vmem:[%s610 + $0x15c] sm:$0xff]
        %v1891 = vld [vmem:[%s610 + $0x164] sm:$0xf]
        %v1892 = vld [vmem:[%s610 + $0x168] sm:$0xff]
        %v1893 = vld [vmem:[%s610 + $0x170] sm:$0xf]
        %v1894 = vld [vmem:[%s610 + $0x174] sm:$0xff]
        %v1895 = vld [vmem:[%s610 + $0x17c] sm:$0xf]
        %v1960 = vunpack.c.l.b16 %v1832
        %v1961 = vunpack.c.h.b16 %v1832
        %v1962 = vunpack.c.l.b16 %v1833
        %v1963 = vunpack.c.l.b16 %v1834
        %v1964 = vunpack.c.h.b16 %v1834
        %v1965 = vunpack.c.l.b16 %v1835
        %v1966 = vunpack.c.l.b16 %v1836
        %v1967 = vunpack.c.h.b16 %v1836
        %v1968 = vunpack.c.l.b16 %v1837
        %v1969 = vunpack.c.l.b16 %v1838
        %v1970 = vunpack.c.h.b16 %v1838
        %v1971 = vunpack.c.l.b16 %v1839
        %v1972 = vunpack.c.l.b16 %v1840
        %v1973 = vunpack.c.h.b16 %v1840
        %v1974 = vunpack.c.l.b16 %v1841
        %v1975 = vunpack.c.l.b16 %v1842
        %v1976 = vunpack.c.h.b16 %v1842
        %v1977 = vunpack.c.l.b16 %v1843
        %v1978 = vunpack.c.l.b16 %v1844
        %v1979 = vunpack.c.h.b16 %v1844
        %v1980 = vunpack.c.l.b16 %v1845
        %v1981 = vunpack.c.l.b16 %v1846
        %v1982 = vunpack.c.h.b16 %v1846
        %v1983 = vunpack.c.l.b16 %v1847
        %v1984 = vunpack.c.l.b16 %v1848
        %v1985 = vunpack.c.h.b16 %v1848
        %v1986 = vunpack.c.l.b16 %v1849
        %v1987 = vunpack.c.l.b16 %v1850
        %v1988 = vunpack.c.h.b16 %v1850
        %v1989 = vunpack.c.l.b16 %v1851
        %v1990 = vunpack.c.l.b16 %v1852
        %v1991 = vunpack.c.h.b16 %v1852
        %v1992 = vunpack.c.l.b16 %v1853
        %v1993 = vunpack.c.l.b16 %v1854
        %v1994 = vunpack.c.h.b16 %v1854
        %v1995 = vunpack.c.l.b16 %v1855
        %v1996 = vunpack.c.l.b16 %v1856
        %v1997 = vunpack.c.h.b16 %v1856
        %v1998 = vunpack.c.l.b16 %v1857
        %v1999 = vunpack.c.l.b16 %v1858
        %v2000 = vunpack.c.h.b16 %v1858
        %v2001 = vunpack.c.l.b16 %v1859
        %v2002 = vunpack.c.l.b16 %v1860
        %v2003 = vunpack.c.h.b16 %v1860
        %v2004 = vunpack.c.l.b16 %v1861
        %v2005 = vunpack.c.l.b16 %v1862
        %v2006 = vunpack.c.h.b16 %v1862
        %v2007 = vunpack.c.l.b16 %v1863
        %v2008 = vunpack.c.l.b16 %v1864
        %v2009 = vunpack.c.h.b16 %v1864
        %v2010 = vunpack.c.l.b16 %v1865
        %v2011 = vunpack.c.l.b16 %v1866
        %v2012 = vunpack.c.h.b16 %v1866
        %v2013 = vunpack.c.l.b16 %v1867
        %v2014 = vunpack.c.l.b16 %v1868
        %v2015 = vunpack.c.h.b16 %v1868
        %v2016 = vunpack.c.l.b16 %v1869
        %v2017 = vunpack.c.l.b16 %v1870
        %v2018 = vunpack.c.h.b16 %v1870
        %v2019 = vunpack.c.l.b16 %v1871
        %v2020 = vunpack.c.l.b16 %v1872
        %v2021 = vunpack.c.h.b16 %v1872
        %v2022 = vunpack.c.l.b16 %v1873
        %v2023 = vunpack.c.l.b16 %v1874
        %v2024 = vunpack.c.h.b16 %v1874
        %v2025 = vunpack.c.l.b16 %v1875
        %v2026 = vunpack.c.l.b16 %v1876
        %v2027 = vunpack.c.h.b16 %v1876
        %v2028 = vunpack.c.l.b16 %v1877
        %v2029 = vunpack.c.l.b16 %v1878
        %v2030 = vunpack.c.h.b16 %v1878
        %v2031 = vunpack.c.l.b16 %v1879
        %v2032 = vunpack.c.l.b16 %v1880
        %v2033 = vunpack.c.h.b16 %v1880
        %v2034 = vunpack.c.l.b16 %v1881
        %v2035 = vunpack.c.l.b16 %v1882
        %v2036 = vunpack.c.h.b16 %v1882
        %v2037 = vunpack.c.l.b16 %v1883
        %v2038 = vunpack.c.l.b16 %v1884
        %v2039 = vunpack.c.h.b16 %v1884
        %v2040 = vunpack.c.l.b16 %v1885
        %v2041 = vunpack.c.l.b16 %v1886
        %v2042 = vunpack.c.h.b16 %v1886
        %v2043 = vunpack.c.l.b16 %v1887
        %v2044 = vunpack.c.l.b16 %v1888
        %v2045 = vunpack.c.h.b16 %v1888
        %v2046 = vunpack.c.l.b16 %v1889
        %v2047 = vunpack.c.l.b16 %v1890
        %v2048 = vunpack.c.h.b16 %v1890
        %v2049 = vunpack.c.l.b16 %v1891
        %v2050 = vunpack.c.l.b16 %v1892
        %v2051 = vunpack.c.h.b16 %v1892
        %v2052 = vunpack.c.l.b16 %v1893
        %v2053 = vunpack.c.l.b16 %v1894
        %v2054 = vunpack.c.h.b16 %v1894
        %v2055 = vunpack.c.l.b16 %v1895
        %v2056 = vpack.c.b16 %v1963, %v1960
        %v2057 = vpack.c.b16 %v1964, %v1961
        %v2058 = vpack.c.b16 %v1965, %v1962
        %v2059 = vpack.c.b16 %v1969, %v1966
        %v2060 = vpack.c.b16 %v1970, %v1967
        %v2061 = vpack.c.b16 %v1971, %v1968
        %v2062 = vpack.c.b16 %v1975, %v1972
        %v2063 = vpack.c.b16 %v1976, %v1973
        %v2064 = vpack.c.b16 %v1977, %v1974
        %v2065 = vpack.c.b16 %v1981, %v1978
        %v2066 = vpack.c.b16 %v1982, %v1979
        %v2067 = vpack.c.b16 %v1983, %v1980
        %v2068 = vpack.c.b16 %v1987, %v1984
        %v2069 = vpack.c.b16 %v1988, %v1985
        %v2070 = vpack.c.b16 %v1989, %v1986
        %v2071 = vpack.c.b16 %v1993, %v1990
        %v2072 = vpack.c.b16 %v1994, %v1991
        %v2073 = vpack.c.b16 %v1995, %v1992
        %v2074 = vpack.c.b16 %v1999, %v1996
        %v2075 = vpack.c.b16 %v2000, %v1997
        %v2076 = vpack.c.b16 %v2001, %v1998
        %v2077 = vpack.c.b16 %v2005, %v2002
        %v2078 = vpack.c.b16 %v2006, %v2003
        %v2079 = vpack.c.b16 %v2007, %v2004
        %v2080 = vpack.c.b16 %v2011, %v2008
        %v2081 = vpack.c.b16 %v2012, %v2009
        %v2082 = vpack.c.b16 %v2013, %v2010
        %v2083 = vpack.c.b16 %v2017, %v2014
        %v2084 = vpack.c.b16 %v2018, %v2015
        %v2085 = vpack.c.b16 %v2019, %v2016
        %v2086 = vpack.c.b16 %v2023, %v2020
        %v2087 = vpack.c.b16 %v2024, %v2021
        %v2088 = vpack.c.b16 %v2025, %v2022
        %v2089 = vpack.c.b16 %v2029, %v2026
        %v2090 = vpack.c.b16 %v2030, %v2027
        %v2091 = vpack.c.b16 %v2031, %v2028
        %v2092 = vpack.c.b16 %v2035, %v2032
        %v2093 = vpack.c.b16 %v2036, %v2033
        %v2094 = vpack.c.b16 %v2037, %v2034
        %v2095 = vpack.c.b16 %v2041, %v2038
        %v2096 = vpack.c.b16 %v2042, %v2039
        %v2097 = vpack.c.b16 %v2043, %v2040
        %v2098 = vpack.c.b16 %v2047, %v2044
        %v2099 = vpack.c.b16 %v2048, %v2045
        %v2100 = vpack.c.b16 %v2049, %v2046
        %v2101 = vpack.c.b16 %v2053, %v2050
        %v2102 = vpack.c.b16 %v2054, %v2051
        %v2103 = vpack.c.b16 %v2055, %v2052
        %2152 = vmatprep.subr.bf16.mxu0 %v2078
        %2153 = vmatpush1.bf16.msra.mxu0 %v2077
        %2154 = vmatprep.subr.bf16.mxu0 %v2075
        %2155 = vmatpush1.bf16.msra.mxu0 %v2074
        %2156 = vmatprep.subr.bf16.mxu0 %v2072
        %2157 = vmatpush1.bf16.msra.mxu0 %v2071
        %2158 = vmatprep.subr.bf16.mxu0 %v2069
        %2159 = vmatpush1.bf16.msra.mxu0 %v2068
        %2160 = vmatprep.subr.bf16.mxu0 %v2066
        %2161 = vmatpush1.bf16.msra.mxu0 %v2065
        %2162 = vmatprep.subr.bf16.mxu0 %v2063
        %2163 = vmatpush1.bf16.msra.mxu0 %v2062
        %2164 = vmatprep.subr.bf16.mxu0 %v2060
        %2165 = vmatpush1.bf16.msra.mxu0 %v2059
        %2166 = vmatprep.subr.bf16.mxu0 %v2057
        %2167 = vmatpush1.bf16.msra.mxu0 %v2056
        %2168 = vmatprep.subr.bf16.mxu0 %v2102
        %2169 = vmatpush2.bf16.msra.mxu0 %v2101
        %2170 = vmatprep.subr.bf16.mxu0 %v2099
        %2171 = vmatpush2.bf16.msra.mxu0 %v2098
        %2172 = vmatprep.subr.bf16.mxu0 %v2096
        %2173 = vmatpush2.bf16.msra.mxu0 %v2095
        %2174 = vmatprep.subr.bf16.mxu0 %v2093
        %2175 = vmatpush2.bf16.msra.mxu0 %v2092
        %2176 = vmatprep.subr.bf16.mxu0 %v2090
        %2177 = vmatpush2.bf16.msra.mxu0 %v2089
        %2178 = vmatprep.subr.bf16.mxu0 %v2087
        %2179 = vmatpush2.bf16.msra.mxu0 %v2086
        %2180 = vmatprep.subr.bf16.mxu0 %v2084
        %2181 = vmatpush2.bf16.msra.mxu0 %v2083
        %2182 = vmatprep.subr.bf16.mxu0 %v2081
        %2183 = vmatpush2.bf16.msra.mxu0 %v2080
        %2184 = vmatprep.mubr.bf16.mxu0 %v1831
        %2185 = vmatmul.mubr.bf16.gmra.mxu0 %v1830
        %v2186 = vpop.f32.mrf.mxu0
        %v2187 = vadd.f32 0.0, %v2186
        %v2188 = vpop.f32.mrf.mxu0
        %v2189 = vadd.f32 0.0, %v2188
        %v2190 = vpop.f32.mrf.mxu0
        %v2191 = vadd.f32 0.0, %v2190
        %v2192 = vpop.f32.mrf.mxu0
        %v2193 = vadd.f32 0.0, %v2192
        %2194 = vdwg.mxu0
        %2195 = vmatprep.subr.bf16.mxu0 0
        %2196 = vmatpush1.bf16.msra.mxu0 %v2079
        %2197 = vmatprep.subr.bf16.mxu0 0
        %2198 = vmatpush1.bf16.msra.mxu0 %v2076
        %2199 = vmatprep.subr.bf16.mxu0 0
        %2200 = vmatpush1.bf16.msra.mxu0 %v2073
        %2201 = vmatprep.subr.bf16.mxu0 0
        %2202 = vmatpush1.bf16.msra.mxu0 %v2070
        %2203 = vmatprep.subr.bf16.mxu0 0
        %2204 = vmatpush1.bf16.msra.mxu0 %v2067
        %2205 = vmatprep.subr.bf16.mxu0 0
        %2206 = vmatpush1.bf16.msra.mxu0 %v2064
        %2207 = vmatprep.subr.bf16.mxu0 0
        %2208 = vmatpush1.bf16.msra.mxu0 %v2061
        %2209 = vmatprep.subr.bf16.mxu0 0
        %2210 = vmatpush1.bf16.msra.mxu0 %v2058
        %2211 = vmatprep.subr.bf16.mxu0 0
        %2212 = vmatpush2.bf16.msra.mxu0 %v2103
        %2213 = vmatprep.subr.bf16.mxu0 0
        %2214 = vmatpush2.bf16.msra.mxu0 %v2100
        %2215 = vmatprep.subr.bf16.mxu0 0
        %2216 = vmatpush2.bf16.msra.mxu0 %v2097
        %2217 = vmatprep.subr.bf16.mxu0 0
        %2218 = vmatpush2.bf16.msra.mxu0 %v2094
        %2219 = vmatprep.subr.bf16.mxu0 0
        %2220 = vmatpush2.bf16.msra.mxu0 %v2091
        %2221 = vmatprep.subr.bf16.mxu0 0
        %2222 = vmatpush2.bf16.msra.mxu0 %v2088
        %2223 = vmatprep.subr.bf16.mxu0 0
        %2224 = vmatpush2.bf16.msra.mxu0 %v2085
        %2225 = vmatprep.subr.bf16.mxu0 0
        %2226 = vmatpush2.bf16.msra.mxu0 %v2082
        %2227 = vmatprep.mubr.bf16.mxu0 %v1831
        %2228 = vmatmul.mubr.bf16.gmra.mxu0 %v1830
        %v2229 = vpop.f32.mrf.mxu0
        %v2230 = vadd.f32 0.0, %v2229
        %v2231 = vpop.f32.mrf.mxu0
        %v2232 = vpop.f32.mrf.mxu0
        %v2233 = vadd.f32 0.0, %v2232
        %v2234 = vpop.f32.mrf.mxu0
        %2235 = vdwg.mxu0
        %v2236 = vlaneseq
        %v2237 = vshrl.u32 %v2236, 7
        %v2238 = vadd.s32 %v2237, 8
        %vm2239 = vcmp.lt.s32.totalorder %v2237, 0
        %v2240 = vsub.s32 0, %v2237
        %v2241 = vsel %vm2239, %v2240, %v2237
        %v2242 = vshrl.u32 %v2241, 3
        %v2243 = vand.u32 %v2241, 7
        %v2244 = vsub.s32 0, %v2243
        %v2245 = vsel %vm2239, %v2244, %v2243
        %vm2246 = vcmp.lt.s32.totalorder %v2238, 0
        %v2247 = vsub.s32 0, %v2238
        %v2248 = vsel %vm2246, %v2247, %v2238
        %v2249 = vshrl.u32 %v2248, 3
        %v2250 = vand.u32 %v2248, 7
        %v2251 = vsub.s32 0, %v2250
        %v2252 = vsel %vm2246, %v2251, %v2250
        %vm2253 = vcmp.ne.s32.totalorder %v2245, 0
        %vm2254 = vcmp.ne.s32.totalorder %v2252, 0
        %vm2255 = vcmp.lt.s32.totalorder %v2245, 0
        %vm2256 = vcmp.lt.s32.totalorder %v2252, 0
        %vm2257 = vmand %vm2255, %vm2253
        %vm2258 = vmand %vm2256, %vm2254
        %v2259 = vadd.s32 %v2245, 8
        %v2260 = vadd.s32 %v2252, 8
        %v2261 = vsel %vm2257, %v2259, %v2245
        %v2262 = vsel %vm2258, %v2260, %v2252
        %vm2263 = vcmp.eq.s32.totalorder %v2261, 0
        %vm2264 = vcmp.eq.s32.totalorder %v2262, 0
        %v2265 = vrot.slane %v2187, 7
        %v2266 = vrot.slane %v2191, 7
        %vm2267 = vcmp.lt.s32.totalorder %v2237, 1
        %v2268 = vsel %vm2267, %v2265, %v2266
        %v2269 = vsel %vm2267, %v2266, %v2265
        %v2270 = vsel %vm2263, 1, 0
        %v2271 = vsel %vm2264, 1, 0
        %vm2272 = vcmp.eq.s32.totalorder %v2270, 1
        %vm2273 = vcmp.eq.s32.totalorder %v2271, 1
        %v2274 = vsel %vm2272, 0.0, %v2269
        %v2275 = vsel %vm2273, 0.0, %v2268
        %vm2276 = vcmp.eq.s32.totalorder %v2261, 7
        %vm2277 = vcmp.eq.s32.totalorder %v2262, 7
        %v2278 = vrot.slane %v2230, 1
        %v2279 = vrot.slane %v2233, 1
        %vm2280 = vcmp.lt.s32.totalorder %v2237, 7
        %v2281 = vsel %vm2280, %v2278, %v2279
        %v2282 = vsel %vm2280, %v2279, %v2278
        %v2283 = vsel %vm2276, 1, 0
        %v2284 = vsel %vm2277, 1, 0
        %vm2285 = vcmp.eq.s32.totalorder %v2283, 1
        %vm2286 = vcmp.eq.s32.totalorder %v2284, 1
        %v2287 = vsel %vm2285, 0.0, %v2281
        %v2288 = vsel %vm2286, 0.0, %v2282
        %v2289 = vadd.f32 %v2274, %v2189
        %v2290 = vadd.f32 %v2275, %v2193
        %v2291 = vadd.f32 %v2289, %v2287
        %v2292 = vadd.f32 %v2290, %v2288
        %v2293 = vld [vmem:[%s613] sm:$0x1]
        %v2295 = vlaneseq
        %v2296 = vshrl.u32 %v2295, 7
        %v2297 = vsub.s32 0, %v2296
        %v2298 = vrot.slane %v2293, %v2297
        %v2300 = vadd.f32 %v2291, %v2298
        %v2301 = vadd.f32 %v2292, %v2298
        %v2302 = vld [vmem:[%s616] sm:$0x1]
        %v2304 = vlaneseq
        %v2305 = vshrl.u32 %v2304, 7
        %v2306 = vsub.s32 0, %v2305
        %v2307 = vrot.slane %v2302, %v2306
        %v2309 = vmul.f32 %v2300, %v2307
        %v2310 = vmul.f32 %v2301, %v2307
        %v2311 = vld [vmem:[%s619] sm:$0x1]
        %v2313 = vlaneseq
        %v2314 = vshrl.u32 %v2313, 7
        %v2315 = vsub.s32 0, %v2314
        %v2316 = vrot.slane %v2311, %v2315
        %v2318 = vadd.f32 %v2309, %v2316
        %v2319 = vadd.f32 %v2310, %v2316
        %v2320 = vmul.f32 %v2318, 0.5
        %v2321 = vmul.f32 %v2319, 0.5
        %v2322 = vmul.f32 %v2318, 0.70710677
        %v2323 = vmul.f32 %v2319, 0.70710677
        %v2324 = vand.u32 2147483647, %v2322
        %v2325 = vand.u32 2147483647, %v2323
        %v2326 = vmul.f32 %v2324, 0.3275911
        %v2327 = vmul.f32 %v2325, 0.3275911
        %v2328 = vadd.f32 %v2326, 1.0
        %v2329 = vadd.f32 %v2327, 1.0
        %v2330 = vrcp.pop %v2328
        %v2331 = vrcp.pop %v2329
        %v2332 = vmul.f32 %v2330, 1.0614054
        %v2333 = vmul.f32 %v2331, 1.0614054
        %v2334 = vadd.f32 %v2332, -1.4531521
        %v2335 = vadd.f32 %v2333, -1.4531521
        %v2336 = vmul.f32 %v2334, %v2330
        %v2337 = vmul.f32 %v2335, %v2331
        %v2338 = vadd.f32 %v2336, 1.4214138
        %v2339 = vadd.f32 %v2337, 1.4214138
        %v2340 = vmul.f32 %v2338, %v2330
        %v2341 = vmul.f32 %v2339, %v2331
        %v2342 = vadd.f32 %v2340, -0.28449672
        %v2343 = vadd.f32 %v2341, -0.28449672
        %v2344 = vmul.f32 %v2342, %v2330
        %v2345 = vmul.f32 %v2343, %v2331
        %v2346 = vadd.f32 %v2344, 0.2548296
        %v2347 = vadd.f32 %v2345, 0.2548296
        %v2348 = vmul.f32 %v2346, %v2330
        %v2349 = vmul.f32 %v2347, %v2331
        %v2350 = vsub.f32 0.0, %v2324
        %v2351 = vsub.f32 0.0, %v2325
        %v2352 = vmul.f32 %v2350, %v2324
        %v2353 = vmul.f32 %v2351, %v2325
        %v2354 = vmul.f32 %v2352, 1.442695
        %v2355 = vpow.pop %v2354
        %v2356 = vmul.f32 %v2353, 1.442695
        %v2357 = vpow.pop %v2356
        %v2358 = vmul.f32 %v2348, %v2355
        %v2359 = vmul.f32 %v2349, %v2357
        %v2360 = vsub.f32 1.0, %v2358
        %v2361 = vsub.f32 1.0, %v2359
        %vm2362 = vcmp.ge.f32.partialorder %v2322, 0.0
        %vm2363 = vcmp.ge.f32.partialorder %v2323, 0.0
        %v2364 = vsub.f32 0.0, %v2360
        %v2365 = vsub.f32 0.0, %v2361
        %v2366 = vsel %vm2362, %v2360, %v2364
        %v2367 = vsel %vm2363, %v2361, %v2365
        %v2368 = vadd.f32 %v2366, 1.0
        %v2369 = vadd.f32 %v2367, 1.0
        %v2370 = vmul.f32 %v2320, %v2368
        %v2371 = vmul.f32 %v2321, %v2369
        %v2374 = vcombine.high %v2370, %v2370
        %v2375 = vcombine.high %v2371, %v2371
        %vm2378 = vcmask 1043456
        %v2379 = vsel %vm2378, %v2370, -inf
        %v2380 = vrot.slane %v2379, 4
        %v2381 = vmax.f32 %v2379, %v2380
        %v2382 = vrot.slane %v2381, 2
        %v2383 = vmax.f32 %v2381, %v2382
        %v2384 = vrot.slane %v2383, 1
        %v2385 = vmax.f32 %v2383, %v2384
        %v2386 = vsel %vm2378, %v2374, -inf
        %v2387 = vrot.slane %v2386, 4
        %v2388 = vmax.f32 %v2386, %v2387
        %v2389 = vrot.slane %v2388, 2
        %v2390 = vmax.f32 %v2388, %v2389
        %v2391 = vrot.slane %v2390, 1
        %v2392 = vmax.f32 %v2390, %v2391
        %v2393 = vsel %vm2378, %v2371, -inf
        %v2394 = vrot.slane %v2393, 4
        %v2395 = vmax.f32 %v2393, %v2394
        %v2396 = vrot.slane %v2395, 2
        %v2397 = vmax.f32 %v2395, %v2396
        %v2398 = vrot.slane %v2397, 1
        %v2399 = vmax.f32 %v2397, %v2398
        %v2400 = vsel %vm2378, %v2375, -inf
        %v2401 = vrot.slane %v2400, 4
        %v2402 = vmax.f32 %v2400, %v2401
        %v2403 = vrot.slane %v2402, 2
        %v2404 = vmax.f32 %v2402, %v2403
        %v2405 = vrot.slane %v2404, 1
        %v2406 = vmax.f32 %v2404, %v2405
        %v2407 = vpack.c.bf16 %v2385, %v2385
        %v2408 = vpack.c.bf16 %v2392, %v2392
        %v2409 = vpack.c.bf16 %v2399, %v2399
        %v2410 = vpack.c.bf16 %v2406, %v2406
        %v2411 = vld [vmem:[%s624] sm:$0xff]
        %v2412 = vld [vmem:[%s624 + $0x8] sm:$0xff]
        %v2413 = vld [vmem:[%s624 + $0x10] sm:$0xff]
        %v2414 = vld [vmem:[%s624 + $0x18] sm:$0xff]
        %v2415 = vld [vmem:[%s624 + $0x20] sm:$0xff]
        %v2416 = vld [vmem:[%s624 + $0x28] sm:$0xff]
        %v2417 = vld [vmem:[%s624 + $0x30] sm:$0xff]
        %v2418 = vld [vmem:[%s624 + $0x38] sm:$0xff]
        %v2419 = vld [vmem:[%s624 + $0x40] sm:$0xff]
        %v2420 = vld [vmem:[%s624 + $0x48] sm:$0xff]
        %v2421 = vld [vmem:[%s624 + $0x50] sm:$0xff]
        %v2422 = vld [vmem:[%s624 + $0x58] sm:$0xff]
        %v2423 = vld [vmem:[%s624 + $0x60] sm:$0xff]
        %v2424 = vld [vmem:[%s624 + $0x68] sm:$0xff]
        %v2425 = vld [vmem:[%s624 + $0x70] sm:$0xff]
        %v2426 = vld [vmem:[%s624 + $0x78] sm:$0xff]
        %v2427 = vld [vmem:[%s628] sm:$0x3]
        %v2429 = vlaneseq
        %v2430 = vshrl.u32 %v2429, 7
        %v2431 = vsub.s32 0, %v2430
        %v2432 = vrot.slane %v2427, %v2431
        %v2433 = vlaneseq
        %v2434 = vshrl.u32 %v2433, 7
        %v2435 = vsub.s32 1, %v2434
        %v2436 = vrot.slane %v2427, %v2435
        %v2443 = vunpack.c.l.b16 %v2407
        %v2444 = vunpack.c.l.b16 %v2408
        %v2445 = vunpack.c.l.b16 %v2409
        %v2446 = vunpack.c.l.b16 %v2410
        %vm2447 = vcmask 1041409
        %v2448 = vsel %vm2447, %v2444, %v2443
        %vm2449 = vcmask 1042434
        %v2450 = vsel %vm2449, %v2445, %v2448
        %vm2451 = vcmask 1043459
        %v2452 = vsel %vm2451, %v2446, %v2450
        %v2453 = vpack.c.b16 %v2452, %v2452
        %v2471 = vunpack.c.l.b16 %v2411
        %v2472 = vunpack.c.h.b16 %v2411
        %v2473 = vunpack.c.l.b16 %v2412
        %v2474 = vunpack.c.h.b16 %v2412
        %v2475 = vunpack.c.l.b16 %v2413
        %v2476 = vunpack.c.h.b16 %v2413
        %v2477 = vunpack.c.l.b16 %v2414
        %v2478 = vunpack.c.h.b16 %v2414
        %v2479 = vunpack.c.l.b16 %v2415
        %v2480 = vunpack.c.h.b16 %v2415
        %v2481 = vunpack.c.l.b16 %v2416
        %v2482 = vunpack.c.h.b16 %v2416
        %v2483 = vunpack.c.l.b16 %v2417
        %v2484 = vunpack.c.h.b16 %v2417
        %v2485 = vunpack.c.l.b16 %v2418
        %v2486 = vunpack.c.h.b16 %v2418
        %v2487 = vunpack.c.l.b16 %v2419
        %v2488 = vunpack.c.h.b16 %v2419
        %v2489 = vunpack.c.l.b16 %v2420
        %v2490 = vunpack.c.h.b16 %v2420
        %v2491 = vunpack.c.l.b16 %v2421
        %v2492 = vunpack.c.h.b16 %v2421
        %v2493 = vunpack.c.l.b16 %v2422
        %v2494 = vunpack.c.h.b16 %v2422
        %v2495 = vunpack.c.l.b16 %v2423
        %v2496 = vunpack.c.h.b16 %v2423
        %v2497 = vunpack.c.l.b16 %v2424
        %v2498 = vunpack.c.h.b16 %v2424
        %v2499 = vunpack.c.l.b16 %v2425
        %v2500 = vunpack.c.h.b16 %v2425
        %v2501 = vunpack.c.l.b16 %v2426
        %v2502 = vunpack.c.h.b16 %v2426
        %v2503 = vpack.c.b16 %v2473, %v2471
        %v2504 = vpack.c.b16 %v2474, %v2472
        %v2505 = vpack.c.b16 %v2477, %v2475
        %v2506 = vpack.c.b16 %v2478, %v2476
        %v2507 = vpack.c.b16 %v2481, %v2479
        %v2508 = vpack.c.b16 %v2482, %v2480
        %v2509 = vpack.c.b16 %v2485, %v2483
        %v2510 = vpack.c.b16 %v2486, %v2484
        %v2511 = vpack.c.b16 %v2489, %v2487
        %v2512 = vpack.c.b16 %v2490, %v2488
        %v2513 = vpack.c.b16 %v2493, %v2491
        %v2514 = vpack.c.b16 %v2494, %v2492
        %v2515 = vpack.c.b16 %v2497, %v2495
        %v2516 = vpack.c.b16 %v2498, %v2496
        %v2517 = vpack.c.b16 %v2501, %v2499
        %v2518 = vpack.c.b16 %v2502, %v2500
        %2535 = vmatprep.subr.bf16.mxu0 %v2518
        %2536 = vmatpush1.bf16.msra.mxu0 %v2517
        %2537 = vmatprep.subr.bf16.mxu0 %v2516
        %2538 = vmatpush1.bf16.msra.mxu0 %v2515
        %2539 = vmatprep.subr.bf16.mxu0 %v2514
        %2540 = vmatpush1.bf16.msra.mxu0 %v2513
        %2541 = vmatprep.subr.bf16.mxu0 %v2512
        %2542 = vmatpush1.bf16.msra.mxu0 %v2511
        %2543 = vmatprep.subr.bf16.mxu0 %v2510
        %2544 = vmatpush1.bf16.msra.mxu0 %v2509
        %2545 = vmatprep.subr.bf16.mxu0 %v2508
        %2546 = vmatpush1.bf16.msra.mxu0 %v2507
        %2547 = vmatprep.subr.bf16.mxu0 %v2506
        %2548 = vmatpush1.bf16.msra.mxu0 %v2505
        %2549 = vmatprep.subr.bf16.mxu0 %v2504
        %2550 = vmatpush1.bf16.msra.mxu0 %v2503
        %2551 = vmatprep.subr.bf16.mxu0 0
        %2552 = vmatpush2.bf16.msra.mxu0 0
        %2553 = vmatprep.subr.bf16.mxu0 0
        %2554 = vmatpush2.bf16.msra.mxu0 0
        %2555 = vmatprep.subr.bf16.mxu0 0
        %2556 = vmatpush2.bf16.msra.mxu0 0
        %2557 = vmatprep.subr.bf16.mxu0 0
        %2558 = vmatpush2.bf16.msra.mxu0 0
        %2559 = vmatprep.subr.bf16.mxu0 0
        %2560 = vmatpush2.bf16.msra.mxu0 0
        %2561 = vmatprep.subr.bf16.mxu0 0
        %2562 = vmatpush2.bf16.msra.mxu0 0
        %2563 = vmatprep.subr.bf16.mxu0 0
        %2564 = vmatpush2.bf16.msra.mxu0 0
        %2565 = vmatprep.subr.bf16.mxu0 0
        %2566 = vmatpush2.bf16.msra.mxu0 0
        %2567 = vmatprep.mubr.bf16.mxu0 0
        %2568 = vmatmul.mubr.bf16.gmra.mxu0 %v2453
        %v2569 = vpop.f32.mrf.mxu0
        %v2570 = vadd.f32 %v2432, %v2569
        %v2571 = vpop.f32.mrf.mxu0
        %v2572 = vadd.f32 %v2436, %v2571
        %v2573 = vpop.f32.mrf.mxu0
        %v2574 = vpop.f32.mrf.mxu0
        %2575 = vdwg.mxu0
        %v2576 = vmul.f32 %v2570, 0.5
        %v2577 = vmul.f32 %v2572, 0.5
        %v2578 = vmul.f32 %v2570, 0.70710677
        %v2579 = vmul.f32 %v2572, 0.70710677
        %v2580 = vand.u32 2147483647, %v2578
        %v2581 = vand.u32 2147483647, %v2579
        %v2582 = vmul.f32 %v2580, 0.3275911
        %v2583 = vmul.f32 %v2581, 0.3275911
        %v2584 = vadd.f32 %v2582, 1.0
        %v2585 = vadd.f32 %v2583, 1.0
        %v2586 = vrcp.pop %v2584
        %v2587 = vrcp.pop %v2585
        %v2588 = vmul.f32 %v2586, 1.0614054
        %v2589 = vmul.f32 %v2587, 1.0614054
        %v2590 = vadd.f32 %v2588, -1.4531521
        %v2591 = vadd.f32 %v2589, -1.4531521
        %v2592 = vmul.f32 %v2590, %v2586
        %v2593 = vmul.f32 %v2591, %v2587
        %v2594 = vadd.f32 %v2592, 1.4214138
        %v2595 = vadd.f32 %v2593, 1.4214138
        %v2596 = vmul.f32 %v2594, %v2586
        %v2597 = vmul.f32 %v2595, %v2587
        %v2598 = vadd.f32 %v2596, -0.28449672
        %v2599 = vadd.f32 %v2597, -0.28449672
        %v2600 = vmul.f32 %v2598, %v2586
        %v2601 = vmul.f32 %v2599, %v2587
        %v2602 = vadd.f32 %v2600, 0.2548296
        %v2603 = vadd.f32 %v2601, 0.2548296
        %v2604 = vmul.f32 %v2602, %v2586
        %v2605 = vmul.f32 %v2603, %v2587
        %v2606 = vsub.f32 0.0, %v2580
        %v2607 = vsub.f32 0.0, %v2581
        %v2608 = vmul.f32 %v2606, %v2580
        %v2609 = vmul.f32 %v2607, %v2581
        %v2610 = vmul.f32 %v2608, 1.442695
        %v2611 = vpow.pop %v2610
        %v2612 = vmul.f32 %v2609, 1.442695
        %v2613 = vpow.pop %v2612
        %v2614 = vmul.f32 %v2604, %v2611
        %v2615 = vmul.f32 %v2605, %v2613
        %v2616 = vsub.f32 1.0, %v2614
        %v2617 = vsub.f32 1.0, %v2615
        %vm2618 = vcmp.ge.f32.partialorder %v2578, 0.0
        %vm2619 = vcmp.ge.f32.partialorder %v2579, 0.0
        %v2620 = vsub.f32 0.0, %v2616
        %v2621 = vsub.f32 0.0, %v2617
        %v2622 = vsel %vm2618, %v2616, %v2620
        %v2623 = vsel %vm2619, %v2617, %v2621
        %v2624 = vadd.f32 %v2622, 1.0
        %v2625 = vadd.f32 %v2623, 1.0
        %v2626 = vmul.f32 %v2576, %v2624
        %v2627 = vmul.f32 %v2577, %v2625
        %v2630 = vcombine.low %v2626, %v2627
        %v2632 = vunpack.c.l.s4 1983009808
        %v2633 = vunpack.c.0.s8 %v2632
        %v2634 = vlaneseq
        %v2635 = vshrl.u32 %v2634, 7
        %v2636 = vsub.s32 %v2633, %v2635
        %v2637 = vrot.slane %v2630, %v2636
        %v2638 = vcombine.high %v2637, %v2637
        %v2640 = vunpack.c.l.s4 1983009808
        %v2641 = vunpack.c.0.s8 %v2640
        %v2642 = vlaneseq
        %v2643 = vshrl.u32 %v2642, 7
        %v2644 = vsub.s32 %v2641, %v2643
        %v2645 = vrot.slane %v2637, %v2644
        %v2646 = vcombine.high %v2645, %v2645
        %v2648 = vunpack.c.l.s4 1983009808
        %v2649 = vunpack.c.0.s8 %v2648
        %v2650 = vlaneseq
        %v2651 = vshrl.u32 %v2650, 7
        %v2652 = vsub.s32 %v2649, %v2651
        %v2653 = vrot.slane %v2638, %v2652
        %v2654 = vcombine.high %v2653, %v2653
        %vm2659 = vcmask 1041408
        %v2660 = vsel %vm2659, %v2645, 0.0
        %v2661 = vrot.slane %v2660, 4
        %v2662 = vadd.f32 %v2660, %v2661
        %v2663 = vrot.slane %v2662, 2
        %v2664 = vadd.f32 %v2662, %v2663
        %v2665 = vrot.slane %v2664, 1
        %v2666 = vadd.f32 %v2664, %v2665
        %v2667 = vsel %vm2659, %v2646, 0.0
        %v2668 = vrot.slane %v2667, 4
        %v2669 = vadd.f32 %v2667, %v2668
        %v2670 = vrot.slane %v2669, 2
        %v2671 = vadd.f32 %v2669, %v2670
        %v2672 = vrot.slane %v2671, 1
        %v2673 = vadd.f32 %v2671, %v2672
        %v2674 = vsel %vm2659, %v2653, 0.0
        %v2675 = vrot.slane %v2674, 4
        %v2676 = vadd.f32 %v2674, %v2675
        %v2677 = vrot.slane %v2676, 2
        %v2678 = vadd.f32 %v2676, %v2677
        %v2679 = vrot.slane %v2678, 1
        %v2680 = vadd.f32 %v2678, %v2679
        %v2681 = vsel %vm2659, %v2654, 0.0
        %v2682 = vrot.slane %v2681, 4
        %v2683 = vadd.f32 %v2681, %v2682
        %v2684 = vrot.slane %v2683, 2
        %v2685 = vadd.f32 %v2683, %v2684
        %v2686 = vrot.slane %v2685, 1
        %v2687 = vadd.f32 %v2685, %v2686
        %v2688 = vmul.f32 %v2666, 0.5
        %v2689 = vmul.f32 %v2673, 0.5
        %v2690 = vmul.f32 %v2680, 0.5
        %v2691 = vmul.f32 %v2687, 0.5
        %v2692 = vpack.c.bf16 %v2688, %v2688
        %v2693 = vpack.c.bf16 %v2689, %v2689
        %v2694 = vpack.c.bf16 %v2690, %v2690
        %v2695 = vpack.c.bf16 %v2691, %v2691
        %v2700 = vcombine.low %v2692, %v2693
        %v2702 = vunpack.c.l.s4 1966171168
        %v2703 = vunpack.c.0.s8 %v2702
        %v2704 = vlaneseq
        %v2705 = vshrl.u32 %v2704, 7
        %v2706 = vsub.s32 %v2703, %v2705
        %v2707 = vrot.slane %v2700, %v2706
        %v2709 = vunpack.c.l.s4 1966171168
        %v2710 = vunpack.c.0.s8 %v2709
        %v2711 = vlaneseq
        %v2712 = vshrl.u32 %v2711, 7
        %v2713 = vsub.s32 %v2710, %v2712
        %v2714 = vrot.slane %v2707, %v2713
        %v2715 = vcombine.low %v2694, %v2695
        %v2717 = vunpack.c.l.s4 1966171168
        %v2718 = vunpack.c.0.s8 %v2717
        %v2719 = vlaneseq
        %v2720 = vshrl.u32 %v2719, 7
        %v2721 = vsub.s32 %v2718, %v2720
        %v2722 = vrot.slane %v2715, %v2721
        %v2724 = vunpack.c.l.s4 1966171168
        %v2725 = vunpack.c.0.s8 %v2724
        %v2726 = vlaneseq
        %v2727 = vshrl.u32 %v2726, 7
        %v2728 = vsub.s32 %v2725, %v2727
        %v2729 = vrot.slane %v2722, %v2728
        %v2731 = vunpack.c.l.s4 1935823168
        %v2732 = vunpack.c.0.s8 %v2731
        %v2733 = vlaneseq
        %v2734 = vshrl.u32 %v2733, 7
        %v2735 = vsub.s32 %v2732, %v2734
        %v2736 = vrot.slane %v2714, %v2735
        %v2738 = vunpack.c.l.s4 1935823168
        %v2739 = vunpack.c.0.s8 %v2738
        %v2740 = vlaneseq
        %v2741 = vshrl.u32 %v2740, 7
        %v2742 = vsub.s32 %v2739, %v2741
        %v2743 = vrot.slane %v2736, %v2742
        %v2745 = vunpack.c.l.s4 1935823168
        %v2746 = vunpack.c.0.s8 %v2745
        %v2747 = vlaneseq
        %v2748 = vshrl.u32 %v2747, 7
        %v2749 = vsub.s32 %v2746, %v2748
        %v2750 = vrot.slane %v2729, %v2749
        %v2752 = vunpack.c.l.s4 1935823168
        %v2753 = vunpack.c.0.s8 %v2752
        %v2754 = vlaneseq
        %v2755 = vshrl.u32 %v2754, 7
        %v2756 = vsub.s32 %v2753, %v2755
        %v2757 = vrot.slane %v2750, %v2756
        %v2758 = vunpack.c.l.b16 %v2743
        %v2759 = vunpack.c.h.b16 %v2743
        %v2760 = vunpack.c.l.b16 %v2757
        %v2761 = vunpack.c.h.b16 %v2757
        %v2762 = vrot.slane %v2760, 7
        %v2763 = vsel %vm2447, %v2762, %v2758
        %v2764 = vrot.slane %v2761, 7
        %v2765 = vsel %vm2447, %v2764, %v2759
        %v2766 = vpack.c.b16 %v2765, %v2763
        %v2768 = vunpack.c.l.s4 1966171168
        %v2769 = vunpack.c.0.s8 %v2768
        %v2770 = vlaneseq
        %v2771 = vshrl.u32 %v2770, 7
        %v2772 = vsub.s32 %v2769, %v2771
        %v2773 = vrot.slane %v2766, %v2772
        %v2775 = vunpack.c.l.s4 1966171168
        %v2776 = vunpack.c.0.s8 %v2775
        %v2777 = vlaneseq
        %v2778 = vshrl.u32 %v2777, 7
        %v2779 = vsub.s32 %v2776, %v2778
        %v2780 = vrot.slane %v2773, %v2779
        %2782 = vst [vmem:[%s636] sm:$0x3] %v2780
        %p2783 = scmp.lt.s32.totalorder %s26, 3
        %s2784 = scalar_select %p2783, %s26, 3
        %p2785 = scmp.lt.s32.totalorder %s27, 0
        %s2786 = scalar_select %p2785, %s27, 0
        %s2787 = smul.addr %s2786, 2
        %s2788 = smul.addr %s2784, 2
        %s2789 = sadd.s32 %s2787, %s2788
        %s2790 = scalar_lea.vmem %s11, %s2789
        // Predicated region
        $region88: #{forward.2} parent=82 // pred_check
          %p2791 = pneg %p342
        $region89: #{forward.2} parent=82 // pred_check_branch
          %2793 = sbr.rel (%p2791) target = $region91
        $region90: #{forward.2} parent=82 // pred_region
          _
        $region91: #{forward.2} parent=82 // pred_fallthru
          _
      $region83: #{forward.2} parent=5 // pred_fallthru
        _
      %p2794 = scmp.le.s32.totalorder 2, %s17
      // Predicated region
      $region92: #{forward.2} parent=5 // pred_check
        %p2795 = pneg %p2794
      $region93: #{forward.2} parent=5 // pred_check_branch
        %2797 = sbr.rel (%p2795) target = $region95
      $region94: #{forward.2} parent=5 // pred_region
        %s2798 = ssub.s32 %s17, 2
        // Predicated region
        $region96: #{forward.2} parent=94 // pred_check
          %p2799 = pneg %p348
        $region97: #{forward.2} parent=94 // pred_check_branch
          %2801 = sbr.rel (%p2799) target = $region99
        $region98: #{forward.2} parent=94 // pred_region
          %p2802 = scmp.lt.s32.totalorder %s28, 3
          %s2803 = scalar_select %p2802, %s28, 3
          %p2804 = scmp.lt.s32.totalorder %s29, 0
          %s2805 = scalar_select %p2804, %s29, 0
          %s2806 = smul.addr %s2805, 2
          %s2807 = smul.addr %s2803, 2
          %s2808 = sadd.s32 %s2806, %s2807
          %s2809 = scalar_lea.vmem %s11, %s2808
        $region99: #{forward.2} parent=94 // pred_fallthru
          _
      $region95: #{forward.2} parent=5 // pred_fallthru
        _
    $region6: #{forward.2} parent=1 // loop_footer
      %s21 = sadd.s32 1, %s17
    $region7: #{forward.2} parent=1 // loop_footer_branch
      %16 = sbr.rel target = $region3
    $region8: #{forward.2} parent=1 // loop_exit
      _

// kernel: forward.3
$region0: #{forward.3}
  #allocation0 [shape = 'u32[]', space=smem, size = 0x4, offset = 0x4, fixed_abs, tag = 'smem constant byte address 0x4 - core index']
  #allocation1 [shape = 'u32[144,128]{1,0:T(1,128)}', space=vmem, size = 0x12000, scoped, tag = 'internal scratch']
  %s0 = inlined_call_operand.vmem [shape: bf16[4,2,256], index: 0, kind: input, shape index: {}]
  %s1 = inlined_call_operand.vmem [shape: bf16[256,768], index: 1, kind: input, shape index: {}]
  %s2 = inlined_call_operand.vmem [shape: f32[1,768], index: 2, kind: input, shape index: {}]
  %s3 = inlined_call_operand.vmem [shape: bf16[256,256], index: 3, kind: input, shape index: {}]
  %s4 = inlined_call_operand.vmem [shape: f32[1,256], index: 4, kind: input, shape index: {}]
  %s5 = inlined_call_operand.vmem [shape: f32[1,256], index: 5, kind: input, shape index: {}]
  %s6 = inlined_call_operand.vmem [shape: f32[1,256], index: 6, kind: input, shape index: {}]
  %s7 = inlined_call_operand.vmem [shape: bf16[256,256], index: 7, kind: input, shape index: {}]
  %s8 = inlined_call_operand.vmem [shape: f32[1,256], index: 8, kind: input, shape index: {}]
  %s9 = inlined_call_operand.vmem [shape: bf16[4,256,128], index: 9, kind: input, shape index: {}]
  %s10 = inlined_call_operand.vmem [shape: f32[4,2,128], index: 10, kind: output, shape index: {}]
  %s11 = sld [smem:[#allocation0]]
  $region73: #{forward.3} parent=0
    _
  %s13 = ssub.s32 1, %s11
  %s14 = scalar_select 0, %s13, %s11
  loop: start=0, step=1, limit=6
  $region2: #{forward.3} parent=0 // loop_pre_header
    _
  $region3: #{forward.3} parent=0 // loop_header
    %s16 = sphi 0, %s20
    %p17 = scmp.ge.s32.totalorder %s16, 6
    %s26 = sphi 0, %s28
    %s29 = sphi 0, %s26
    %s30 = sphi 0, %s29
    %s46 = sphi 0, %s30
    %s50 = sphi 0, %s50
    %s52 = sphi 0, %s50
    %s53 = sphi 0, %s52
    %s67 = sphi 0, %s53
    %s71 = sphi 0, %s71
    %s73 = sphi 0, %s71
    %s74 = sphi 0, %s73
    %s88 = sphi 0, %s74
    %s92 = sphi 0, %s92
    %s94 = sphi 0, %s92
    %s95 = sphi 0, %s94
    %s109 = sphi 0, %s95
    %s113 = sphi 0, %s113
    %s115 = sphi 0, %s113
    %s116 = sphi 0, %s115
    %s130 = sphi 0, %s116
    %s134 = sphi 0, %s134
    %s136 = sphi 0, %s134
    %s137 = sphi 0, %s136
    %s151 = sphi 0, %s137
    %s155 = sphi 0, %s155
    %s157 = sphi 0, %s155
    %s158 = sphi 0, %s157
    %s172 = sphi 0, %s158
    %s176 = sphi 0, %s176
    %s178 = sphi 0, %s176
    %s179 = sphi 0, %s178
    %s193 = sphi 0, %s179
    %s197 = sphi 0, %s197
    %s199 = sphi 0, %s197
    %s200 = sphi 0, %s199
    %s214 = sphi 0, %s200
    %s220 = sphi 0, %s222
    %s223 = sphi 0, %s220
    %s224 = sphi 0, %s223
    %s240 = sphi 0, %s224
    %s246 = sphi 0, %s248
    %s249 = sphi 0, %s246
    %s250 = sphi 0, %s249
    %s266 = sphi 0, %s250
  $region4: #{forward.3} parent=0 // loop_header_branch
    %19 = sbr.rel (%p17) target = $region8
  $region5: #{forward.3} parent=0 // loop_body
    %s21 = ssub.s32 %s16, 1
    %s22 = ssub.s32 %s16, 2
    %s23 = sadd.s32 %s16, 1
    %s24 = ssub.s32 %s16, %s23
    %p25 = scmp.eq.s32.totalorder %s24, 0
    %s27 = sadd.s32 %s26, 1
    %s28 = scalar_select %p25, %s26, %s27
    %p31 = pneg %p25
    %p32 = scmp.eq.s32.totalorder %s16, 3
    %p33 = por %p31, %p32
    %p34 = scmp.ne.s32.totalorder %s26, %s29
    %p35 = scmp.eq.s32.totalorder %s16, 0
    %p36 = por %p34, %p35
    %p37 = scmp.ne.s32.totalorder %s26, %s29
    %p38 = scmp.eq.s32.totalorder %s21, 3
    %p39 = por %p37, %p38
    %p40 = scmp.ne.s32.totalorder %s29, %s30
    %p41 = scmp.eq.s32.totalorder %s21, 0
    %p42 = por %p40, %p41
    %p43 = scmp.ne.s32.totalorder %s29, %s30
    %p44 = scmp.eq.s32.totalorder %s22, 3
    %p45 = por %p43, %p44
    %p47 = scmp.ne.s32.totalorder %s30, %s46
    %p48 = scmp.eq.s32.totalorder %s22, 0
    %p49 = por %p47, %p48
    %s51 = sadd.s32 %s50, 1
    %p54 = scmp.eq.s32.totalorder %s16, 3
    %p55 = scmp.ne.s32.totalorder %s50, %s52
    %p56 = scmp.eq.s32.totalorder %s16, 0
    %p57 = por %p55, %p56
    %p58 = scmp.ne.s32.totalorder %s50, %s52
    %p59 = scmp.eq.s32.totalorder %s21, 3
    %p60 = por %p58, %p59
    %p61 = scmp.ne.s32.totalorder %s52, %s53
    %p62 = scmp.eq.s32.totalorder %s21, 0
    %p63 = por %p61, %p62
    %p64 = scmp.ne.s32.totalorder %s52, %s53
    %p65 = scmp.eq.s32.totalorder %s22, 3
    %p66 = por %p64, %p65
    %p68 = scmp.ne.s32.totalorder %s53, %s67
    %p69 = scmp.eq.s32.totalorder %s22, 0
    %p70 = por %p68, %p69
    %s72 = sadd.s32 %s71, 1
    %p75 = scmp.eq.s32.totalorder %s16, 3
    %p76 = scmp.ne.s32.totalorder %s71, %s73
    %p77 = scmp.eq.s32.totalorder %s16, 0
    %p78 = por %p76, %p77
    %p79 = scmp.ne.s32.totalorder %s71, %s73
    %p80 = scmp.eq.s32.totalorder %s21, 3
    %p81 = por %p79, %p80
    %p82 = scmp.ne.s32.totalorder %s73, %s74
    %p83 = scmp.eq.s32.totalorder %s21, 0
    %p84 = por %p82, %p83
    %p85 = scmp.ne.s32.totalorder %s73, %s74
    %p86 = scmp.eq.s32.totalorder %s22, 3
    %p87 = por %p85, %p86
    %p89 = scmp.ne.s32.totalorder %s74, %s88
    %p90 = scmp.eq.s32.totalorder %s22, 0
    %p91 = por %p89, %p90
    %s93 = sadd.s32 %s92, 1
    %p96 = scmp.eq.s32.totalorder %s16, 3
    %p97 = scmp.ne.s32.totalorder %s92, %s94
    %p98 = scmp.eq.s32.totalorder %s16, 0
    %p99 = por %p97, %p98
    %p100 = scmp.ne.s32.totalorder %s92, %s94
    %p101 = scmp.eq.s32.totalorder %s21, 3
    %p102 = por %p100, %p101
    %p103 = scmp.ne.s32.totalorder %s94, %s95
    %p104 = scmp.eq.s32.totalorder %s21, 0
    %p105 = por %p103, %p104
    %p106 = scmp.ne.s32.totalorder %s94, %s95
    %p107 = scmp.eq.s32.totalorder %s22, 3
    %p108 = por %p106, %p107
    %p110 = scmp.ne.s32.totalorder %s95, %s109
    %p111 = scmp.eq.s32.totalorder %s22, 0
    %p112 = por %p110, %p111
    %s114 = sadd.s32 %s113, 1
    %p117 = scmp.eq.s32.totalorder %s16, 3
    %p118 = scmp.ne.s32.totalorder %s113, %s115
    %p119 = scmp.eq.s32.totalorder %s16, 0
    %p120 = por %p118, %p119
    %p121 = scmp.ne.s32.totalorder %s113, %s115
    %p122 = scmp.eq.s32.totalorder %s21, 3
    %p123 = por %p121, %p122
    %p124 = scmp.ne.s32.totalorder %s115, %s116
    %p125 = scmp.eq.s32.totalorder %s21, 0
    %p126 = por %p124, %p125
    %p127 = scmp.ne.s32.totalorder %s115, %s116
    %p128 = scmp.eq.s32.totalorder %s22, 3
    %p129 = por %p127, %p128
    %p131 = scmp.ne.s32.totalorder %s116, %s130
    %p132 = scmp.eq.s32.totalorder %s22, 0
    %p133 = por %p131, %p132
    %s135 = sadd.s32 %s134, 1
    %p138 = scmp.eq.s32.totalorder %s16, 3
    %p139 = scmp.ne.s32.totalorder %s134, %s136
    %p140 = scmp.eq.s32.totalorder %s16, 0
    %p141 = por %p139, %p140
    %p142 = scmp.ne.s32.totalorder %s134, %s136
    %p143 = scmp.eq.s32.totalorder %s21, 3
    %p144 = por %p142, %p143
    %p145 = scmp.ne.s32.totalorder %s136, %s137
    %p146 = scmp.eq.s32.totalorder %s21, 0
    %p147 = por %p145, %p146
    %p148 = scmp.ne.s32.totalorder %s136, %s137
    %p149 = scmp.eq.s32.totalorder %s22, 3
    %p150 = por %p148, %p149
    %p152 = scmp.ne.s32.totalorder %s137, %s151
    %p153 = scmp.eq.s32.totalorder %s22, 0
    %p154 = por %p152, %p153
    %s156 = sadd.s32 %s155, 1
    %p159 = scmp.eq.s32.totalorder %s16, 3
    %p160 = scmp.ne.s32.totalorder %s155, %s157
    %p161 = scmp.eq.s32.totalorder %s16, 0
    %p162 = por %p160, %p161
    %p163 = scmp.ne.s32.totalorder %s155, %s157
    %p164 = scmp.eq.s32.totalorder %s21, 3
    %p165 = por %p163, %p164
    %p166 = scmp.ne.s32.totalorder %s157, %s158
    %p167 = scmp.eq.s32.totalorder %s21, 0
    %p168 = por %p166, %p167
    %p169 = scmp.ne.s32.totalorder %s157, %s158
    %p170 = scmp.eq.s32.totalorder %s22, 3
    %p171 = por %p169, %p170
    %p173 = scmp.ne.s32.totalorder %s158, %s172
    %p174 = scmp.eq.s32.totalorder %s22, 0
    %p175 = por %p173, %p174
    %s177 = sadd.s32 %s176, 1
    %p180 = scmp.eq.s32.totalorder %s16, 3
    %p181 = scmp.ne.s32.totalorder %s176, %s178
    %p182 = scmp.eq.s32.totalorder %s16, 0
    %p183 = por %p181, %p182
    %p184 = scmp.ne.s32.totalorder %s176, %s178
    %p185 = scmp.eq.s32.totalorder %s21, 3
    %p186 = por %p184, %p185
    %p187 = scmp.ne.s32.totalorder %s178, %s179
    %p188 = scmp.eq.s32.totalorder %s21, 0
    %p189 = por %p187, %p188
    %p190 = scmp.ne.s32.totalorder %s178, %s179
    %p191 = scmp.eq.s32.totalorder %s22, 3
    %p192 = por %p190, %p191
    %p194 = scmp.ne.s32.totalorder %s179, %s193
    %p195 = scmp.eq.s32.totalorder %s22, 0
    %p196 = por %p194, %p195
    %s198 = sadd.s32 %s197, 1
    %p201 = scmp.eq.s32.totalorder %s16, 3
    %p202 = scmp.ne.s32.totalorder %s197, %s199
    %p203 = scmp.eq.s32.totalorder %s16, 0
    %p204 = por %p202, %p203
    %p205 = scmp.ne.s32.totalorder %s197, %s199
    %p206 = scmp.eq.s32.totalorder %s21, 3
    %p207 = por %p205, %p206
    %p208 = scmp.ne.s32.totalorder %s199, %s200
    %p209 = scmp.eq.s32.totalorder %s21, 0
    %p210 = por %p208, %p209
    %p211 = scmp.ne.s32.totalorder %s199, %s200
    %p212 = scmp.eq.s32.totalorder %s22, 3
    %p213 = por %p211, %p212
    %p215 = scmp.ne.s32.totalorder %s200, %s214
    %p216 = scmp.eq.s32.totalorder %s22, 0
    %p217 = por %p215, %p216
    %s218 = ssub.s32 %s16, %s23
    %p219 = scmp.eq.s32.totalorder %s218, 0
    %s221 = sadd.s32 %s220, 1
    %s222 = scalar_select %p219, %s220, %s221
    %p225 = pneg %p219
    %p226 = scmp.eq.s32.totalorder %s16, 3
    %p227 = por %p225, %p226
    %p228 = scmp.ne.s32.totalorder %s220, %s223
    %p229 = scmp.eq.s32.totalorder %s16, 0
    %p230 = por %p228, %p229
    %p231 = scmp.ne.s32.totalorder %s220, %s223
    %p232 = scmp.eq.s32.totalorder %s21, 3
    %p233 = por %p231, %p232
    %p234 = scmp.ne.s32.totalorder %s223, %s224
    %p235 = scmp.eq.s32.totalorder %s21, 0
    %p236 = por %p234, %p235
    %p237 = scmp.ne.s32.totalorder %s223, %s224
    %p238 = scmp.eq.s32.totalorder %s22, 3
    %p239 = por %p237, %p238
    %p241 = scmp.ne.s32.totalorder %s224, %s240
    %p242 = scmp.eq.s32.totalorder %s22, 0
    %p243 = por %p241, %p242
    %s244 = ssub.s32 %s16, %s23
    %p245 = scmp.eq.s32.totalorder %s244, 0
    %s247 = sadd.s32 %s246, 1
    %s248 = scalar_select %p245, %s246, %s247
    %p251 = pneg %p245
    %p252 = scmp.eq.s32.totalorder %s16, 3
    %p253 = por %p251, %p252
    %p254 = scmp.ne.s32.totalorder %s246, %s249
    %p255 = scmp.eq.s32.totalorder %s16, 0
    %p256 = por %p254, %p255
    %p257 = scmp.ne.s32.totalorder %s246, %s249
    %p258 = scmp.eq.s32.totalorder %s21, 3
    %p259 = por %p257, %p258
    %p260 = scmp.ne.s32.totalorder %s249, %s250
    %p261 = scmp.eq.s32.totalorder %s21, 0
    %p262 = por %p260, %p261
    %p263 = scmp.ne.s32.totalorder %s249, %s250
    %p264 = scmp.eq.s32.totalorder %s22, 3
    %p265 = por %p263, %p264
    %p267 = scmp.ne.s32.totalorder %s250, %s266
    %p268 = scmp.eq.s32.totalorder %s22, 0
    %p269 = por %p267, %p268
    %p270 = scmp.le.s32.totalorder 1, %s16
    %p271 = scmp.lt.s32.totalorder %s16, 5
    %p272 = pnand %p270, %p271
    %p273 = pneg %p272
    // Predicated region
    $region9: #{forward.3} parent=5 // pred_check
      _
    $region10: #{forward.3} parent=5 // pred_check_branch
      %275 = sbr.rel (%p272) target = $region12
    $region11: #{forward.3} parent=5 // pred_region
      %s276 = ssub.s32 %s16, 1
      // Predicated region
      $region13: #{forward.3} parent=11 // pred_check
        %p277 = pneg %p63
      $region14: #{forward.3} parent=11 // pred_check_branch
        %279 = sbr.rel (%p277) target = $region16
      $region15: #{forward.3} parent=11 // pred_region
        _
      $region16: #{forward.3} parent=11 // pred_fallthru
        _
      // Predicated region
      $region17: #{forward.3} parent=11 // pred_check
        %p280 = pneg %p84
      $region18: #{forward.3} parent=11 // pred_check_branch
        %282 = sbr.rel (%p280) target = $region20
      $region19: #{forward.3} parent=11 // pred_region
        _
      $region20: #{forward.3} parent=11 // pred_fallthru
        _
      // Predicated region
      $region21: #{forward.3} parent=11 // pred_check
        %p283 = pneg %p105
      $region22: #{forward.3} parent=11 // pred_check_branch
        %285 = sbr.rel (%p283) target = $region24
      $region23: #{forward.3} parent=11 // pred_region
        _
      $region24: #{forward.3} parent=11 // pred_fallthru
        _
      // Predicated region
      $region25: #{forward.3} parent=11 // pred_check
        %p286 = pneg %p126
      $region26: #{forward.3} parent=11 // pred_check_branch
        %288 = sbr.rel (%p286) target = $region28
      $region27: #{forward.3} parent=11 // pred_region
        _
      $region28: #{forward.3} parent=11 // pred_fallthru
        _
      // Predicated region
      $region29: #{forward.3} parent=11 // pred_check
        %p289 = pneg %p147
      $region30: #{forward.3} parent=11 // pred_check_branch
        %291 = sbr.rel (%p289) target = $region32
      $region31: #{forward.3} parent=11 // pred_region
        _
      $region32: #{forward.3} parent=11 // pred_fallthru
        _
      // Predicated region
      $region33: #{forward.3} parent=11 // pred_check
        %p292 = pneg %p168
      $region34: #{forward.3} parent=11 // pred_check_branch
        %294 = sbr.rel (%p292) target = $region36
      $region35: #{forward.3} parent=11 // pred_region
        _
      $region36: #{forward.3} parent=11 // pred_fallthru
        _
      // Predicated region
      $region37: #{forward.3} parent=11 // pred_check
        %p295 = pneg %p189
      $region38: #{forward.3} parent=11 // pred_check_branch
        %297 = sbr.rel (%p295) target = $region40
      $region39: #{forward.3} parent=11 // pred_region
        _
      $region40: #{forward.3} parent=11 // pred_fallthru
        _
      // Predicated region
      $region41: #{forward.3} parent=11 // pred_check
        %p298 = pneg %p210
      $region42: #{forward.3} parent=11 // pred_check_branch
        %300 = sbr.rel (%p298) target = $region44
      $region43: #{forward.3} parent=11 // pred_region
        _
      $region44: #{forward.3} parent=11 // pred_fallthru
        _
    $region12: #{forward.3} parent=5 // pred_fallthru
      _
    %p301 = scmp.lt.s32.totalorder %s16, 4
    // Predicated region
    $region45: #{forward.3} parent=5 // pred_check
      %p302 = pneg %p301
    $region46: #{forward.3} parent=5 // pred_check_branch
      %304 = sbr.rel (%p302) target = $region48
    $region47: #{forward.3} parent=5 // pred_region
      // Predicated region
      $region49: #{forward.3} parent=47 // pred_check
        %p305 = pneg %p36
      $region50: #{forward.3} parent=47 // pred_check_branch
        %307 = sbr.rel (%p305) target = $region52
      $region51: #{forward.3} parent=47 // pred_region
        %p308 = scmp.lt.s32.totalorder %s16, 3
        %s309 = scalar_select %p308, %s16, 3
        %s310 = smul.addr %s309, 2
        %s311 = scalar_lea.vmem %s0, %s310
      $region52: #{forward.3} parent=47 // pred_fallthru
        _
      // Predicated region
      $region53: #{forward.3} parent=47 // pred_check
        %p312 = pneg %p230
      $region54: #{forward.3} parent=47 // pred_check_branch
        %314 = sbr.rel (%p312) target = $region56
      $region55: #{forward.3} parent=47 // pred_region
        %p315 = scmp.lt.s32.totalorder %s16, 3
        %s316 = scalar_select %p315, %s16, 3
        %s317 = smul.addr %s316, 32
        %s318 = smul.addr %s317, 4
        %s319 = scalar_lea.vmem %s9, %s318
      $region56: #{forward.3} parent=47 // pred_fallthru
        _
    $region48: #{forward.3} parent=5 // pred_fallthru
      _
    %p320 = scmp.le.s32.totalorder 1, %s16
    %p321 = scmp.lt.s32.totalorder %s16, 5
    %p322 = pnand %p320, %p321
    %p323 = pneg %p322
    // Predicated region
    $region57: #{forward.3} parent=5 // pred_check
      _
    $region58: #{forward.3} parent=5 // pred_check_branch
      %325 = sbr.rel (%p322) target = $region60
    $region59: #{forward.3} parent=5 // pred_region
      %s326 = ssub.s32 %s16, 1
      %p327 = scmp.lt.s32.totalorder %s21, 3
      %s328 = scalar_select %p327, %s21, 3
      %s329 = smul.addr %s328, 2
      %s330 = scalar_lea.vmem %s0, %s329
      %p331 = pneg %p42
      %p332 = pneg %p39
      %p333 = pneg %p63
      %p334 = pneg %p60
      %p335 = pneg %p84
      %p336 = pneg %p81
      %p337 = pneg %p105
      %p338 = pneg %p102
      %p339 = pneg %p126
      %p340 = pneg %p123
      %p341 = pneg %p147
      %p342 = pneg %p144
      %p343 = pneg %p168
      %p344 = pneg %p165
      %p345 = pneg %p189
      %p346 = pneg %p186
      %p347 = pneg %p210
      %p348 = pneg %p207
      %p349 = scmp.lt.s32.totalorder %s21, 3
      %s350 = scalar_select %p349, %s21, 3
      %s351 = smul.addr %s350, 32
      %s352 = smul.addr %s351, 4
      %s353 = scalar_lea.vmem %s9, %s352
      %p354 = pneg %p236
      %p355 = pneg %p233
      %p356 = pneg %p262
      %p357 = pneg %p259
      %p358 = scmp.lt.s32.totalorder %s21, 3
      %s359 = scalar_select %p358, %s21, 3
      %s360 = smul.addr %s359, 2
      %s361 = scalar_lea.vmem %s10, %s360
      %p362 = scmp.lt.s32.totalorder %s21, 3
      %s363 = scalar_select %p362, %s21, 3
      %s364 = smul.addr %s363, 2
      %s365 = scalar_lea.vmem %s0, %s364
      %p366 = scmp.lt.s32.totalorder %s21, 3
      %s367 = scalar_select %p366, %s21, 3
      %s368 = smul.addr %s367, 32
      %s369 = smul.addr %s368, 4
      %s370 = scalar_lea.vmem %s9, %s369
      %p371 = scmp.lt.s32.totalorder %s21, 3
      %s372 = scalar_select %p371, %s21, 3
      %s373 = smul.addr %s372, 2
      %s374 = scalar_lea.vmem %s10, %s373
      %v376 = vld [vmem:[%s365] sm:$0x3]
      %v377 = vunpack.c.l.bf16 %v376
      %v378 = vld [vmem:[%s1] sm:$0xff]
      %v379 = vld [vmem:[%s1 + $0x8] sm:$0xff]
      %v380 = vld [vmem:[%s1 + $0x10] sm:$0xff]
      %v381 = vld [vmem:[%s1 + $0x18] sm:$0xff]
      %v382 = vld [vmem:[%s1 + $0x20] sm:$0xff]
      %v383 = vld [vmem:[%s1 + $0x28] sm:$0xff]
      %v384 = vld [vmem:[%s1 + $0x30] sm:$0xff]
      %v385 = vld [vmem:[%s1 + $0x38] sm:$0xff]
      %v386 = vld [vmem:[%s1 + $0x40] sm:$0xff]
      %v387 = vld [vmem:[%s1 + $0x48] sm:$0xff]
      %v388 = vld [vmem:[%s1 + $0x50] sm:$0xff]
      %v389 = vld [vmem:[%s1 + $0x58] sm:$0xff]
      %v390 = vld [vmem:[%s1 + $0x60] sm:$0xff]
      %v391 = vld [vmem:[%s1 + $0x68] sm:$0xff]
      %v392 = vld [vmem:[%s1 + $0x70] sm:$0xff]
      %v393 = vld [vmem:[%s1 + $0x78] sm:$0xff]
      %v394 = vld [vmem:[%s1 + $0x80] sm:$0xff]
      %v395 = vld [vmem:[%s1 + $0x88] sm:$0xff]
      %v396 = vld [vmem:[%s1 + $0x90] sm:$0xff]
      %v397 = vld [vmem:[%s1 + $0x98] sm:$0xff]
      %v398 = vld [vmem:[%s1 + $0xa0] sm:$0xff]
      %v399 = vld [vmem:[%s1 + $0xa8] sm:$0xff]
      %v400 = vld [vmem:[%s1 + $0xb0] sm:$0xff]
      %v401 = vld [vmem:[%s1 + $0xb8] sm:$0xff]
      %v402 = vld [vmem:[%s1 + $0xc0] sm:$0xff]
      %v403 = vld [vmem:[%s1 + $0xc8] sm:$0xff]
      %v404 = vld [vmem:[%s1 + $0xd0] sm:$0xff]
      %v405 = vld [vmem:[%s1 + $0xd8] sm:$0xff]
      %v406 = vld [vmem:[%s1 + $0xe0] sm:$0xff]
      %v407 = vld [vmem:[%s1 + $0xe8] sm:$0xff]
      %v408 = vld [vmem:[%s1 + $0xf0] sm:$0xff]
      %v409 = vld [vmem:[%s1 + $0xf8] sm:$0xff]
      %v410 = vld [vmem:[%s1 + $0x100] sm:$0xff]
      %v411 = vld [vmem:[%s1 + $0x108] sm:$0xff]
      %v412 = vld [vmem:[%s1 + $0x110] sm:$0xff]
      %v413 = vld [vmem:[%s1 + $0x118] sm:$0xff]
      %v414 = vld [vmem:[%s1 + $0x120] sm:$0xff]
      %v415 = vld [vmem:[%s1 + $0x128] sm:$0xff]
      %v416 = vld [vmem:[%s1 + $0x130] sm:$0xff]
      %v417 = vld [vmem:[%s1 + $0x138] sm:$0xff]
      %v418 = vld [vmem:[%s1 + $0x140] sm:$0xff]
      %v419 = vld [vmem:[%s1 + $0x148] sm:$0xff]
      %v420 = vld [vmem:[%s1 + $0x150] sm:$0xff]
      %v421 = vld [vmem:[%s1 + $0x158] sm:$0xff]
      %v422 = vld [vmem:[%s1 + $0x160] sm:$0xff]
      %v423 = vld [vmem:[%s1 + $0x168] sm:$0xff]
      %v424 = vld [vmem:[%s1 + $0x170] sm:$0xff]
      %v425 = vld [vmem:[%s1 + $0x178] sm:$0xff]
      %v426 = vld [vmem:[%s1 + $0x180] sm:$0xff]
      %v427 = vld [vmem:[%s1 + $0x188] sm:$0xff]
      %v428 = vld [vmem:[%s1 + $0x190] sm:$0xff]
      %v429 = vld [vmem:[%s1 + $0x198] sm:$0xff]
      %v430 = vld [vmem:[%s1 + $0x1a0] sm:$0xff]
      %v431 = vld [vmem:[%s1 + $0x1a8] sm:$0xff]
      %v432 = vld [vmem:[%s1 + $0x1b0] sm:$0xff]
      %v433 = vld [vmem:[%s1 + $0x1b8] sm:$0xff]
      %v434 = vld [vmem:[%s1 + $0x1c0] sm:$0xff]
      %v435 = vld [vmem:[%s1 + $0x1c8] sm:$0xff]
      %v436 = vld [vmem:[%s1 + $0x1d0] sm:$0xff]
      %v437 = vld [vmem:[%s1 + $0x1d8] sm:$0xff]
      %v438 = vld [vmem:[%s1 + $0x1e0] sm:$0xff]
      %v439 = vld [vmem:[%s1 + $0x1e8] sm:$0xff]
      %v440 = vld [vmem:[%s1 + $0x1f0] sm:$0xff]
      %v441 = vld [vmem:[%s1 + $0x1f8] sm:$0xff]
      %v442 = vld [vmem:[%s1 + $0x200] sm:$0xff]
      %v443 = vld [vmem:[%s1 + $0x208] sm:$0xff]
      %v444 = vld [vmem:[%s1 + $0x210] sm:$0xff]
      %v445 = vld [vmem:[%s1 + $0x218] sm:$0xff]
      %v446 = vld [vmem:[%s1 + $0x220] sm:$0xff]
      %v447 = vld [vmem:[%s1 + $0x228] sm:$0xff]
      %v448 = vld [vmem:[%s1 + $0x230] sm:$0xff]
      %v449 = vld [vmem:[%s1 + $0x238] sm:$0xff]
      %v450 = vld [vmem:[%s1 + $0x240] sm:$0xff]
      %v451 = vld [vmem:[%s1 + $0x248] sm:$0xff]
      %v452 = vld [vmem:[%s1 + $0x250] sm:$0xff]
      %v453 = vld [vmem:[%s1 + $0x258] sm:$0xff]
      %v454 = vld [vmem:[%s1 + $0x260] sm:$0xff]
      %v455 = vld [vmem:[%s1 + $0x268] sm:$0xff]
      %v456 = vld [vmem:[%s1 + $0x270] sm:$0xff]
      %v457 = vld [vmem:[%s1 + $0x278] sm:$0xff]
      %v458 = vld [vmem:[%s1 + $0x280] sm:$0xff]
      %v459 = vld [vmem:[%s1 + $0x288] sm:$0xff]
      %v460 = vld [vmem:[%s1 + $0x290] sm:$0xff]
      %v461 = vld [vmem:[%s1 + $0x298] sm:$0xff]
      %v462 = vld [vmem:[%s1 + $0x2a0] sm:$0xff]
      %v463 = vld [vmem:[%s1 + $0x2a8] sm:$0xff]
      %v464 = vld [vmem:[%s1 + $0x2b0] sm:$0xff]
      %v465 = vld [vmem:[%s1 + $0x2b8] sm:$0xff]
      %v466 = vld [vmem:[%s1 + $0x2c0] sm:$0xff]
      %v467 = vld [vmem:[%s1 + $0x2c8] sm:$0xff]
      %v468 = vld [vmem:[%s1 + $0x2d0] sm:$0xff]
      %v469 = vld [vmem:[%s1 + $0x2d8] sm:$0xff]
      %v470 = vld [vmem:[%s1 + $0x2e0] sm:$0xff]
      %v471 = vld [vmem:[%s1 + $0x2e8] sm:$0xff]
      %v472 = vld [vmem:[%s1 + $0x2f0] sm:$0xff]
      %v473 = vld [vmem:[%s1 + $0x2f8] sm:$0xff]
      %v474 = vld [vmem:[%s2] sm:$0x3f]
      %v476 = vlaneseq
      %v477 = vshrl.u32 %v476, 7
      %v478 = vsub.s32 0, %v477
      %v479 = vrot.slane %v474, %v478
      %v480 = vlaneseq
      %v481 = vshrl.u32 %v480, 7
      %v482 = vsub.s32 1, %v481
      %v483 = vrot.slane %v474, %v482
      %v484 = vlaneseq
      %v485 = vshrl.u32 %v484, 7
      %v486 = vsub.s32 2, %v485
      %v487 = vrot.slane %v474, %v486
      %v488 = vlaneseq
      %v489 = vshrl.u32 %v488, 7
      %v490 = vsub.s32 3, %v489
      %v491 = vrot.slane %v474, %v490
      %v492 = vlaneseq
      %v493 = vshrl.u32 %v492, 7
      %v494 = vsub.s32 4, %v493
      %v495 = vrot.slane %v474, %v494
      %v496 = vlaneseq
      %v497 = vshrl.u32 %v496, 7
      %v498 = vsub.s32 5, %v497
      %v499 = vrot.slane %v474, %v498
      %v508 = vunpack.c.l.s4 1966171168
      %v509 = vunpack.c.0.s8 %v508
      %v510 = vlaneseq
      %v511 = vshrl.u32 %v510, 7
      %v512 = vsub.s32 %v509, %v511
      %v513 = vrot.slane %v376, %v512
      %v514 = vcombine.high %v513, %v513
      %v516 = vunpack.c.l.s4 1966171168
      %v517 = vunpack.c.0.s8 %v516
      %v518 = vlaneseq
      %v519 = vshrl.u32 %v518, 7
      %v520 = vsub.s32 %v517, %v519
      %v521 = vrot.slane %v513, %v520
      %v523 = vunpack.c.l.s4 1966171168
      %v524 = vunpack.c.0.s8 %v523
      %v525 = vlaneseq
      %v526 = vshrl.u32 %v525, 7
      %v527 = vsub.s32 %v524, %v526
      %v528 = vrot.slane %v514, %v527
      %v627 = vunpack.c.l.b16 %v378
      %v628 = vunpack.c.h.b16 %v378
      %v629 = vunpack.c.l.b16 %v379
      %v630 = vunpack.c.h.b16 %v379
      %v631 = vunpack.c.l.b16 %v380
      %v632 = vunpack.c.h.b16 %v380
      %v633 = vunpack.c.l.b16 %v381
      %v634 = vunpack.c.h.b16 %v381
      %v635 = vunpack.c.l.b16 %v382
      %v636 = vunpack.c.h.b16 %v382
      %v637 = vunpack.c.l.b16 %v383
      %v638 = vunpack.c.h.b16 %v383
      %v639 = vunpack.c.l.b16 %v384
      %v640 = vunpack.c.h.b16 %v384
      %v641 = vunpack.c.l.b16 %v385
      %v642 = vunpack.c.h.b16 %v385
      %v643 = vunpack.c.l.b16 %v386
      %v644 = vunpack.c.h.b16 %v386
      %v645 = vunpack.c.l.b16 %v387
      %v646 = vunpack.c.h.b16 %v387
      %v647 = vunpack.c.l.b16 %v388
      %v648 = vunpack.c.h.b16 %v388
      %v649 = vunpack.c.l.b16 %v389
      %v650 = vunpack.c.h.b16 %v389
      %v651 = vunpack.c.l.b16 %v390
      %v652 = vunpack.c.h.b16 %v390
      %v653 = vunpack.c.l.b16 %v391
      %v654 = vunpack.c.h.b16 %v391
      %v655 = vunpack.c.l.b16 %v392
      %v656 = vunpack.c.h.b16 %v392
      %v657 = vunpack.c.l.b16 %v393
      %v658 = vunpack.c.h.b16 %v393
      %v659 = vunpack.c.l.b16 %v394
      %v660 = vunpack.c.h.b16 %v394
      %v661 = vunpack.c.l.b16 %v395
      %v662 = vunpack.c.h.b16 %v395
      %v663 = vunpack.c.l.b16 %v396
      %v664 = vunpack.c.h.b16 %v396
      %v665 = vunpack.c.l.b16 %v397
      %v666 = vunpack.c.h.b16 %v397
      %v667 = vunpack.c.l.b16 %v398
      %v668 = vunpack.c.h.b16 %v398
      %v669 = vunpack.c.l.b16 %v399
      %v670 = vunpack.c.h.b16 %v399
      %v671 = vunpack.c.l.b16 %v400
      %v672 = vunpack.c.h.b16 %v400
      %v673 = vunpack.c.l.b16 %v401
      %v674 = vunpack.c.h.b16 %v401
      %v675 = vunpack.c.l.b16 %v402
      %v676 = vunpack.c.h.b16 %v402
      %v677 = vunpack.c.l.b16 %v403
      %v678 = vunpack.c.h.b16 %v403
      %v679 = vunpack.c.l.b16 %v404
      %v680 = vunpack.c.h.b16 %v404
      %v681 = vunpack.c.l.b16 %v405
      %v682 = vunpack.c.h.b16 %v405
      %v683 = vunpack.c.l.b16 %v406
      %v684 = vunpack.c.h.b16 %v406
      %v685 = vunpack.c.l.b16 %v407
      %v686 = vunpack.c.h.b16 %v407
      %v687 = vunpack.c.l.b16 %v408
      %v688 = vunpack.c.h.b16 %v408
      %v689 = vunpack.c.l.b16 %v409
      %v690 = vunpack.c.h.b16 %v409
      %v691 = vunpack.c.l.b16 %v410
      %v692 = vunpack.c.h.b16 %v410
      %v693 = vunpack.c.l.b16 %v411
      %v694 = vunpack.c.h.b16 %v411
      %v695 = vunpack.c.l.b16 %v412
      %v696 = vunpack.c.h.b16 %v412
      %v697 = vunpack.c.l.b16 %v413
      %v698 = vunpack.c.h.b16 %v413
      %v699 = vunpack.c.l.b16 %v414
      %v700 = vunpack.c.h.b16 %v414
      %v701 = vunpack.c.l.b16 %v415
      %v702 = vunpack.c.h.b16 %v415
      %v703 = vunpack.c.l.b16 %v416
      %v704 = vunpack.c.h.b16 %v416
      %v705 = vunpack.c.l.b16 %v417
      %v706 = vunpack.c.h.b16 %v417
      %v707 = vunpack.c.l.b16 %v418
      %v708 = vunpack.c.h.b16 %v418
      %v709 = vunpack.c.l.b16 %v419
      %v710 = vunpack.c.h.b16 %v419
      %v711 = vunpack.c.l.b16 %v420
      %v712 = vunpack.c.h.b16 %v420
      %v713 = vunpack.c.l.b16 %v421
      %v714 = vunpack.c.h.b16 %v421
      %v715 = vunpack.c.l.b16 %v422
      %v716 = vunpack.c.h.b16 %v422
      %v717 = vunpack.c.l.b16 %v423
      %v718 = vunpack.c.h.b16 %v423
      %v719 = vunpack.c.l.b16 %v424
      %v720 = vunpack.c.h.b16 %v424
      %v721 = vunpack.c.l.b16 %v425
      %v722 = vunpack.c.h.b16 %v425
      %v723 = vunpack.c.l.b16 %v426
      %v724 = vunpack.c.h.b16 %v426
      %v725 = vunpack.c.l.b16 %v427
      %v726 = vunpack.c.h.b16 %v427
      %v727 = vunpack.c.l.b16 %v428
      %v728 = vunpack.c.h.b16 %v428
      %v729 = vunpack.c.l.b16 %v429
      %v730 = vunpack.c.h.b16 %v429
      %v731 = vunpack.c.l.b16 %v430
      %v732 = vunpack.c.h.b16 %v430
      %v733 = vunpack.c.l.b16 %v431
      %v734 = vunpack.c.h.b16 %v431
      %v735 = vunpack.c.l.b16 %v432
      %v736 = vunpack.c.h.b16 %v432
      %v737 = vunpack.c.l.b16 %v433
      %v738 = vunpack.c.h.b16 %v433
      %v739 = vunpack.c.l.b16 %v434
      %v740 = vunpack.c.h.b16 %v434
      %v741 = vunpack.c.l.b16 %v435
      %v742 = vunpack.c.h.b16 %v435
      %v743 = vunpack.c.l.b16 %v436
      %v744 = vunpack.c.h.b16 %v436
      %v745 = vunpack.c.l.b16 %v437
      %v746 = vunpack.c.h.b16 %v437
      %v747 = vunpack.c.l.b16 %v438
      %v748 = vunpack.c.h.b16 %v438
      %v749 = vunpack.c.l.b16 %v439
      %v750 = vunpack.c.h.b16 %v439
      %v751 = vunpack.c.l.b16 %v440
      %v752 = vunpack.c.h.b16 %v440
      %v753 = vunpack.c.l.b16 %v441
      %v754 = vunpack.c.h.b16 %v441
      %v755 = vunpack.c.l.b16 %v442
      %v756 = vunpack.c.h.b16 %v442
      %v757 = vunpack.c.l.b16 %v443
      %v758 = vunpack.c.h.b16 %v443
      %v759 = vunpack.c.l.b16 %v444
      %v760 = vunpack.c.h.b16 %v444
      %v761 = vunpack.c.l.b16 %v445
      %v762 = vunpack.c.h.b16 %v445
      %v763 = vunpack.c.l.b16 %v446
      %v764 = vunpack.c.h.b16 %v446
      %v765 = vunpack.c.l.b16 %v447
      %v766 = vunpack.c.h.b16 %v447
      %v767 = vunpack.c.l.b16 %v448
      %v768 = vunpack.c.h.b16 %v448
      %v769 = vunpack.c.l.b16 %v449
      %v770 = vunpack.c.h.b16 %v449
      %v771 = vunpack.c.l.b16 %v450
      %v772 = vunpack.c.h.b16 %v450
      %v773 = vunpack.c.l.b16 %v451
      %v774 = vunpack.c.h.b16 %v451
      %v775 = vunpack.c.l.b16 %v452
      %v776 = vunpack.c.h.b16 %v452
      %v777 = vunpack.c.l.b16 %v453
      %v778 = vunpack.c.h.b16 %v453
      %v779 = vunpack.c.l.b16 %v454
      %v780 = vunpack.c.h.b16 %v454
      %v781 = vunpack.c.l.b16 %v455
      %v782 = vunpack.c.h.b16 %v455
      %v783 = vunpack.c.l.b16 %v456
      %v784 = vunpack.c.h.b16 %v456
      %v785 = vunpack.c.l.b16 %v457
      %v786 = vunpack.c.h.b16 %v457
      %v787 = vunpack.c.l.b16 %v458
      %v788 = vunpack.c.h.b16 %v458
      %v789 = vunpack.c.l.b16 %v459
      %v790 = vunpack.c.h.b16 %v459
      %v791 = vunpack.c.l.b16 %v460
      %v792 = vunpack.c.h.b16 %v460
      %v793 = vunpack.c.l.b16 %v461
      %v794 = vunpack.c.h.b16 %v461
      %v795 = vunpack.c.l.b16 %v462
      %v796 = vunpack.c.h.b16 %v462
      %v797 = vunpack.c.l.b16 %v463
      %v798 = vunpack.c.h.b16 %v463
      %v799 = vunpack.c.l.b16 %v464
      %v800 = vunpack.c.h.b16 %v464
      %v801 = vunpack.c.l.b16 %v465
      %v802 = vunpack.c.h.b16 %v465
      %v803 = vunpack.c.l.b16 %v466
      %v804 = vunpack.c.h.b16 %v466
      %v805 = vunpack.c.l.b16 %v467
      %v806 = vunpack.c.h.b16 %v467
      %v807 = vunpack.c.l.b16 %v468
      %v808 = vunpack.c.h.b16 %v468
      %v809 = vunpack.c.l.b16 %v469
      %v810 = vunpack.c.h.b16 %v469
      %v811 = vunpack.c.l.b16 %v470
      %v812 = vunpack.c.h.b16 %v470
      %v813 = vunpack.c.l.b16 %v471
      %v814 = vunpack.c.h.b16 %v471
      %v815 = vunpack.c.l.b16 %v472
      %v816 = vunpack.c.h.b16 %v472
      %v817 = vunpack.c.l.b16 %v473
      %v818 = vunpack.c.h.b16 %v473
      %v819 = vpack.c.b16 %v633, %v627
      %v820 = vpack.c.b16 %v634, %v628
      %v821 = vpack.c.b16 %v635, %v629
      %v822 = vpack.c.b16 %v636, %v630
      %v823 = vpack.c.b16 %v637, %v631
      %v824 = vpack.c.b16 %v638, %v632
      %v825 = vpack.c.b16 %v645, %v639
      %v826 = vpack.c.b16 %v646, %v640
      %v827 = vpack.c.b16 %v647, %v641
      %v828 = vpack.c.b16 %v648, %v642
      %v829 = vpack.c.b16 %v649, %v643
      %v830 = vpack.c.b16 %v650, %v644
      %v831 = vpack.c.b16 %v657, %v651
      %v832 = vpack.c.b16 %v658, %v652
      %v833 = vpack.c.b16 %v659, %v653
      %v834 = vpack.c.b16 %v660, %v654
      %v835 = vpack.c.b16 %v661, %v655
      %v836 = vpack.c.b16 %v662, %v656
      %v837 = vpack.c.b16 %v669, %v663
      %v838 = vpack.c.b16 %v670, %v664
      %v839 = vpack.c.b16 %v671, %v665
      %v840 = vpack.c.b16 %v672, %v666
      %v841 = vpack.c.b16 %v673, %v667
      %v842 = vpack.c.b16 %v674, %v668
      %v843 = vpack.c.b16 %v681, %v675
      %v844 = vpack.c.b16 %v682, %v676
      %v845 = vpack.c.b16 %v683, %v677
      %v846 = vpack.c.b16 %v684, %v678
      %v847 = vpack.c.b16 %v685, %v679
      %v848 = vpack.c.b16 %v686, %v680
      %v849 = vpack.c.b16 %v693, %v687
      %v850 = vpack.c.b16 %v694, %v688
      %v851 = vpack.c.b16 %v695, %v689
      %v852 = vpack.c.b16 %v696, %v690
      %v853 = vpack.c.b16 %v697, %v691
      %v854 = vpack.c.b16 %v698, %v692
      %v855 = vpack.c.b16 %v705, %v699
      %v856 = vpack.c.b16 %v706, %v700
      %v857 = vpack.c.b16 %v707, %v701
      %v858 = vpack.c.b16 %v708, %v702
      %v859 = vpack.c.b16 %v709, %v703
      %v860 = vpack.c.b16 %v710, %v704
      %v861 = vpack.c.b16 %v717, %v711
      %v862 = vpack.c.b16 %v718, %v712
      %v863 = vpack.c.b16 %v719, %v713
      %v864 = vpack.c.b16 %v720, %v714
      %v865 = vpack.c.b16 %v721, %v715
      %v866 = vpack.c.b16 %v722, %v716
      %v867 = vpack.c.b16 %v729, %v723
      %v868 = vpack.c.b16 %v730, %v724
      %v869 = vpack.c.b16 %v731, %v725
      %v870 = vpack.c.b16 %v732, %v726
      %v871 = vpack.c.b16 %v733, %v727
      %v872 = vpack.c.b16 %v734, %v728
      %v873 = vpack.c.b16 %v741, %v735
      %v874 = vpack.c.b16 %v742, %v736
      %v875 = vpack.c.b16 %v743, %v737
      %v876 = vpack.c.b16 %v744, %v738
      %v877 = vpack.c.b16 %v745, %v739
      %v878 = vpack.c.b16 %v746, %v740
      %v879 = vpack.c.b16 %v753, %v747
      %v880 = vpack.c.b16 %v754, %v748
      %v881 = vpack.c.b16 %v755, %v749
      %v882 = vpack.c.b16 %v756, %v750
      %v883 = vpack.c.b16 %v757, %v751
      %v884 = vpack.c.b16 %v758, %v752
      %v885 = vpack.c.b16 %v765, %v759
      %v886 = vpack.c.b16 %v766, %v760
      %v887 = vpack.c.b16 %v767, %v761
      %v888 = vpack.c.b16 %v768, %v762
      %v889 = vpack.c.b16 %v769, %v763
      %v890 = vpack.c.b16 %v770, %v764
      %v891 = vpack.c.b16 %v777, %v771
      %v892 = vpack.c.b16 %v778, %v772
      %v893 = vpack.c.b16 %v779, %v773
      %v894 = vpack.c.b16 %v780, %v774
      %v895 = vpack.c.b16 %v781, %v775
      %v896 = vpack.c.b16 %v782, %v776
      %v897 = vpack.c.b16 %v789, %v783
      %v898 = vpack.c.b16 %v790, %v784
      %v899 = vpack.c.b16 %v791, %v785
      %v900 = vpack.c.b16 %v792, %v786
      %v901 = vpack.c.b16 %v793, %v787
      %v902 = vpack.c.b16 %v794, %v788
      %v903 = vpack.c.b16 %v801, %v795
      %v904 = vpack.c.b16 %v802, %v796
      %v905 = vpack.c.b16 %v803, %v797
      %v906 = vpack.c.b16 %v804, %v798
      %v907 = vpack.c.b16 %v805, %v799
      %v908 = vpack.c.b16 %v806, %v800
      %v909 = vpack.c.b16 %v813, %v807
      %v910 = vpack.c.b16 %v814, %v808
      %v911 = vpack.c.b16 %v815, %v809
      %v912 = vpack.c.b16 %v816, %v810
      %v913 = vpack.c.b16 %v817, %v811
      %v914 = vpack.c.b16 %v818, %v812
      %1011 = vmatprep.subr.bf16.mxu0 %v862
      %1012 = vmatpush1.bf16.msra.mxu0 %v861
      %1013 = vmatprep.subr.bf16.mxu0 %v856
      %1014 = vmatpush1.bf16.msra.mxu0 %v855
      %1015 = vmatprep.subr.bf16.mxu0 %v850
      %1016 = vmatpush1.bf16.msra.mxu0 %v849
      %1017 = vmatprep.subr.bf16.mxu0 %v844
      %1018 = vmatpush1.bf16.msra.mxu0 %v843
      %1019 = vmatprep.subr.bf16.mxu0 %v838
      %1020 = vmatpush1.bf16.msra.mxu0 %v837
      %1021 = vmatprep.subr.bf16.mxu0 %v832
      %1022 = vmatpush1.bf16.msra.mxu0 %v831
      %1023 = vmatprep.subr.bf16.mxu0 %v826
      %1024 = vmatpush1.bf16.msra.mxu0 %v825
      %1025 = vmatprep.subr.bf16.mxu0 %v820
      %1026 = vmatpush1.bf16.msra.mxu0 %v819
      %1027 = vmatprep.subr.bf16.mxu0 %v910
      %1028 = vmatpush2.bf16.msra.mxu0 %v909
      %1029 = vmatprep.subr.bf16.mxu0 %v904
      %1030 = vmatpush2.bf16.msra.mxu0 %v903
      %1031 = vmatprep.subr.bf16.mxu0 %v898
      %1032 = vmatpush2.bf16.msra.mxu0 %v897
      %1033 = vmatprep.subr.bf16.mxu0 %v892
      %1034 = vmatpush2.bf16.msra.mxu0 %v891
      %1035 = vmatprep.subr.bf16.mxu0 %v886
      %1036 = vmatpush2.bf16.msra.mxu0 %v885
      %1037 = vmatprep.subr.bf16.mxu0 %v880
      %1038 = vmatpush2.bf16.msra.mxu0 %v879
      %1039 = vmatprep.subr.bf16.mxu0 %v874
      %1040 = vmatpush2.bf16.msra.mxu0 %v873
      %1041 = vmatprep.subr.bf16.mxu0 %v868
      %1042 = vmatpush2.bf16.msra.mxu0 %v867
      %1043 = vmatprep.mubr.bf16.mxu0 %v528
      %1044 = vmatmul.mubr.bf16.gmra.mxu0 %v521
      %v1045 = vpop.f32.mrf.mxu0
      %v1046 = vadd.f32 %v479, %v1045
      %v1047 = vpop.f32.mrf.mxu0
      %v1048 = vadd.f32 %v483, %v1047
      %v1049 = vpop.f32.mrf.mxu0
      %v1050 = vpop.f32.mrf.mxu0
      %1051 = vdwg.mxu0
      %1052 = vmatprep.subr.bf16.mxu0 %v864
      %1053 = vmatpush1.bf16.msra.mxu0 %v863
      %1054 = vmatprep.subr.bf16.mxu0 %v858
      %1055 = vmatpush1.bf16.msra.mxu0 %v857
      %1056 = vmatprep.subr.bf16.mxu0 %v852
      %1057 = vmatpush1.bf16.msra.mxu0 %v851
      %1058 = vmatprep.subr.bf16.mxu0 %v846
      %1059 = vmatpush1.bf16.msra.mxu0 %v845
      %1060 = vmatprep.subr.bf16.mxu0 %v840
      %1061 = vmatpush1.bf16.msra.mxu0 %v839
      %1062 = vmatprep.subr.bf16.mxu0 %v834
      %1063 = vmatpush1.bf16.msra.mxu0 %v833
      %1064 = vmatprep.subr.bf16.mxu0 %v828
      %1065 = vmatpush1.bf16.msra.mxu0 %v827
      %1066 = vmatprep.subr.bf16.mxu0 %v822
      %1067 = vmatpush1.bf16.msra.mxu0 %v821
      %1068 = vmatprep.subr.bf16.mxu0 %v912
      %1069 = vmatpush2.bf16.msra.mxu0 %v911
      %1070 = vmatprep.subr.bf16.mxu0 %v906
      %1071 = vmatpush2.bf16.msra.mxu0 %v905
      %1072 = vmatprep.subr.bf16.mxu0 %v900
      %1073 = vmatpush2.bf16.msra.mxu0 %v899
      %1074 = vmatprep.subr.bf16.mxu0 %v894
      %1075 = vmatpush2.bf16.msra.mxu0 %v893
      %1076 = vmatprep.subr.bf16.mxu0 %v888
      %1077 = vmatpush2.bf16.msra.mxu0 %v887
      %1078 = vmatprep.subr.bf16.mxu0 %v882
      %1079 = vmatpush2.bf16.msra.mxu0 %v881
      %1080 = vmatprep.subr.bf16.mxu0 %v876
      %1081 = vmatpush2.bf16.msra.mxu0 %v875
      %1082 = vmatprep.subr.bf16.mxu0 %v870
      %1083 = vmatpush2.bf16.msra.mxu0 %v869
      %1084 = vmatprep.mubr.bf16.mxu0 %v528
      %1085 = vmatmul.mubr.bf16.gmra.mxu0 %v521
      %v1086 = vpop.f32.mrf.mxu0
      %v1087 = vadd.f32 %v487, %v1086
      %v1088 = vpop.f32.mrf.mxu0
      %v1089 = vadd.f32 %v491, %v1088
      %v1090 = vpop.f32.mrf.mxu0
      %v1091 = vpop.f32.mrf.mxu0
      %1092 = vdwg.mxu0
      %1093 = vmatprep.subr.bf16.mxu0 %v866
      %1094 = vmatpush1.bf16.msra.mxu0 %v865
      %1095 = vmatprep.subr.bf16.mxu0 %v860
      %1096 = vmatpush1.bf16.msra.mxu0 %v859
      %1097 = vmatprep.subr.bf16.mxu0 %v854
      %1098 = vmatpush1.bf16.msra.mxu0 %v853
      %1099 = vmatprep.subr.bf16.mxu0 %v848
      %1100 = vmatpush1.bf16.msra.mxu0 %v847
      %1101 = vmatprep.subr.bf16.mxu0 %v842
      %1102 = vmatpush1.bf16.msra.mxu0 %v841
      %1103 = vmatprep.subr.bf16.mxu0 %v836
      %1104 = vmatpush1.bf16.msra.mxu0 %v835
      %1105 = vmatprep.subr.bf16.mxu0 %v830
      %1106 = vmatpush1.bf16.msra.mxu0 %v829
      %1107 = vmatprep.subr.bf16.mxu0 %v824
      %1108 = vmatpush1.bf16.msra.mxu0 %v823
      %1109 = vmatprep.subr.bf16.mxu0 %v914
      %1110 = vmatpush2.bf16.msra.mxu0 %v913
      %1111 = vmatprep.subr.bf16.mxu0 %v908
      %1112 = vmatpush2.bf16.msra.mxu0 %v907
      %1113 = vmatprep.subr.bf16.mxu0 %v902
      %1114 = vmatpush2.bf16.msra.mxu0 %v901
      %1115 = vmatprep.subr.bf16.mxu0 %v896
      %1116 = vmatpush2.bf16.msra.mxu0 %v895
      %1117 = vmatprep.subr.bf16.mxu0 %v890
      %1118 = vmatpush2.bf16.msra.mxu0 %v889
      %1119 = vmatprep.subr.bf16.mxu0 %v884
      %1120 = vmatpush2.bf16.msra.mxu0 %v883
      %1121 = vmatprep.subr.bf16.mxu0 %v878
      %1122 = vmatpush2.bf16.msra.mxu0 %v877
      %1123 = vmatprep.subr.bf16.mxu0 %v872
      %1124 = vmatpush2.bf16.msra.mxu0 %v871
      %1125 = vmatprep.mubr.bf16.mxu0 %v528
      %1126 = vmatmul.mubr.bf16.gmra.mxu0 %v521
      %v1127 = vpop.f32.mrf.mxu0
      %v1128 = vadd.f32 %v495, %v1127
      %v1129 = vpop.f32.mrf.mxu0
      %v1130 = vadd.f32 %v499, %v1129
      %v1131 = vpop.f32.mrf.mxu0
      %v1132 = vpop.f32.mrf.mxu0
      %1133 = vdwg.mxu0
      %v1134 = vpack.c.bf16 %v1046, %v1046
      %v1135 = vpack.c.bf16 %v1087, %v1087
      %v1136 = vpack.c.bf16 %v1128, %v1128
      %vm1137 = vcmask 261120
      %v1139 = vsel %vm1137, %v1134, 0
      %v1142 = vsel %vm1137, %v1135, 0
      %1144 = vmatprep.subr.bf16.mxu0 0
      %1145 = vmatpush1.bf16.xpose.msra.mxu0 0
      %1146 = vmatprep.subr.bf16.mxu0 0
      %1147 = vmatpush1.bf16.xpose.msra.mxu0 0
      %1148 = vmatprep.subr.bf16.mxu0 0
      %1149 = vmatpush1.bf16.xpose.msra.mxu0 0
      %1150 = vmatprep.subr.bf16.mxu0 0
      %1151 = vmatpush1.bf16.xpose.msra.mxu0 0
      %1152 = vmatprep.subr.bf16.mxu0 0
      %1153 = vmatpush1.bf16.xpose.msra.mxu0 0
      %1154 = vmatprep.subr.bf16.mxu0 0
      %1155 = vmatpush1.bf16.xpose.msra.mxu0 0
      %1156 = vmatprep.subr.bf16.mxu0 0
      %1157 = vmatpush1.bf16.xpose.msra.mxu0 0
      %1158 = vmatprep.subr.bf16.mxu0 0
      %1159 = vmatpush1.bf16.xpose.msra.mxu0 %v1142
      %1160 = vmatprep.subr.bf16.mxu0 0
      %1161 = vmatpush2.bf16.xpose.msra.mxu0 0
      %1162 = vmatprep.subr.bf16.mxu0 0
      %1163 = vmatpush2.bf16.xpose.msra.mxu0 0
      %1164 = vmatprep.subr.bf16.mxu0 0
      %1165 = vmatpush2.bf16.xpose.msra.mxu0 0
      %1166 = vmatprep.subr.bf16.mxu0 0
      %1167 = vmatpush2.bf16.xpose.msra.mxu0 0
      %1168 = vmatprep.subr.bf16.mxu0 0
      %1169 = vmatpush2.bf16.xpose.msra.mxu0 0
      %1170 = vmatprep.subr.bf16.mxu0 0
      %1171 = vmatpush2.bf16.xpose.msra.mxu0 0
      %1172 = vmatprep.subr.bf16.mxu0 0
      %1173 = vmatpush2.bf16.xpose.msra.mxu0 0
      %1174 = vmatprep.subr.bf16.mxu0 0
      %1175 = vmatpush2.bf16.xpose.msra.mxu0 0
      %1176 = vmatprep.mubr.bf16.mxu0 0
      %1177 = vmatmul.mubr.bf16.gmra.mxu0 %v1139
      %v1178 = vpop.f32.mrf.mxu0
      %v1179 = vadd.f32 0.0, %v1178
      %v1180 = vpop.f32.mrf.mxu0
      %v1181 = vpop.f32.mrf.mxu0
      %v1182 = vpop.f32.mrf.mxu0
      %1183 = vdwg.mxu0
      %vm1184 = vcmask 9216
      %v1185 = vsel %vm1184, %v1179, -inf
      %1186 = vmax.xlane.f32.xlu0 %v1185
      %v1187 = vpop.xlane.xlu0 %1186
      %v1188 = vsub.f32 %v1179, %v1187
      %v1189 = vmul.f32 %v1188, 1.442695
      %v1190 = vpow.pop %v1189
      %v1191 = vsel %vm1184, %v1190, 0.0
      %1192 = vadd.xlane.f32.xlu0 %v1191
      %v1193 = vpop.xlane.xlu0 %1192
      %v1194 = vrcp.pop %v1193
      %v1195 = vmul.f32 %v1190, %v1194
      %v1196 = vpack.c.bf16 %v1195, %v1195
      %vm1197 = vcmask 15360
      %v1199 = vsel %vm1197, %v1196, 0
      %vm1201 = vcmask 1040384
      %v1203 = vsel %vm1201, %v1136, 0
      %1205 = vmatprep.subr.bf16.mxu0 0
      %1206 = vmatpush1.bf16.msra.mxu0 0
      %1207 = vmatprep.subr.bf16.mxu0 0
      %1208 = vmatpush1.bf16.msra.mxu0 0
      %1209 = vmatprep.subr.bf16.mxu0 0
      %1210 = vmatpush1.bf16.msra.mxu0 0
      %1211 = vmatprep.subr.bf16.mxu0 0
      %1212 = vmatpush1.bf16.msra.mxu0 0
      %1213 = vmatprep.subr.bf16.mxu0 0
      %1214 = vmatpush1.bf16.msra.mxu0 0
      %1215 = vmatprep.subr.bf16.mxu0 0
      %1216 = vmatpush1.bf16.msra.mxu0 0
      %1217 = vmatprep.subr.bf16.mxu0 0
      %1218 = vmatpush1.bf16.msra.mxu0 0
      %1219 = vmatprep.subr.bf16.mxu0 0
      %1220 = vmatpush1.bf16.msra.mxu0 %v1203
      %1221 = vmatprep.subr.bf16.mxu0 0
      %1222 = vmatpush2.bf16.msra.mxu0 0
      %1223 = vmatprep.subr.bf16.mxu0 0
      %1224 = vmatpush2.bf16.msra.mxu0 0
      %1225 = vmatprep.subr.bf16.mxu0 0
      %1226 = vmatpush2.bf16.msra.mxu0 0
      %1227 = vmatprep.subr.bf16.mxu0 0
      %1228 = vmatpush2.bf16.msra.mxu0 0
      %1229 = vmatprep.subr.bf16.mxu0 0
      %1230 = vmatpush2.bf16.msra.mxu0 0
      %1231 = vmatprep.subr.bf16.mxu0 0
      %1232 = vmatpush2.bf16.msra.mxu0 0
      %1233 = vmatprep.subr.bf16.mxu0 0
      %1234 = vmatpush2.bf16.msra.mxu0 0
      %1235 = vmatprep.subr.bf16.mxu0 0
      %1236 = vmatpush2.bf16.msra.mxu0 0
      %1237 = vmatprep.mubr.bf16.mxu0 0
      %1238 = vmatmul.mubr.bf16.gmra.mxu0 %v1199
      %v1239 = vpop.f32.mrf.mxu0
      %v1240 = vadd.f32 0.0, %v1239
      %v1241 = vpop.f32.mrf.mxu0
      %v1242 = vpop.f32.mrf.mxu0
      %v1243 = vpop.f32.mrf.mxu0
      %1244 = vdwg.mxu0
      %1246 = vrot.lane.b32.xlu0 %v1134, 96
      %v1247 = vpop.permute.xlu0 %1246
      %1249 = vrot.lane.b32.xlu0 %v1135, 96
      %v1250 = vpop.permute.xlu0 %1249
      %v1252 = vsel %vm1137, %v1247, 0
      %v1255 = vsel %vm1137, %v1250, 0
      %1257 = vmatprep.subr.bf16.mxu0 0
      %1258 = vmatpush1.bf16.xpose.msra.mxu0 0
      %1259 = vmatprep.subr.bf16.mxu0 0
      %1260 = vmatpush1.bf16.xpose.msra.mxu0 0
      %1261 = vmatprep.subr.bf16.mxu0 0
      %1262 = vmatpush1.bf16.xpose.msra.mxu0 0
      %1263 = vmatprep.subr.bf16.mxu0 0
      %1264 = vmatpush1.bf16.xpose.msra.mxu0 0
      %1265 = vmatprep.subr.bf16.mxu0 0
      %1266 = vmatpush1.bf16.xpose.msra.mxu0 0
      %1267 = vmatprep.subr.bf16.mxu0 0
      %1268 = vmatpush1.bf16.xpose.msra.mxu0 0
      %1269 = vmatprep.subr.bf16.mxu0 0
      %1270 = vmatpush1.bf16.xpose.msra.mxu0 0
      %1271 = vmatprep.subr.bf16.mxu0 0
      %1272 = vmatpush1.bf16.xpose.msra.mxu0 %v1255
      %1273 = vmatprep.subr.bf16.mxu0 0
      %1274 = vmatpush2.bf16.xpose.msra.mxu0 0
      %1275 = vmatprep.subr.bf16.mxu0 0
      %1276 = vmatpush2.bf16.xpose.msra.mxu0 0
      %1277 = vmatprep.subr.bf16.mxu0 0
      %1278 = vmatpush2.bf16.xpose.msra.mxu0 0
      %1279 = vmatprep.subr.bf16.mxu0 0
      %1280 = vmatpush2.bf16.xpose.msra.mxu0 0
      %1281 = vmatprep.subr.bf16.mxu0 0
      %1282 = vmatpush2.bf16.xpose.msra.mxu0 0
      %1283 = vmatprep.subr.bf16.mxu0 0
      %1284 = vmatpush2.bf16.xpose.msra.mxu0 0
      %1285 = vmatprep.subr.bf16.mxu0 0
      %1286 = vmatpush2.bf16.xpose.msra.mxu0 0
      %1287 = vmatprep.subr.bf16.mxu0 0
      %1288 = vmatpush2.bf16.xpose.msra.mxu0 0
      %1289 = vmatprep.mubr.bf16.mxu0 0
      %1290 = vmatmul.mubr.bf16.gmra.mxu0 %v1252
      %v1291 = vpop.f32.mrf.mxu0
      %v1292 = vadd.f32 0.0, %v1291
      %v1293 = vpop.f32.mrf.mxu0
      %v1294 = vpop.f32.mrf.mxu0
      %v1295 = vpop.f32.mrf.mxu0
      %1296 = vdwg.mxu0
      %v1297 = vsel %vm1184, %v1292, -inf
      %1298 = vmax.xlane.f32.xlu0 %v1297
      %v1299 = vpop.xlane.xlu0 %1298
      %v1300 = vsub.f32 %v1292, %v1299
      %v1301 = vmul.f32 %v1300, 1.442695
      %v1302 = vpow.pop %v1301
      %v1303 = vsel %vm1184, %v1302, 0.0
      %1304 = vadd.xlane.f32.xlu0 %v1303
      %v1305 = vpop.xlane.xlu0 %1304
      %v1306 = vrcp.pop %v1305
      %v1307 = vmul.f32 %v1302, %v1306
      %v1308 = vpack.c.bf16 %v1307, %v1307
      %1310 = vrot.lane.b32.xlu0 %v1136, 96
      %v1311 = vpop.permute.xlu0 %1310
      %v1313 = vsel %vm1197, %v1308, 0
      %v1316 = vsel %vm1201, %v1311, 0
      %1318 = vmatprep.subr.bf16.mxu0 0
      %1319 = vmatpush1.bf16.msra.mxu0 0
      %1320 = vmatprep.subr.bf16.mxu0 0
      %1321 = vmatpush1.bf16.msra.mxu0 0
      %1322 = vmatprep.subr.bf16.mxu0 0
      %1323 = vmatpush1.bf16.msra.mxu0 0
      %1324 = vmatprep.subr.bf16.mxu0 0
      %1325 = vmatpush1.bf16.msra.mxu0 0
      %1326 = vmatprep.subr.bf16.mxu0 0
      %1327 = vmatpush1.bf16.msra.mxu0 0
      %1328 = vmatprep.subr.bf16.mxu0 0
      %1329 = vmatpush1.bf16.msra.mxu0 0
      %1330 = vmatprep.subr.bf16.mxu0 0
      %1331 = vmatpush1.bf16.msra.mxu0 0
      %1332 = vmatprep.subr.bf16.mxu0 0
      %1333 = vmatpush1.bf16.msra.mxu0 %v1316
      %1334 = vmatprep.subr.bf16.mxu0 0
      %1335 = vmatpush2.bf16.msra.mxu0 0
      %1336 = vmatprep.subr.bf16.mxu0 0
      %1337 = vmatpush2.bf16.msra.mxu0 0
      %1338 = vmatprep.subr.bf16.mxu0 0
      %1339 = vmatpush2.bf16.msra.mxu0 0
      %1340 = vmatprep.subr.bf16.mxu0 0
      %1341 = vmatpush2.bf16.msra.mxu0 0
      %1342 = vmatprep.subr.bf16.mxu0 0
      %1343 = vmatpush2.bf16.msra.mxu0 0
      %1344 = vmatprep.subr.bf16.mxu0 0
      %1345 = vmatpush2.bf16.msra.mxu0 0
      %1346 = vmatprep.subr.bf16.mxu0 0
      %1347 = vmatpush2.bf16.msra.mxu0 0
      %1348 = vmatprep.subr.bf16.mxu0 0
      %1349 = vmatpush2.bf16.msra.mxu0 0
      %1350 = vmatprep.mubr.bf16.mxu0 0
      %1351 = vmatmul.mubr.bf16.gmra.mxu0 %v1313
      %v1352 = vpop.f32.mrf.mxu0
      %v1353 = vadd.f32 0.0, %v1352
      %v1354 = vpop.f32.mrf.mxu0
      %v1355 = vpop.f32.mrf.mxu0
      %v1356 = vpop.f32.mrf.mxu0
      %1357 = vdwg.mxu0
      %1358 = vrot.lane.b32.xlu0 %v1134, 64
      %v1359 = vpop.permute.xlu0 %1358
      %1360 = vrot.lane.b32.xlu0 %v1135, 64
      %v1361 = vpop.permute.xlu0 %1360
      %v1363 = vsel %vm1137, %v1359, 0
      %v1366 = vsel %vm1137, %v1361, 0
      %1368 = vmatprep.subr.bf16.mxu0 0
      %1369 = vmatpush1.bf16.xpose.msra.mxu0 0
      %1370 = vmatprep.subr.bf16.mxu0 0
      %1371 = vmatpush1.bf16.xpose.msra.mxu0 0
      %1372 = vmatprep.subr.bf16.mxu0 0
      %1373 = vmatpush1.bf16.xpose.msra.mxu0 0
      %1374 = vmatprep.subr.bf16.mxu0 0
      %1375 = vmatpush1.bf16.xpose.msra.mxu0 0
      %1376 = vmatprep.subr.bf16.mxu0 0
      %1377 = vmatpush1.bf16.xpose.msra.mxu0 0
      %1378 = vmatprep.subr.bf16.mxu0 0
      %1379 = vmatpush1.bf16.xpose.msra.mxu0 0
      %1380 = vmatprep.subr.bf16.mxu0 0
      %1381 = vmatpush1.bf16.xpose.msra.mxu0 0
      %1382 = vmatprep.subr.bf16.mxu0 0
      %1383 = vmatpush1.bf16.xpose.msra.mxu0 %v1366
      %1384 = vmatprep.subr.bf16.mxu0 0
      %1385 = vmatpush2.bf16.xpose.msra.mxu0 0
      %1386 = vmatprep.subr.bf16.mxu0 0
      %1387 = vmatpush2.bf16.xpose.msra.mxu0 0
      %1388 = vmatprep.subr.bf16.mxu0 0
      %1389 = vmatpush2.bf16.xpose.msra.mxu0 0
      %1390 = vmatprep.subr.bf16.mxu0 0
      %1391 = vmatpush2.bf16.xpose.msra.mxu0 0
      %1392 = vmatprep.subr.bf16.mxu0 0
      %1393 = vmatpush2.bf16.xpose.msra.mxu0 0
      %1394 = vmatprep.subr.bf16.mxu0 0
      %1395 = vmatpush2.bf16.xpose.msra.mxu0 0
      %1396 = vmatprep.subr.bf16.mxu0 0
      %1397 = vmatpush2.bf16.xpose.msra.mxu0 0
      %1398 = vmatprep.subr.bf16.mxu0 0
      %1399 = vmatpush2.bf16.xpose.msra.mxu0 0
      %1400 = vmatprep.mubr.bf16.mxu0 0
      %1401 = vmatmul.mubr.bf16.gmra.mxu0 %v1363
      %v1402 = vpop.f32.mrf.mxu0
      %v1403 = vadd.f32 0.0, %v1402
      %v1404 = vpop.f32.mrf.mxu0
      %v1405 = vpop.f32.mrf.mxu0
      %v1406 = vpop.f32.mrf.mxu0
      %1407 = vdwg.mxu0
      %v1408 = vsel %vm1184, %v1403, -inf
      %1409 = vmax.xlane.f32.xlu0 %v1408
      %v1410 = vpop.xlane.xlu0 %1409
      %v1411 = vsub.f32 %v1403, %v1410
      %v1412 = vmul.f32 %v1411, 1.442695
      %v1413 = vpow.pop %v1412
      %v1414 = vsel %vm1184, %v1413, 0.0
      %1415 = vadd.xlane.f32.xlu0 %v1414
      %v1416 = vpop.xlane.xlu0 %1415
      %v1417 = vrcp.pop %v1416
      %v1418 = vmul.f32 %v1413, %v1417
      %v1419 = vpack.c.bf16 %v1418, %v1418
      %1420 = vrot.lane.b32.xlu0 %v1136, 64
      %v1421 = vpop.permute.xlu0 %1420
      %v1423 = vsel %vm1197, %v1419, 0
      %v1426 = vsel %vm1201, %v1421, 0
      %1428 = vmatprep.subr.bf16.mxu0 0
      %1429 = vmatpush1.bf16.msra.mxu0 0
      %1430 = vmatprep.subr.bf16.mxu0 0
      %1431 = vmatpush1.bf16.msra.mxu0 0
      %1432 = vmatprep.subr.bf16.mxu0 0
      %1433 = vmatpush1.bf16.msra.mxu0 0
      %1434 = vmatprep.subr.bf16.mxu0 0
      %1435 = vmatpush1.bf16.msra.mxu0 0
      %1436 = vmatprep.subr.bf16.mxu0 0
      %1437 = vmatpush1.bf16.msra.mxu0 0
      %1438 = vmatprep.subr.bf16.mxu0 0
      %1439 = vmatpush1.bf16.msra.mxu0 0
      %1440 = vmatprep.subr.bf16.mxu0 0
      %1441 = vmatpush1.bf16.msra.mxu0 0
      %1442 = vmatprep.subr.bf16.mxu0 0
      %1443 = vmatpush1.bf16.msra.mxu0 %v1426
      %1444 = vmatprep.subr.bf16.mxu0 0
      %1445 = vmatpush2.bf16.msra.mxu0 0
      %1446 = vmatprep.subr.bf16.mxu0 0
      %1447 = vmatpush2.bf16.msra.mxu0 0
      %1448 = vmatprep.subr.bf16.mxu0 0
      %1449 = vmatpush2.bf16.msra.mxu0 0
      %1450 = vmatprep.subr.bf16.mxu0 0
      %1451 = vmatpush2.bf16.msra.mxu0 0
      %1452 = vmatprep.subr.bf16.mxu0 0
      %1453 = vmatpush2.bf16.msra.mxu0 0
      %1454 = vmatprep.subr.bf16.mxu0 0
      %1455 = vmatpush2.bf16.msra.mxu0 0
      %1456 = vmatprep.subr.bf16.mxu0 0
      %1457 = vmatpush2.bf16.msra.mxu0 0
      %1458 = vmatprep.subr.bf16.mxu0 0
      %1459 = vmatpush2.bf16.msra.mxu0 0
      %1460 = vmatprep.mubr.bf16.mxu0 0
      %1461 = vmatmul.mubr.bf16.gmra.mxu0 %v1423
      %v1462 = vpop.f32.mrf.mxu0
      %v1463 = vadd.f32 0.0, %v1462
      %v1464 = vpop.f32.mrf.mxu0
      %v1465 = vpop.f32.mrf.mxu0
      %v1466 = vpop.f32.mrf.mxu0
      %1467 = vdwg.mxu0
      %1468 = vrot.lane.b32.xlu0 %v1134, 32
      %v1469 = vpop.permute.xlu0 %1468
      %1470 = vrot.lane.b32.xlu0 %v1135, 32
      %v1471 = vpop.permute.xlu0 %1470
      %v1473 = vsel %vm1137, %v1469, 0
      %v1476 = vsel %vm1137, %v1471, 0
      %1478 = vmatprep.subr.bf16.mxu0 0
      %1479 = vmatpush1.bf16.xpose.msra.mxu0 0
      %1480 = vmatprep.subr.bf16.mxu0 0
      %1481 = vmatpush1.bf16.xpose.msra.mxu0 0
      %1482 = vmatprep.subr.bf16.mxu0 0
      %1483 = vmatpush1.bf16.xpose.msra.mxu0 0
      %1484 = vmatprep.subr.bf16.mxu0 0
      %1485 = vmatpush1.bf16.xpose.msra.mxu0 0
      %1486 = vmatprep.subr.bf16.mxu0 0
      %1487 = vmatpush1.bf16.xpose.msra.mxu0 0
      %1488 = vmatprep.subr.bf16.mxu0 0
      %1489 = vmatpush1.bf16.xpose.msra.mxu0 0
      %1490 = vmatprep.subr.bf16.mxu0 0
      %1491 = vmatpush1.bf16.xpose.msra.mxu0 0
      %1492 = vmatprep.subr.bf16.mxu0 0
      %1493 = vmatpush1.bf16.xpose.msra.mxu0 %v1476
      %1494 = vmatprep.subr.bf16.mxu0 0
      %1495 = vmatpush2.bf16.xpose.msra.mxu0 0
      %1496 = vmatprep.subr.bf16.mxu0 0
      %1497 = vmatpush2.bf16.xpose.msra.mxu0 0
      %1498 = vmatprep.subr.bf16.mxu0 0
      %1499 = vmatpush2.bf16.xpose.msra.mxu0 0
      %1500 = vmatprep.subr.bf16.mxu0 0
      %1501 = vmatpush2.bf16.xpose.msra.mxu0 0
      %1502 = vmatprep.subr.bf16.mxu0 0
      %1503 = vmatpush2.bf16.xpose.msra.mxu0 0
      %1504 = vmatprep.subr.bf16.mxu0 0
      %1505 = vmatpush2.bf16.xpose.msra.mxu0 0
      %1506 = vmatprep.subr.bf16.mxu0 0
      %1507 = vmatpush2.bf16.xpose.msra.mxu0 0
      %1508 = vmatprep.subr.bf16.mxu0 0
      %1509 = vmatpush2.bf16.xpose.msra.mxu0 0
      %1510 = vmatprep.mubr.bf16.mxu0 0
      %1511 = vmatmul.mubr.bf16.gmra.mxu0 %v1473
      %v1512 = vpop.f32.mrf.mxu0
      %v1513 = vadd.f32 0.0, %v1512
      %v1514 = vpop.f32.mrf.mxu0
      %v1515 = vpop.f32.mrf.mxu0
      %v1516 = vpop.f32.mrf.mxu0
      %1517 = vdwg.mxu0
      %v1518 = vsel %vm1184, %v1513, -inf
      %1519 = vmax.xlane.f32.xlu0 %v1518
      %v1520 = vpop.xlane.xlu0 %1519
      %v1521 = vsub.f32 %v1513, %v1520
      %v1522 = vmul.f32 %v1521, 1.442695
      %v1523 = vpow.pop %v1522
      %v1524 = vsel %vm1184, %v1523, 0.0
      %1525 = vadd.xlane.f32.xlu0 %v1524
      %v1526 = vpop.xlane.xlu0 %1525
      %v1527 = vrcp.pop %v1526
      %v1528 = vmul.f32 %v1523, %v1527
      %v1529 = vpack.c.bf16 %v1528, %v1528
      %1530 = vrot.lane.b32.xlu0 %v1136, 32
      %v1531 = vpop.permute.xlu0 %1530
      %v1533 = vsel %vm1197, %v1529, 0
      %v1536 = vsel %vm1201, %v1531, 0
      %1538 = vmatprep.subr.bf16.mxu0 0
      %1539 = vmatpush1.bf16.msra.mxu0 0
      %1540 = vmatprep.subr.bf16.mxu0 0
      %1541 = vmatpush1.bf16.msra.mxu0 0
      %1542 = vmatprep.subr.bf16.mxu0 0
      %1543 = vmatpush1.bf16.msra.mxu0 0
      %1544 = vmatprep.subr.bf16.mxu0 0
      %1545 = vmatpush1.bf16.msra.mxu0 0
      %1546 = vmatprep.subr.bf16.mxu0 0
      %1547 = vmatpush1.bf16.msra.mxu0 0
      %1548 = vmatprep.subr.bf16.mxu0 0
      %1549 = vmatpush1.bf16.msra.mxu0 0
      %1550 = vmatprep.subr.bf16.mxu0 0
      %1551 = vmatpush1.bf16.msra.mxu0 0
      %1552 = vmatprep.subr.bf16.mxu0 0
      %1553 = vmatpush1.bf16.msra.mxu0 %v1536
      %1554 = vmatprep.subr.bf16.mxu0 0
      %1555 = vmatpush2.bf16.msra.mxu0 0
      %1556 = vmatprep.subr.bf16.mxu0 0
      %1557 = vmatpush2.bf16.msra.mxu0 0
      %1558 = vmatprep.subr.bf16.mxu0 0
      %1559 = vmatpush2.bf16.msra.mxu0 0
      %1560 = vmatprep.subr.bf16.mxu0 0
      %1561 = vmatpush2.bf16.msra.mxu0 0
      %1562 = vmatprep.subr.bf16.mxu0 0
      %1563 = vmatpush2.bf16.msra.mxu0 0
      %1564 = vmatprep.subr.bf16.mxu0 0
      %1565 = vmatpush2.bf16.msra.mxu0 0
      %1566 = vmatprep.subr.bf16.mxu0 0
      %1567 = vmatpush2.bf16.msra.mxu0 0
      %1568 = vmatprep.subr.bf16.mxu0 0
      %1569 = vmatpush2.bf16.msra.mxu0 0
      %1570 = vmatprep.mubr.bf16.mxu0 0
      %1571 = vmatmul.mubr.bf16.gmra.mxu0 %v1533
      %v1572 = vpop.f32.mrf.mxu0
      %v1573 = vadd.f32 0.0, %v1572
      %v1574 = vpop.f32.mrf.mxu0
      %v1575 = vpop.f32.mrf.mxu0
      %v1576 = vpop.f32.mrf.mxu0
      %1577 = vdwg.mxu0
      %v1578 = vpack.c.bf16 %v1048, %v1048
      %v1579 = vpack.c.bf16 %v1089, %v1089
      %v1580 = vpack.c.bf16 %v1130, %v1130
      %v1582 = vsel %vm1137, %v1578, 0
      %v1585 = vsel %vm1137, %v1579, 0
      %1587 = vmatprep.subr.bf16.mxu0 0
      %1588 = vmatpush1.bf16.xpose.msra.mxu0 0
      %1589 = vmatprep.subr.bf16.mxu0 0
      %1590 = vmatpush1.bf16.xpose.msra.mxu0 0
      %1591 = vmatprep.subr.bf16.mxu0 0
      %1592 = vmatpush1.bf16.xpose.msra.mxu0 0
      %1593 = vmatprep.subr.bf16.mxu0 0
      %1594 = vmatpush1.bf16.xpose.msra.mxu0 0
      %1595 = vmatprep.subr.bf16.mxu0 0
      %1596 = vmatpush1.bf16.xpose.msra.mxu0 0
      %1597 = vmatprep.subr.bf16.mxu0 0
      %1598 = vmatpush1.bf16.xpose.msra.mxu0 0
      %1599 = vmatprep.subr.bf16.mxu0 0
      %1600 = vmatpush1.bf16.xpose.msra.mxu0 0
      %1601 = vmatprep.subr.bf16.mxu0 0
      %1602 = vmatpush1.bf16.xpose.msra.mxu0 %v1585
      %1603 = vmatprep.subr.bf16.mxu0 0
      %1604 = vmatpush2.bf16.xpose.msra.mxu0 0
      %1605 = vmatprep.subr.bf16.mxu0 0
      %1606 = vmatpush2.bf16.xpose.msra.mxu0 0
      %1607 = vmatprep.subr.bf16.mxu0 0
      %1608 = vmatpush2.bf16.xpose.msra.mxu0 0
      %1609 = vmatprep.subr.bf16.mxu0 0
      %1610 = vmatpush2.bf16.xpose.msra.mxu0 0
      %1611 = vmatprep.subr.bf16.mxu0 0
      %1612 = vmatpush2.bf16.xpose.msra.mxu0 0
      %1613 = vmatprep.subr.bf16.mxu0 0
      %1614 = vmatpush2.bf16.xpose.msra.mxu0 0
      %1615 = vmatprep.subr.bf16.mxu0 0
      %1616 = vmatpush2.bf16.xpose.msra.mxu0 0
      %1617 = vmatprep.subr.bf16.mxu0 0
      %1618 = vmatpush2.bf16.xpose.msra.mxu0 0
      %1619 = vmatprep.mubr.bf16.mxu0 0
      %1620 = vmatmul.mubr.bf16.gmra.mxu0 %v1582
      %v1621 = vpop.f32.mrf.mxu0
      %v1622 = vadd.f32 0.0, %v1621
      %v1623 = vpop.f32.mrf.mxu0
      %v1624 = vpop.f32.mrf.mxu0
      %v1625 = vpop.f32.mrf.mxu0
      %1626 = vdwg.mxu0
      %v1627 = vsel %vm1184, %v1622, -inf
      %1628 = vmax.xlane.f32.xlu0 %v1627
      %v1629 = vpop.xlane.xlu0 %1628
      %v1630 = vsub.f32 %v1622, %v1629
      %v1631 = vmul.f32 %v1630, 1.442695
      %v1632 = vpow.pop %v1631
      %v1633 = vsel %vm1184, %v1632, 0.0
      %1634 = vadd.xlane.f32.xlu0 %v1633
      %v1635 = vpop.xlane.xlu0 %1634
      %v1636 = vrcp.pop %v1635
      %v1637 = vmul.f32 %v1632, %v1636
      %v1638 = vpack.c.bf16 %v1637, %v1637
      %v1640 = vsel %vm1197, %v1638, 0
      %v1643 = vsel %vm1201, %v1580, 0
      %1645 = vmatprep.subr.bf16.mxu0 0
      %1646 = vmatpush1.bf16.msra.mxu0 0
      %1647 = vmatprep.subr.bf16.mxu0 0
      %1648 = vmatpush1.bf16.msra.mxu0 0
      %1649 = vmatprep.subr.bf16.mxu0 0
      %1650 = vmatpush1.bf16.msra.mxu0 0
      %1651 = vmatprep.subr.bf16.mxu0 0
      %1652 = vmatpush1.bf16.msra.mxu0 0
      %1653 = vmatprep.subr.bf16.mxu0 0
      %1654 = vmatpush1.bf16.msra.mxu0 0
      %1655 = vmatprep.subr.bf16.mxu0 0
      %1656 = vmatpush1.bf16.msra.mxu0 0
      %1657 = vmatprep.subr.bf16.mxu0 0
      %1658 = vmatpush1.bf16.msra.mxu0 0
      %1659 = vmatprep.subr.bf16.mxu0 0
      %1660 = vmatpush1.bf16.msra.mxu0 %v1643
      %1661 = vmatprep.subr.bf16.mxu0 0
      %1662 = vmatpush2.bf16.msra.mxu0 0
      %1663 = vmatprep.subr.bf16.mxu0 0
      %1664 = vmatpush2.bf16.msra.mxu0 0
      %1665 = vmatprep.subr.bf16.mxu0 0
      %1666 = vmatpush2.bf16.msra.mxu0 0
      %1667 = vmatprep.subr.bf16.mxu0 0
      %1668 = vmatpush2.bf16.msra.mxu0 0
      %1669 = vmatprep.subr.bf16.mxu0 0
      %1670 = vmatpush2.bf16.msra.mxu0 0
      %1671 = vmatprep.subr.bf16.mxu0 0
      %1672 = vmatpush2.bf16.msra.mxu0 0
      %1673 = vmatprep.subr.bf16.mxu0 0
      %1674 = vmatpush2.bf16.msra.mxu0 0
      %1675 = vmatprep.subr.bf16.mxu0 0
      %1676 = vmatpush2.bf16.msra.mxu0 0
      %1677 = vmatprep.mubr.bf16.mxu0 0
      %1678 = vmatmul.mubr.bf16.gmra.mxu0 %v1640
      %v1679 = vpop.f32.mrf.mxu0
      %v1680 = vadd.f32 0.0, %v1679
      %v1681 = vpop.f32.mrf.mxu0
      %v1682 = vpop.f32.mrf.mxu0
      %v1683 = vpop.f32.mrf.mxu0
      %1684 = vdwg.mxu0
      %1686 = vrot.lane.b32.xlu0 %v1578, 96
      %v1687 = vpop.permute.xlu0 %1686
      %1689 = vrot.lane.b32.xlu0 %v1579, 96
      %v1690 = vpop.permute.xlu0 %1689
      %v1692 = vsel %vm1137, %v1687, 0
      %v1695 = vsel %vm1137, %v1690, 0
      %1697 = vmatprep.subr.bf16.mxu0 0
      %1698 = vmatpush1.bf16.xpose.msra.mxu0 0
      %1699 = vmatprep.subr.bf16.mxu0 0
      %1700 = vmatpush1.bf16.xpose.msra.mxu0 0
      %1701 = vmatprep.subr.bf16.mxu0 0
      %1702 = vmatpush1.bf16.xpose.msra.mxu0 0
      %1703 = vmatprep.subr.bf16.mxu0 0
      %1704 = vmatpush1.bf16.xpose.msra.mxu0 0
      %1705 = vmatprep.subr.bf16.mxu0 0
      %1706 = vmatpush1.bf16.xpose.msra.mxu0 0
      %1707 = vmatprep.subr.bf16.mxu0 0
      %1708 = vmatpush1.bf16.xpose.msra.mxu0 0
      %1709 = vmatprep.subr.bf16.mxu0 0
      %1710 = vmatpush1.bf16.xpose.msra.mxu0 0
      %1711 = vmatprep.subr.bf16.mxu0 0
      %1712 = vmatpush1.bf16.xpose.msra.mxu0 %v1695
      %1713 = vmatprep.subr.bf16.mxu0 0
      %1714 = vmatpush2.bf16.xpose.msra.mxu0 0
      %1715 = vmatprep.subr.bf16.mxu0 0
      %1716 = vmatpush2.bf16.xpose.msra.mxu0 0
      %1717 = vmatprep.subr.bf16.mxu0 0
      %1718 = vmatpush2.bf16.xpose.msra.mxu0 0
      %1719 = vmatprep.subr.bf16.mxu0 0
      %1720 = vmatpush2.bf16.xpose.msra.mxu0 0
      %1721 = vmatprep.subr.bf16.mxu0 0
      %1722 = vmatpush2.bf16.xpose.msra.mxu0 0
      %1723 = vmatprep.subr.bf16.mxu0 0
      %1724 = vmatpush2.bf16.xpose.msra.mxu0 0
      %1725 = vmatprep.subr.bf16.mxu0 0
      %1726 = vmatpush2.bf16.xpose.msra.mxu0 0
      %1727 = vmatprep.subr.bf16.mxu0 0
      %1728 = vmatpush2.bf16.xpose.msra.mxu0 0
      %1729 = vmatprep.mubr.bf16.mxu0 0
      %1730 = vmatmul.mubr.bf16.gmra.mxu0 %v1692
      %v1731 = vpop.f32.mrf.mxu0
      %v1732 = vadd.f32 0.0, %v1731
      %v1733 = vpop.f32.mrf.mxu0
      %v1734 = vpop.f32.mrf.mxu0
      %v1735 = vpop.f32.mrf.mxu0
      %1736 = vdwg.mxu0
      %v1737 = vsel %vm1184, %v1732, -inf
      %1738 = vmax.xlane.f32.xlu0 %v1737
      %v1739 = vpop.xlane.xlu0 %1738
      %v1740 = vsub.f32 %v1732, %v1739
      %v1741 = vmul.f32 %v1740, 1.442695
      %v1742 = vpow.pop %v1741
      %v1743 = vsel %vm1184, %v1742, 0.0
      %1744 = vadd.xlane.f32.xlu0 %v1743
      %v1745 = vpop.xlane.xlu0 %1744
      %v1746 = vrcp.pop %v1745
      %v1747 = vmul.f32 %v1742, %v1746
      %v1748 = vpack.c.bf16 %v1747, %v1747
      %1750 = vrot.lane.b32.xlu0 %v1580, 96
      %v1751 = vpop.permute.xlu0 %1750
      %v1753 = vsel %vm1197, %v1748, 0
      %v1756 = vsel %vm1201, %v1751, 0
      %1758 = vmatprep.subr.bf16.mxu0 0
      %1759 = vmatpush1.bf16.msra.mxu0 0
      %1760 = vmatprep.subr.bf16.mxu0 0
      %1761 = vmatpush1.bf16.msra.mxu0 0
      %1762 = vmatprep.subr.bf16.mxu0 0
      %1763 = vmatpush1.bf16.msra.mxu0 0
      %1764 = vmatprep.subr.bf16.mxu0 0
      %1765 = vmatpush1.bf16.msra.mxu0 0
      %1766 = vmatprep.subr.bf16.mxu0 0
      %1767 = vmatpush1.bf16.msra.mxu0 0
      %1768 = vmatprep.subr.bf16.mxu0 0
      %1769 = vmatpush1.bf16.msra.mxu0 0
      %1770 = vmatprep.subr.bf16.mxu0 0
      %1771 = vmatpush1.bf16.msra.mxu0 0
      %1772 = vmatprep.subr.bf16.mxu0 0
      %1773 = vmatpush1.bf16.msra.mxu0 %v1756
      %1774 = vmatprep.subr.bf16.mxu0 0
      %1775 = vmatpush2.bf16.msra.mxu0 0
      %1776 = vmatprep.subr.bf16.mxu0 0
      %1777 = vmatpush2.bf16.msra.mxu0 0
      %1778 = vmatprep.subr.bf16.mxu0 0
      %1779 = vmatpush2.bf16.msra.mxu0 0
      %1780 = vmatprep.subr.bf16.mxu0 0
      %1781 = vmatpush2.bf16.msra.mxu0 0
      %1782 = vmatprep.subr.bf16.mxu0 0
      %1783 = vmatpush2.bf16.msra.mxu0 0
      %1784 = vmatprep.subr.bf16.mxu0 0
      %1785 = vmatpush2.bf16.msra.mxu0 0
      %1786 = vmatprep.subr.bf16.mxu0 0
      %1787 = vmatpush2.bf16.msra.mxu0 0
      %1788 = vmatprep.subr.bf16.mxu0 0
      %1789 = vmatpush2.bf16.msra.mxu0 0
      %1790 = vmatprep.mubr.bf16.mxu0 0
      %1791 = vmatmul.mubr.bf16.gmra.mxu0 %v1753
      %v1792 = vpop.f32.mrf.mxu0
      %v1793 = vadd.f32 0.0, %v1792
      %v1794 = vpop.f32.mrf.mxu0
      %v1795 = vpop.f32.mrf.mxu0
      %v1796 = vpop.f32.mrf.mxu0
      %1797 = vdwg.mxu0
      %1798 = vrot.lane.b32.xlu0 %v1578, 64
      %v1799 = vpop.permute.xlu0 %1798
      %1800 = vrot.lane.b32.xlu0 %v1579, 64
      %v1801 = vpop.permute.xlu0 %1800
      %v1803 = vsel %vm1137, %v1799, 0
      %v1806 = vsel %vm1137, %v1801, 0
      %1808 = vmatprep.subr.bf16.mxu0 0
      %1809 = vmatpush1.bf16.xpose.msra.mxu0 0
      %1810 = vmatprep.subr.bf16.mxu0 0
      %1811 = vmatpush1.bf16.xpose.msra.mxu0 0
      %1812 = vmatprep.subr.bf16.mxu0 0
      %1813 = vmatpush1.bf16.xpose.msra.mxu0 0
      %1814 = vmatprep.subr.bf16.mxu0 0
      %1815 = vmatpush1.bf16.xpose.msra.mxu0 0
      %1816 = vmatprep.subr.bf16.mxu0 0
      %1817 = vmatpush1.bf16.xpose.msra.mxu0 0
      %1818 = vmatprep.subr.bf16.mxu0 0
      %1819 = vmatpush1.bf16.xpose.msra.mxu0 0
      %1820 = vmatprep.subr.bf16.mxu0 0
      %1821 = vmatpush1.bf16.xpose.msra.mxu0 0
      %1822 = vmatprep.subr.bf16.mxu0 0
      %1823 = vmatpush1.bf16.xpose.msra.mxu0 %v1806
      %1824 = vmatprep.subr.bf16.mxu0 0
      %1825 = vmatpush2.bf16.xpose.msra.mxu0 0
      %1826 = vmatprep.subr.bf16.mxu0 0
      %1827 = vmatpush2.bf16.xpose.msra.mxu0 0
      %1828 = vmatprep.subr.bf16.mxu0 0
      %1829 = vmatpush2.bf16.xpose.msra.mxu0 0
      %1830 = vmatprep.subr.bf16.mxu0 0
      %1831 = vmatpush2.bf16.xpose.msra.mxu0 0
      %1832 = vmatprep.subr.bf16.mxu0 0
      %1833 = vmatpush2.bf16.xpose.msra.mxu0 0
      %1834 = vmatprep.subr.bf16.mxu0 0
      %1835 = vmatpush2.bf16.xpose.msra.mxu0 0
      %1836 = vmatprep.subr.bf16.mxu0 0
      %1837 = vmatpush2.bf16.xpose.msra.mxu0 0
      %1838 = vmatprep.subr.bf16.mxu0 0
      %1839 = vmatpush2.bf16.xpose.msra.mxu0 0
      %1840 = vmatprep.mubr.bf16.mxu0 0
      %1841 = vmatmul.mubr.bf16.gmra.mxu0 %v1803
      %v1842 = vpop.f32.mrf.mxu0
      %v1843 = vadd.f32 0.0, %v1842
      %v1844 = vpop.f32.mrf.mxu0
      %v1845 = vpop.f32.mrf.mxu0
      %v1846 = vpop.f32.mrf.mxu0
      %1847 = vdwg.mxu0
      %v1848 = vsel %vm1184, %v1843, -inf
      %1849 = vmax.xlane.f32.xlu0 %v1848
      %v1850 = vpop.xlane.xlu0 %1849
      %v1851 = vsub.f32 %v1843, %v1850
      %v1852 = vmul.f32 %v1851, 1.442695
      %v1853 = vpow.pop %v1852
      %v1854 = vsel %vm1184, %v1853, 0.0
      %1855 = vadd.xlane.f32.xlu0 %v1854
      %v1856 = vpop.xlane.xlu0 %1855
      %v1857 = vrcp.pop %v1856
      %v1858 = vmul.f32 %v1853, %v1857
      %v1859 = vpack.c.bf16 %v1858, %v1858
      %1860 = vrot.lane.b32.xlu0 %v1580, 64
      %v1861 = vpop.permute.xlu0 %1860
      %v1863 = vsel %vm1197, %v1859, 0
      %v1866 = vsel %vm1201, %v1861, 0
      %1868 = vmatprep.subr.bf16.mxu0 0
      %1869 = vmatpush1.bf16.msra.mxu0 0
      %1870 = vmatprep.subr.bf16.mxu0 0
      %1871 = vmatpush1.bf16.msra.mxu0 0
      %1872 = vmatprep.subr.bf16.mxu0 0
      %1873 = vmatpush1.bf16.msra.mxu0 0
      %1874 = vmatprep.subr.bf16.mxu0 0
      %1875 = vmatpush1.bf16.msra.mxu0 0
      %1876 = vmatprep.subr.bf16.mxu0 0
      %1877 = vmatpush1.bf16.msra.mxu0 0
      %1878 = vmatprep.subr.bf16.mxu0 0
      %1879 = vmatpush1.bf16.msra.mxu0 0
      %1880 = vmatprep.subr.bf16.mxu0 0
      %1881 = vmatpush1.bf16.msra.mxu0 0
      %1882 = vmatprep.subr.bf16.mxu0 0
      %1883 = vmatpush1.bf16.msra.mxu0 %v1866
      %1884 = vmatprep.subr.bf16.mxu0 0
      %1885 = vmatpush2.bf16.msra.mxu0 0
      %1886 = vmatprep.subr.bf16.mxu0 0
      %1887 = vmatpush2.bf16.msra.mxu0 0
      %1888 = vmatprep.subr.bf16.mxu0 0
      %1889 = vmatpush2.bf16.msra.mxu0 0
      %1890 = vmatprep.subr.bf16.mxu0 0
      %1891 = vmatpush2.bf16.msra.mxu0 0
      %1892 = vmatprep.subr.bf16.mxu0 0
      %1893 = vmatpush2.bf16.msra.mxu0 0
      %1894 = vmatprep.subr.bf16.mxu0 0
      %1895 = vmatpush2.bf16.msra.mxu0 0
      %1896 = vmatprep.subr.bf16.mxu0 0
      %1897 = vmatpush2.bf16.msra.mxu0 0
      %1898 = vmatprep.subr.bf16.mxu0 0
      %1899 = vmatpush2.bf16.msra.mxu0 0
      %1900 = vmatprep.mubr.bf16.mxu0 0
      %1901 = vmatmul.mubr.bf16.gmra.mxu0 %v1863
      %v1902 = vpop.f32.mrf.mxu0
      %v1903 = vadd.f32 0.0, %v1902
      %v1904 = vpop.f32.mrf.mxu0
      %v1905 = vpop.f32.mrf.mxu0
      %v1906 = vpop.f32.mrf.mxu0
      %1907 = vdwg.mxu0
      %1908 = vrot.lane.b32.xlu0 %v1578, 32
      %v1909 = vpop.permute.xlu0 %1908
      %1910 = vrot.lane.b32.xlu0 %v1579, 32
      %v1911 = vpop.permute.xlu0 %1910
      %v1913 = vsel %vm1137, %v1909, 0
      %v1916 = vsel %vm1137, %v1911, 0
      %1918 = vmatprep.subr.bf16.mxu0 0
      %1919 = vmatpush1.bf16.xpose.msra.mxu0 0
      %1920 = vmatprep.subr.bf16.mxu0 0
      %1921 = vmatpush1.bf16.xpose.msra.mxu0 0
      %1922 = vmatprep.subr.bf16.mxu0 0
      %1923 = vmatpush1.bf16.xpose.msra.mxu0 0
      %1924 = vmatprep.subr.bf16.mxu0 0
      %1925 = vmatpush1.bf16.xpose.msra.mxu0 0
      %1926 = vmatprep.subr.bf16.mxu0 0
      %1927 = vmatpush1.bf16.xpose.msra.mxu0 0
      %1928 = vmatprep.subr.bf16.mxu0 0
      %1929 = vmatpush1.bf16.xpose.msra.mxu0 0
      %1930 = vmatprep.subr.bf16.mxu0 0
      %1931 = vmatpush1.bf16.xpose.msra.mxu0 0
      %1932 = vmatprep.subr.bf16.mxu0 0
      %1933 = vmatpush1.bf16.xpose.msra.mxu0 %v1916
      %1934 = vmatprep.subr.bf16.mxu0 0
      %1935 = vmatpush2.bf16.xpose.msra.mxu0 0
      %1936 = vmatprep.subr.bf16.mxu0 0
      %1937 = vmatpush2.bf16.xpose.msra.mxu0 0
      %1938 = vmatprep.subr.bf16.mxu0 0
      %1939 = vmatpush2.bf16.xpose.msra.mxu0 0
      %1940 = vmatprep.subr.bf16.mxu0 0
      %1941 = vmatpush2.bf16.xpose.msra.mxu0 0
      %1942 = vmatprep.subr.bf16.mxu0 0
      %1943 = vmatpush2.bf16.xpose.msra.mxu0 0
      %1944 = vmatprep.subr.bf16.mxu0 0
      %1945 = vmatpush2.bf16.xpose.msra.mxu0 0
      %1946 = vmatprep.subr.bf16.mxu0 0
      %1947 = vmatpush2.bf16.xpose.msra.mxu0 0
      %1948 = vmatprep.subr.bf16.mxu0 0
      %1949 = vmatpush2.bf16.xpose.msra.mxu0 0
      %1950 = vmatprep.mubr.bf16.mxu0 0
      %1951 = vmatmul.mubr.bf16.gmra.mxu0 %v1913
      %v1952 = vpop.f32.mrf.mxu0
      %v1953 = vadd.f32 0.0, %v1952
      %v1954 = vpop.f32.mrf.mxu0
      %v1955 = vpop.f32.mrf.mxu0
      %v1956 = vpop.f32.mrf.mxu0
      %1957 = vdwg.mxu0
      %v1958 = vsel %vm1184, %v1953, -inf
      %1959 = vmax.xlane.f32.xlu0 %v1958
      %v1960 = vpop.xlane.xlu0 %1959
      %v1961 = vsub.f32 %v1953, %v1960
      %v1962 = vmul.f32 %v1961, 1.442695
      %v1963 = vpow.pop %v1962
      %v1964 = vsel %vm1184, %v1963, 0.0
      %1965 = vadd.xlane.f32.xlu0 %v1964
      %v1966 = vpop.xlane.xlu0 %1965
      %v1967 = vrcp.pop %v1966
      %v1968 = vmul.f32 %v1963, %v1967
      %v1969 = vpack.c.bf16 %v1968, %v1968
      %1970 = vrot.lane.b32.xlu0 %v1580, 32
      %v1971 = vpop.permute.xlu0 %1970
      %v1973 = vsel %vm1197, %v1969, 0
      %v1976 = vsel %vm1201, %v1971, 0
      %1978 = vmatprep.subr.bf16.mxu0 0
      %1979 = vmatpush1.bf16.msra.mxu0 0
      %1980 = vmatprep.subr.bf16.mxu0 0
      %1981 = vmatpush1.bf16.msra.mxu0 0
      %1982 = vmatprep.subr.bf16.mxu0 0
      %1983 = vmatpush1.bf16.msra.mxu0 0
      %1984 = vmatprep.subr.bf16.mxu0 0
      %1985 = vmatpush1.bf16.msra.mxu0 0
      %1986 = vmatprep.subr.bf16.mxu0 0
      %1987 = vmatpush1.bf16.msra.mxu0 0
      %1988 = vmatprep.subr.bf16.mxu0 0
      %1989 = vmatpush1.bf16.msra.mxu0 0
      %1990 = vmatprep.subr.bf16.mxu0 0
      %1991 = vmatpush1.bf16.msra.mxu0 0
      %1992 = vmatprep.subr.bf16.mxu0 0
      %1993 = vmatpush1.bf16.msra.mxu0 %v1976
      %1994 = vmatprep.subr.bf16.mxu0 0
      %1995 = vmatpush2.bf16.msra.mxu0 0
      %1996 = vmatprep.subr.bf16.mxu0 0
      %1997 = vmatpush2.bf16.msra.mxu0 0
      %1998 = vmatprep.subr.bf16.mxu0 0
      %1999 = vmatpush2.bf16.msra.mxu0 0
      %2000 = vmatprep.subr.bf16.mxu0 0
      %2001 = vmatpush2.bf16.msra.mxu0 0
      %2002 = vmatprep.subr.bf16.mxu0 0
      %2003 = vmatpush2.bf16.msra.mxu0 0
      %2004 = vmatprep.subr.bf16.mxu0 0
      %2005 = vmatpush2.bf16.msra.mxu0 0
      %2006 = vmatprep.subr.bf16.mxu0 0
      %2007 = vmatpush2.bf16.msra.mxu0 0
      %2008 = vmatprep.subr.bf16.mxu0 0
      %2009 = vmatpush2.bf16.msra.mxu0 0
      %2010 = vmatprep.mubr.bf16.mxu0 0
      %2011 = vmatmul.mubr.bf16.gmra.mxu0 %v1973
      %v2012 = vpop.f32.mrf.mxu0
      %v2013 = vadd.f32 0.0, %v2012
      %v2014 = vpop.f32.mrf.mxu0
      %v2015 = vpop.f32.mrf.mxu0
      %v2016 = vpop.f32.mrf.mxu0
      %2017 = vdwg.mxu0
      %2019 = vrot.lane.b32.xlu0 %v1353, 32
      %v2020 = vpop.permute.xlu0 %2019
      %2023 = vrot.lane.b32.xlu0 %v1463, 64
      %v2024 = vpop.permute.xlu0 %2023
      %2027 = vrot.lane.b32.xlu0 %v1573, 96
      %v2028 = vpop.permute.xlu0 %2027
      %2031 = vrot.lane.b32.xlu0 %v1793, 32
      %v2032 = vpop.permute.xlu0 %2031
      %2035 = vrot.lane.b32.xlu0 %v1903, 64
      %v2036 = vpop.permute.xlu0 %2035
      %2039 = vrot.lane.b32.xlu0 %v2013, 96
      %v2040 = vpop.permute.xlu0 %2039
      %v2042 = vsel %vm1137, %v1240, %v2020
      %vm2043 = vcmask 523264
      %v2044 = vsel %vm2043, %v2042, %v2024
      %vm2045 = vcmask 785408
      %v2046 = vsel %vm2045, %v2044, %v2028
      %v2047 = vsel %vm1137, %v1680, %v2032
      %v2048 = vsel %vm2043, %v2047, %v2036
      %v2049 = vsel %vm2045, %v2048, %v2040
      %v2050 = vpack.c.bf16 %v2046, %v2046
      %v2051 = vpack.c.bf16 %v2049, %v2049
      %v2052 = vld [vmem:[%s3] sm:$0xff]
      %v2053 = vld [vmem:[%s3 + $0x8] sm:$0xff]
      %v2054 = vld [vmem:[%s3 + $0x10] sm:$0xff]
      %v2055 = vld [vmem:[%s3 + $0x18] sm:$0xff]
      %v2056 = vld [vmem:[%s3 + $0x20] sm:$0xff]
      %v2057 = vld [vmem:[%s3 + $0x28] sm:$0xff]
      %v2058 = vld [vmem:[%s3 + $0x30] sm:$0xff]
      %v2059 = vld [vmem:[%s3 + $0x38] sm:$0xff]
      %v2060 = vld [vmem:[%s3 + $0x40] sm:$0xff]
      %v2061 = vld [vmem:[%s3 + $0x48] sm:$0xff]
      %v2062 = vld [vmem:[%s3 + $0x50] sm:$0xff]
      %v2063 = vld [vmem:[%s3 + $0x58] sm:$0xff]
      %v2064 = vld [vmem:[%s3 + $0x60] sm:$0xff]
      %v2065 = vld [vmem:[%s3 + $0x68] sm:$0xff]
      %v2066 = vld [vmem:[%s3 + $0x70] sm:$0xff]
      %v2067 = vld [vmem:[%s3 + $0x78] sm:$0xff]
      %v2068 = vld [vmem:[%s3 + $0x80] sm:$0xff]
      %v2069 = vld [vmem:[%s3 + $0x88] sm:$0xff]
      %v2070 = vld [vmem:[%s3 + $0x90] sm:$0xff]
      %v2071 = vld [vmem:[%s3 + $0x98] sm:$0xff]
      %v2072 = vld [vmem:[%s3 + $0xa0] sm:$0xff]
      %v2073 = vld [vmem:[%s3 + $0xa8] sm:$0xff]
      %v2074 = vld [vmem:[%s3 + $0xb0] sm:$0xff]
      %v2075 = vld [vmem:[%s3 + $0xb8] sm:$0xff]
      %v2076 = vld [vmem:[%s3 + $0xc0] sm:$0xff]
      %v2077 = vld [vmem:[%s3 + $0xc8] sm:$0xff]
      %v2078 = vld [vmem:[%s3 + $0xd0] sm:$0xff]
      %v2079 = vld [vmem:[%s3 + $0xd8] sm:$0xff]
      %v2080 = vld [vmem:[%s3 + $0xe0] sm:$0xff]
      %v2081 = vld [vmem:[%s3 + $0xe8] sm:$0xff]
      %v2082 = vld [vmem:[%s3 + $0xf0] sm:$0xff]
      %v2083 = vld [vmem:[%s3 + $0xf8] sm:$0xff]
      %v2084 = vld [vmem:[%s4] sm:$0x3]
      %v2086 = vlaneseq
      %v2087 = vshrl.u32 %v2086, 7
      %v2088 = vsub.s32 0, %v2087
      %v2089 = vrot.slane %v2084, %v2088
      %v2090 = vlaneseq
      %v2091 = vshrl.u32 %v2090, 7
      %v2092 = vsub.s32 1, %v2091
      %v2093 = vrot.slane %v2084, %v2092
      %v2128 = vunpack.c.l.b16 %v2052
      %v2129 = vunpack.c.h.b16 %v2052
      %v2130 = vunpack.c.l.b16 %v2053
      %v2131 = vunpack.c.h.b16 %v2053
      %v2132 = vunpack.c.l.b16 %v2054
      %v2133 = vunpack.c.h.b16 %v2054
      %v2134 = vunpack.c.l.b16 %v2055
      %v2135 = vunpack.c.h.b16 %v2055
      %v2136 = vunpack.c.l.b16 %v2056
      %v2137 = vunpack.c.h.b16 %v2056
      %v2138 = vunpack.c.l.b16 %v2057
      %v2139 = vunpack.c.h.b16 %v2057
      %v2140 = vunpack.c.l.b16 %v2058
      %v2141 = vunpack.c.h.b16 %v2058
      %v2142 = vunpack.c.l.b16 %v2059
      %v2143 = vunpack.c.h.b16 %v2059
      %v2144 = vunpack.c.l.b16 %v2060
      %v2145 = vunpack.c.h.b16 %v2060
      %v2146 = vunpack.c.l.b16 %v2061
      %v2147 = vunpack.c.h.b16 %v2061
      %v2148 = vunpack.c.l.b16 %v2062
      %v2149 = vunpack.c.h.b16 %v2062
      %v2150 = vunpack.c.l.b16 %v2063
      %v2151 = vunpack.c.h.b16 %v2063
      %v2152 = vunpack.c.l.b16 %v2064
      %v2153 = vunpack.c.h.b16 %v2064
      %v2154 = vunpack.c.l.b16 %v2065
      %v2155 = vunpack.c.h.b16 %v2065
      %v2156 = vunpack.c.l.b16 %v2066
      %v2157 = vunpack.c.h.b16 %v2066
      %v2158 = vunpack.c.l.b16 %v2067
      %v2159 = vunpack.c.h.b16 %v2067
      %v2160 = vunpack.c.l.b16 %v2068
      %v2161 = vunpack.c.h.b16 %v2068
      %v2162 = vunpack.c.l.b16 %v2069
      %v2163 = vunpack.c.h.b16 %v2069
      %v2164 = vunpack.c.l.b16 %v2070
      %v2165 = vunpack.c.h.b16 %v2070
      %v2166 = vunpack.c.l.b16 %v2071
      %v2167 = vunpack.c.h.b16 %v2071
      %v2168 = vunpack.c.l.b16 %v2072
      %v2169 = vunpack.c.h.b16 %v2072
      %v2170 = vunpack.c.l.b16 %v2073
      %v2171 = vunpack.c.h.b16 %v2073
      %v2172 = vunpack.c.l.b16 %v2074
      %v2173 = vunpack.c.h.b16 %v2074
      %v2174 = vunpack.c.l.b16 %v2075
      %v2175 = vunpack.c.h.b16 %v2075
      %v2176 = vunpack.c.l.b16 %v2076
      %v2177 = vunpack.c.h.b16 %v2076
      %v2178 = vunpack.c.l.b16 %v2077
      %v2179 = vunpack.c.h.b16 %v2077
      %v2180 = vunpack.c.l.b16 %v2078
      %v2181 = vunpack.c.h.b16 %v2078
      %v2182 = vunpack.c.l.b16 %v2079
      %v2183 = vunpack.c.h.b16 %v2079
      %v2184 = vunpack.c.l.b16 %v2080
      %v2185 = vunpack.c.h.b16 %v2080
      %v2186 = vunpack.c.l.b16 %v2081
      %v2187 = vunpack.c.h.b16 %v2081
      %v2188 = vunpack.c.l.b16 %v2082
      %v2189 = vunpack.c.h.b16 %v2082
      %v2190 = vunpack.c.l.b16 %v2083
      %v2191 = vunpack.c.h.b16 %v2083
      %v2192 = vpack.c.b16 %v2130, %v2128
      %v2193 = vpack.c.b16 %v2131, %v2129
      %v2194 = vpack.c.b16 %v2134, %v2132
      %v2195 = vpack.c.b16 %v2135, %v2133
      %v2196 = vpack.c.b16 %v2138, %v2136
      %v2197 = vpack.c.b16 %v2139, %v2137
      %v2198 = vpack.c.b16 %v2142, %v2140
      %v2199 = vpack.c.b16 %v2143, %v2141
      %v2200 = vpack.c.b16 %v2146, %v2144
      %v2201 = vpack.c.b16 %v2147, %v2145
      %v2202 = vpack.c.b16 %v2150, %v2148
      %v2203 = vpack.c.b16 %v2151, %v2149
      %v2204 = vpack.c.b16 %v2154, %v2152
      %v2205 = vpack.c.b16 %v2155, %v2153
      %v2206 = vpack.c.b16 %v2158, %v2156
      %v2207 = vpack.c.b16 %v2159, %v2157
      %v2208 = vpack.c.b16 %v2162, %v2160
      %v2209 = vpack.c.b16 %v2163, %v2161
      %v2210 = vpack.c.b16 %v2166, %v2164
      %v2211 = vpack.c.b16 %v2167, %v2165
      %v2212 = vpack.c.b16 %v2170, %v2168
      %v2213 = vpack.c.b16 %v2171, %v2169
      %v2214 = vpack.c.b16 %v2174, %v2172
      %v2215 = vpack.c.b16 %v2175, %v2173
      %v2216 = vpack.c.b16 %v2178, %v2176
      %v2217 = vpack.c.b16 %v2179, %v2177
      %v2218 = vpack.c.b16 %v2182, %v2180
      %v2219 = vpack.c.b16 %v2183, %v2181
      %v2220 = vpack.c.b16 %v2186, %v2184
      %v2221 = vpack.c.b16 %v2187, %v2185
      %v2222 = vpack.c.b16 %v2190, %v2188
      %v2223 = vpack.c.b16 %v2191, %v2189
      %2256 = vmatprep.subr.bf16.mxu0 %v2207
      %2257 = vmatpush1.bf16.msra.mxu0 %v2206
      %2258 = vmatprep.subr.bf16.mxu0 %v2205
      %2259 = vmatpush1.bf16.msra.mxu0 %v2204
      %2260 = vmatprep.subr.bf16.mxu0 %v2203
      %2261 = vmatpush1.bf16.msra.mxu0 %v2202
      %2262 = vmatprep.subr.bf16.mxu0 %v2201
      %2263 = vmatpush1.bf16.msra.mxu0 %v2200
      %2264 = vmatprep.subr.bf16.mxu0 %v2199
      %2265 = vmatpush1.bf16.msra.mxu0 %v2198
      %2266 = vmatprep.subr.bf16.mxu0 %v2197
      %2267 = vmatpush1.bf16.msra.mxu0 %v2196
      %2268 = vmatprep.subr.bf16.mxu0 %v2195
      %2269 = vmatpush1.bf16.msra.mxu0 %v2194
      %2270 = vmatprep.subr.bf16.mxu0 %v2193
      %2271 = vmatpush1.bf16.msra.mxu0 %v2192
      %2272 = vmatprep.subr.bf16.mxu0 %v2223
      %2273 = vmatpush2.bf16.msra.mxu0 %v2222
      %2274 = vmatprep.subr.bf16.mxu0 %v2221
      %2275 = vmatpush2.bf16.msra.mxu0 %v2220
      %2276 = vmatprep.subr.bf16.mxu0 %v2219
      %2277 = vmatpush2.bf16.msra.mxu0 %v2218
      %2278 = vmatprep.subr.bf16.mxu0 %v2217
      %2279 = vmatpush2.bf16.msra.mxu0 %v2216
      %2280 = vmatprep.subr.bf16.mxu0 %v2215
      %2281 = vmatpush2.bf16.msra.mxu0 %v2214
      %2282 = vmatprep.subr.bf16.mxu0 %v2213
      %2283 = vmatpush2.bf16.msra.mxu0 %v2212
      %2284 = vmatprep.subr.bf16.mxu0 %v2211
      %2285 = vmatpush2.bf16.msra.mxu0 %v2210
      %2286 = vmatprep.subr.bf16.mxu0 %v2209
      %2287 = vmatpush2.bf16.msra.mxu0 %v2208
      %2288 = vmatprep.mubr.bf16.mxu0 %v2051
      %2289 = vmatmul.mubr.bf16.gmra.mxu0 %v2050
      %v2290 = vpop.f32.mrf.mxu0
      %v2291 = vadd.f32 %v2089, %v2290
      %v2292 = vpop.f32.mrf.mxu0
      %v2293 = vadd.f32 %v2093, %v2292
      %v2294 = vpop.f32.mrf.mxu0
      %v2295 = vpop.f32.mrf.mxu0
      %2296 = vdwg.mxu0
      %v2299 = vcombine.low %v2291, %v2293
      %v2301 = vunpack.c.l.s4 1983009808
      %v2302 = vunpack.c.0.s8 %v2301
      %v2303 = vlaneseq
      %v2304 = vshrl.u32 %v2303, 7
      %v2305 = vsub.s32 %v2302, %v2304
      %v2306 = vrot.slane %v2299, %v2305
      %v2308 = vadd.f32 %v377, %v2306
      %v2311 = vunpack.c.l.s4 1983009808
      %v2312 = vunpack.c.0.s8 %v2311
      %v2313 = vlaneseq
      %v2314 = vshrl.u32 %v2313, 7
      %v2315 = vsub.s32 %v2312, %v2314
      %v2316 = vrot.slane %v2308, %v2315
      %v2317 = vcombine.high %v2316, %v2316
      %vm2320 = vcmask 1041408
      %v2321 = vsel %vm2320, %v2316, 0.0
      %v2322 = vsel %vm2320, %v2317, 0.0
      %v2323 = vadd.f32 %v2321, %v2322
      %2324 = vadd.xlane.f32.xlu0 %v2323
      %v2325 = vpop.xlane.xlu0 %2324
      %v2326 = vrcp.pop 256.0
      %v2327 = vmul.f32 %v2325, %v2326
      %v2330 = vunpack.c.l.s4 269488144
      %v2331 = vunpack.c.0.s8 %v2330
      %v2332 = vlaneseq
      %v2333 = vshrl.u32 %v2332, 7
      %v2334 = vsub.s32 %v2331, %v2333
      %v2335 = vrot.slane %v2327, %v2334
      %v2337 = vsub.f32 %v2308, %v2335
      %v2338 = vmul.f32 %v2337, %v2337
      %v2341 = vunpack.c.l.s4 1983009808
      %v2342 = vunpack.c.0.s8 %v2341
      %v2343 = vlaneseq
      %v2344 = vshrl.u32 %v2343, 7
      %v2345 = vsub.s32 %v2342, %v2344
      %v2346 = vrot.slane %v2338, %v2345
      %v2347 = vcombine.high %v2346, %v2346
      %v2350 = vsel %vm2320, %v2346, 0.0
      %v2351 = vsel %vm2320, %v2347, 0.0
      %v2352 = vadd.f32 %v2350, %v2351
      %2353 = vadd.xlane.f32.xlu0 %v2352
      %v2354 = vpop.xlane.xlu0 %2353
      %v2355 = vmul.f32 %v2354, %v2326
      %v2356 = vadd.f32 %v2355, 1e-05
      %v2357 = vrsqrt.pop %v2356
      %v2360 = vunpack.c.l.s4 269488144
      %v2361 = vunpack.c.0.s8 %v2360
      %v2362 = vlaneseq
      %v2363 = vshrl.u32 %v2362, 7
      %v2364 = vsub.s32 %v2361, %v2363
      %v2365 = vrot.slane %v2357, %v2364
      %v2367 = vmul.f32 %v2337, %v2365
      %v2368 = vld [vmem:[%s5] sm:$0x3]
      %v2370 = vlaneseq
      %v2371 = vshrl.u32 %v2370, 7
      %v2372 = vsub.s32 0, %v2371
      %v2373 = vrot.slane %v2368, %v2372
      %v2374 = vlaneseq
      %v2375 = vshrl.u32 %v2374, 7
      %v2376 = vsub.s32 1, %v2375
      %v2377 = vrot.slane %v2368, %v2376
      %v2378 = vcombine.low %v2373, %v2377
      %v2380 = vunpack.c.l.s4 1983009808
      %v2381 = vunpack.c.0.s8 %v2380
      %v2382 = vlaneseq
      %v2383 = vshrl.u32 %v2382, 7
      %v2384 = vsub.s32 %v2381, %v2383
      %v2385 = vrot.slane %v2378, %v2384
      %v2387 = vmul.f32 %v2367, %v2385
      %v2388 = vld [vmem:[%s6] sm:$0x3]
      %v2390 = vlaneseq
      %v2391 = vshrl.u32 %v2390, 7
      %v2392 = vsub.s32 0, %v2391
      %v2393 = vrot.slane %v2388, %v2392
      %v2394 = vlaneseq
      %v2395 = vshrl.u32 %v2394, 7
      %v2396 = vsub.s32 1, %v2395
      %v2397 = vrot.slane %v2388, %v2396
      %v2398 = vcombine.low %v2393, %v2397
      %v2400 = vunpack.c.l.s4 1983009808
      %v2401 = vunpack.c.0.s8 %v2400
      %v2402 = vlaneseq
      %v2403 = vshrl.u32 %v2402, 7
      %v2404 = vsub.s32 %v2401, %v2403
      %v2405 = vrot.slane %v2398, %v2404
      %v2407 = vadd.f32 %v2387, %v2405
      %v2410 = vunpack.c.l.s4 1983009808
      %v2411 = vunpack.c.0.s8 %v2410
      %v2412 = vlaneseq
      %v2413 = vshrl.u32 %v2412, 7
      %v2414 = vsub.s32 %v2411, %v2413
      %v2415 = vrot.slane %v2407, %v2414
      %v2416 = vcombine.high %v2415, %v2415
      %v2419 = vpack.c.bf16 %v2415, %v2415
      %v2420 = vpack.c.bf16 %v2416, %v2416
      %v2421 = vld [vmem:[%s7] sm:$0xff]
      %v2422 = vld [vmem:[%s7 + $0x8] sm:$0xff]
      %v2423 = vld [vmem:[%s7 + $0x10] sm:$0xff]
      %v2424 = vld [vmem:[%s7 + $0x18] sm:$0xff]
      %v2425 = vld [vmem:[%s7 + $0x20] sm:$0xff]
      %v2426 = vld [vmem:[%s7 + $0x28] sm:$0xff]
      %v2427 = vld [vmem:[%s7 + $0x30] sm:$0xff]
      %v2428 = vld [vmem:[%s7 + $0x38] sm:$0xff]
      %v2429 = vld [vmem:[%s7 + $0x40] sm:$0xff]
      %v2430 = vld [vmem:[%s7 + $0x48] sm:$0xff]
      %v2431 = vld [vmem:[%s7 + $0x50] sm:$0xff]
      %v2432 = vld [vmem:[%s7 + $0x58] sm:$0xff]
      %v2433 = vld [vmem:[%s7 + $0x60] sm:$0xff]
      %v2434 = vld [vmem:[%s7 + $0x68] sm:$0xff]
      %v2435 = vld [vmem:[%s7 + $0x70] sm:$0xff]
      %v2436 = vld [vmem:[%s7 + $0x78] sm:$0xff]
      %v2437 = vld [vmem:[%s7 + $0x80] sm:$0xff]
      %v2438 = vld [vmem:[%s7 + $0x88] sm:$0xff]
      %v2439 = vld [vmem:[%s7 + $0x90] sm:$0xff]
      %v2440 = vld [vmem:[%s7 + $0x98] sm:$0xff]
      %v2441 = vld [vmem:[%s7 + $0xa0] sm:$0xff]
      %v2442 = vld [vmem:[%s7 + $0xa8] sm:$0xff]
      %v2443 = vld [vmem:[%s7 + $0xb0] sm:$0xff]
      %v2444 = vld [vmem:[%s7 + $0xb8] sm:$0xff]
      %v2445 = vld [vmem:[%s7 + $0xc0] sm:$0xff]
      %v2446 = vld [vmem:[%s7 + $0xc8] sm:$0xff]
      %v2447 = vld [vmem:[%s7 + $0xd0] sm:$0xff]
      %v2448 = vld [vmem:[%s7 + $0xd8] sm:$0xff]
      %v2449 = vld [vmem:[%s7 + $0xe0] sm:$0xff]
      %v2450 = vld [vmem:[%s7 + $0xe8] sm:$0xff]
      %v2451 = vld [vmem:[%s7 + $0xf0] sm:$0xff]
      %v2452 = vld [vmem:[%s7 + $0xf8] sm:$0xff]
      %v2453 = vld [vmem:[%s8] sm:$0x3]
      %v2455 = vlaneseq
      %v2456 = vshrl.u32 %v2455, 7
      %v2457 = vsub.s32 0, %v2456
      %v2458 = vrot.slane %v2453, %v2457
      %v2459 = vlaneseq
      %v2460 = vshrl.u32 %v2459, 7
      %v2461 = vsub.s32 1, %v2460
      %v2462 = vrot.slane %v2453, %v2461
      %v2497 = vunpack.c.l.b16 %v2421
      %v2498 = vunpack.c.h.b16 %v2421
      %v2499 = vunpack.c.l.b16 %v2422
      %v2500 = vunpack.c.h.b16 %v2422
      %v2501 = vunpack.c.l.b16 %v2423
      %v2502 = vunpack.c.h.b16 %v2423
      %v2503 = vunpack.c.l.b16 %v2424
      %v2504 = vunpack.c.h.b16 %v2424
      %v2505 = vunpack.c.l.b16 %v2425
      %v2506 = vunpack.c.h.b16 %v2425
      %v2507 = vunpack.c.l.b16 %v2426
      %v2508 = vunpack.c.h.b16 %v2426
      %v2509 = vunpack.c.l.b16 %v2427
      %v2510 = vunpack.c.h.b16 %v2427
      %v2511 = vunpack.c.l.b16 %v2428
      %v2512 = vunpack.c.h.b16 %v2428
      %v2513 = vunpack.c.l.b16 %v2429
      %v2514 = vunpack.c.h.b16 %v2429
      %v2515 = vunpack.c.l.b16 %v2430
      %v2516 = vunpack.c.h.b16 %v2430
      %v2517 = vunpack.c.l.b16 %v2431
      %v2518 = vunpack.c.h.b16 %v2431
      %v2519 = vunpack.c.l.b16 %v2432
      %v2520 = vunpack.c.h.b16 %v2432
      %v2521 = vunpack.c.l.b16 %v2433
      %v2522 = vunpack.c.h.b16 %v2433
      %v2523 = vunpack.c.l.b16 %v2434
      %v2524 = vunpack.c.h.b16 %v2434
      %v2525 = vunpack.c.l.b16 %v2435
      %v2526 = vunpack.c.h.b16 %v2435
      %v2527 = vunpack.c.l.b16 %v2436
      %v2528 = vunpack.c.h.b16 %v2436
      %v2529 = vunpack.c.l.b16 %v2437
      %v2530 = vunpack.c.h.b16 %v2437
      %v2531 = vunpack.c.l.b16 %v2438
      %v2532 = vunpack.c.h.b16 %v2438
      %v2533 = vunpack.c.l.b16 %v2439
      %v2534 = vunpack.c.h.b16 %v2439
      %v2535 = vunpack.c.l.b16 %v2440
      %v2536 = vunpack.c.h.b16 %v2440
      %v2537 = vunpack.c.l.b16 %v2441
      %v2538 = vunpack.c.h.b16 %v2441
      %v2539 = vunpack.c.l.b16 %v2442
      %v2540 = vunpack.c.h.b16 %v2442
      %v2541 = vunpack.c.l.b16 %v2443
      %v2542 = vunpack.c.h.b16 %v2443
      %v2543 = vunpack.c.l.b16 %v2444
      %v2544 = vunpack.c.h.b16 %v2444
      %v2545 = vunpack.c.l.b16 %v2445
      %v2546 = vunpack.c.h.b16 %v2445
      %v2547 = vunpack.c.l.b16 %v2446
      %v2548 = vunpack.c.h.b16 %v2446
      %v2549 = vunpack.c.l.b16 %v2447
      %v2550 = vunpack.c.h.b16 %v2447
      %v2551 = vunpack.c.l.b16 %v2448
      %v2552 = vunpack.c.h.b16 %v2448
      %v2553 = vunpack.c.l.b16 %v2449
      %v2554 = vunpack.c.h.b16 %v2449
      %v2555 = vunpack.c.l.b16 %v2450
      %v2556 = vunpack.c.h.b16 %v2450
      %v2557 = vunpack.c.l.b16 %v2451
      %v2558 = vunpack.c.h.b16 %v2451
      %v2559 = vunpack.c.l.b16 %v2452
      %v2560 = vunpack.c.h.b16 %v2452
      %v2561 = vpack.c.b16 %v2499, %v2497
      %v2562 = vpack.c.b16 %v2500, %v2498
      %v2563 = vpack.c.b16 %v2503, %v2501
      %v2564 = vpack.c.b16 %v2504, %v2502
      %v2565 = vpack.c.b16 %v2507, %v2505
      %v2566 = vpack.c.b16 %v2508, %v2506
      %v2567 = vpack.c.b16 %v2511, %v2509
      %v2568 = vpack.c.b16 %v2512, %v2510
      %v2569 = vpack.c.b16 %v2515, %v2513
      %v2570 = vpack.c.b16 %v2516, %v2514
      %v2571 = vpack.c.b16 %v2519, %v2517
      %v2572 = vpack.c.b16 %v2520, %v2518
      %v2573 = vpack.c.b16 %v2523, %v2521
      %v2574 = vpack.c.b16 %v2524, %v2522
      %v2575 = vpack.c.b16 %v2527, %v2525
      %v2576 = vpack.c.b16 %v2528, %v2526
      %v2577 = vpack.c.b16 %v2531, %v2529
      %v2578 = vpack.c.b16 %v2532, %v2530
      %v2579 = vpack.c.b16 %v2535, %v2533
      %v2580 = vpack.c.b16 %v2536, %v2534
      %v2581 = vpack.c.b16 %v2539, %v2537
      %v2582 = vpack.c.b16 %v2540, %v2538
      %v2583 = vpack.c.b16 %v2543, %v2541
      %v2584 = vpack.c.b16 %v2544, %v2542
      %v2585 = vpack.c.b16 %v2547, %v2545
      %v2586 = vpack.c.b16 %v2548, %v2546
      %v2587 = vpack.c.b16 %v2551, %v2549
      %v2588 = vpack.c.b16 %v2552, %v2550
      %v2589 = vpack.c.b16 %v2555, %v2553
      %v2590 = vpack.c.b16 %v2556, %v2554
      %v2591 = vpack.c.b16 %v2559, %v2557
      %v2592 = vpack.c.b16 %v2560, %v2558
      %2625 = vmatprep.subr.bf16.mxu0 %v2576
      %2626 = vmatpush1.bf16.msra.mxu0 %v2575
      %2627 = vmatprep.subr.bf16.mxu0 %v2574
      %2628 = vmatpush1.bf16.msra.mxu0 %v2573
      %2629 = vmatprep.subr.bf16.mxu0 %v2572
      %2630 = vmatpush1.bf16.msra.mxu0 %v2571
      %2631 = vmatprep.subr.bf16.mxu0 %v2570
      %2632 = vmatpush1.bf16.msra.mxu0 %v2569
      %2633 = vmatprep.subr.bf16.mxu0 %v2568
      %2634 = vmatpush1.bf16.msra.mxu0 %v2567
      %2635 = vmatprep.subr.bf16.mxu0 %v2566
      %2636 = vmatpush1.bf16.msra.mxu0 %v2565
      %2637 = vmatprep.subr.bf16.mxu0 %v2564
      %2638 = vmatpush1.bf16.msra.mxu0 %v2563
      %2639 = vmatprep.subr.bf16.mxu0 %v2562
      %2640 = vmatpush1.bf16.msra.mxu0 %v2561
      %2641 = vmatprep.subr.bf16.mxu0 %v2592
      %2642 = vmatpush2.bf16.msra.mxu0 %v2591
      %2643 = vmatprep.subr.bf16.mxu0 %v2590
      %2644 = vmatpush2.bf16.msra.mxu0 %v2589
      %2645 = vmatprep.subr.bf16.mxu0 %v2588
      %2646 = vmatpush2.bf16.msra.mxu0 %v2587
      %2647 = vmatprep.subr.bf16.mxu0 %v2586
      %2648 = vmatpush2.bf16.msra.mxu0 %v2585
      %2649 = vmatprep.subr.bf16.mxu0 %v2584
      %2650 = vmatpush2.bf16.msra.mxu0 %v2583
      %2651 = vmatprep.subr.bf16.mxu0 %v2582
      %2652 = vmatpush2.bf16.msra.mxu0 %v2581
      %2653 = vmatprep.subr.bf16.mxu0 %v2580
      %2654 = vmatpush2.bf16.msra.mxu0 %v2579
      %2655 = vmatprep.subr.bf16.mxu0 %v2578
      %2656 = vmatpush2.bf16.msra.mxu0 %v2577
      %2657 = vmatprep.mubr.bf16.mxu0 %v2420
      %2658 = vmatmul.mubr.bf16.gmra.mxu0 %v2419
      %v2659 = vpop.f32.mrf.mxu0
      %v2660 = vadd.f32 %v2458, %v2659
      %v2661 = vpop.f32.mrf.mxu0
      %v2662 = vadd.f32 %v2462, %v2661
      %v2663 = vpop.f32.mrf.mxu0
      %v2664 = vpop.f32.mrf.mxu0
      %2665 = vdwg.mxu0
      %v2666 = vmul.f32 %v2660, 0.5
      %v2667 = vmul.f32 %v2662, 0.5
      %v2668 = vmul.f32 %v2660, 0.70710677
      %v2669 = vmul.f32 %v2662, 0.70710677
      %v2670 = vand.u32 2147483647, %v2668
      %v2671 = vand.u32 2147483647, %v2669
      %v2672 = vmul.f32 %v2670, 0.3275911
      %v2673 = vmul.f32 %v2671, 0.3275911
      %v2674 = vadd.f32 %v2672, 1.0
      %v2675 = vadd.f32 %v2673, 1.0
      %v2676 = vrcp.pop %v2674
      %v2677 = vrcp.pop %v2675
      %v2678 = vmul.f32 %v2676, 1.0614054
      %v2679 = vmul.f32 %v2677, 1.0614054
      %v2680 = vadd.f32 %v2678, -1.4531521
      %v2681 = vadd.f32 %v2679, -1.4531521
      %v2682 = vmul.f32 %v2680, %v2676
      %v2683 = vmul.f32 %v2681, %v2677
      %v2684 = vadd.f32 %v2682, 1.4214138
      %v2685 = vadd.f32 %v2683, 1.4214138
      %v2686 = vmul.f32 %v2684, %v2676
      %v2687 = vmul.f32 %v2685, %v2677
      %v2688 = vadd.f32 %v2686, -0.28449672
      %v2689 = vadd.f32 %v2687, -0.28449672
      %v2690 = vmul.f32 %v2688, %v2676
      %v2691 = vmul.f32 %v2689, %v2677
      %v2692 = vadd.f32 %v2690, 0.2548296
      %v2693 = vadd.f32 %v2691, 0.2548296
      %v2694 = vmul.f32 %v2692, %v2676
      %v2695 = vmul.f32 %v2693, %v2677
      %v2696 = vsub.f32 0.0, %v2670
      %v2697 = vsub.f32 0.0, %v2671
      %v2698 = vmul.f32 %v2696, %v2670
      %v2699 = vmul.f32 %v2697, %v2671
      %v2700 = vmul.f32 %v2698, 1.442695
      %v2701 = vpow.pop %v2700
      %v2702 = vmul.f32 %v2699, 1.442695
      %v2703 = vpow.pop %v2702
      %v2704 = vmul.f32 %v2694, %v2701
      %v2705 = vmul.f32 %v2695, %v2703
      %v2706 = vsub.f32 1.0, %v2704
      %v2707 = vsub.f32 1.0, %v2705
      %vm2708 = vcmp.ge.f32.partialorder %v2668, 0.0
      %vm2709 = vcmp.ge.f32.partialorder %v2669, 0.0
      %v2710 = vsub.f32 0.0, %v2706
      %v2711 = vsub.f32 0.0, %v2707
      %v2712 = vsel %vm2708, %v2706, %v2710
      %v2713 = vsel %vm2709, %v2707, %v2711
      %v2714 = vadd.f32 %v2712, 1.0
      %v2715 = vadd.f32 %v2713, 1.0
      %v2716 = vmul.f32 %v2666, %v2714
      %v2717 = vmul.f32 %v2667, %v2715
      %v2720 = vcombine.low %v2716, %v2717
      %v2722 = vunpack.c.l.s4 1983009808
      %v2723 = vunpack.c.0.s8 %v2722
      %v2724 = vlaneseq
      %v2725 = vshrl.u32 %v2724, 7
      %v2726 = vsub.s32 %v2723, %v2725
      %v2727 = vrot.slane %v2720, %v2726
      %v2729 = vadd.f32 %v2407, %v2727
      %v2732 = vunpack.c.l.s4 1983009808
      %v2733 = vunpack.c.0.s8 %v2732
      %v2734 = vlaneseq
      %v2735 = vshrl.u32 %v2734, 7
      %v2736 = vsub.s32 %v2733, %v2735
      %v2737 = vrot.slane %v2729, %v2736
      %v2738 = vcombine.high %v2737, %v2737
      %v2741 = vpack.c.bf16 %v2737, %v2737
      %v2742 = vpack.c.bf16 %v2738, %v2738
      %v2743 = vld [vmem:[%s370] sm:$0xf]
      %v2744 = vld [vmem:[%s370 + $0x4] sm:$0xf]
      %v2745 = vld [vmem:[%s370 + $0x8] sm:$0xf]
      %v2746 = vld [vmem:[%s370 + $0xc] sm:$0xf]
      %v2747 = vld [vmem:[%s370 + $0x10] sm:$0xf]
      %v2748 = vld [vmem:[%s370 + $0x14] sm:$0xf]
      %v2749 = vld [vmem:[%s370 + $0x18] sm:$0xf]
      %v2750 = vld [vmem:[%s370 + $0x1c] sm:$0xf]
      %v2751 = vld [vmem:[%s370 + $0x20] sm:$0xf]
      %v2752 = vld [vmem:[%s370 + $0x24] sm:$0xf]
      %v2753 = vld [vmem:[%s370 + $0x28] sm:$0xf]
      %v2754 = vld [vmem:[%s370 + $0x2c] sm:$0xf]
      %v2755 = vld [vmem:[%s370 + $0x30] sm:$0xf]
      %v2756 = vld [vmem:[%s370 + $0x34] sm:$0xf]
      %v2757 = vld [vmem:[%s370 + $0x38] sm:$0xf]
      %v2758 = vld [vmem:[%s370 + $0x3c] sm:$0xf]
      %v2759 = vld [vmem:[%s370 + $0x40] sm:$0xf]
      %v2760 = vld [vmem:[%s370 + $0x44] sm:$0xf]
      %v2761 = vld [vmem:[%s370 + $0x48] sm:$0xf]
      %v2762 = vld [vmem:[%s370 + $0x4c] sm:$0xf]
      %v2763 = vld [vmem:[%s370 + $0x50] sm:$0xf]
      %v2764 = vld [vmem:[%s370 + $0x54] sm:$0xf]
      %v2765 = vld [vmem:[%s370 + $0x58] sm:$0xf]
      %v2766 = vld [vmem:[%s370 + $0x5c] sm:$0xf]
      %v2767 = vld [vmem:[%s370 + $0x60] sm:$0xf]
      %v2768 = vld [vmem:[%s370 + $0x64] sm:$0xf]
      %v2769 = vld [vmem:[%s370 + $0x68] sm:$0xf]
      %v2770 = vld [vmem:[%s370 + $0x6c] sm:$0xf]
      %v2771 = vld [vmem:[%s370 + $0x70] sm:$0xf]
      %v2772 = vld [vmem:[%s370 + $0x74] sm:$0xf]
      %v2773 = vld [vmem:[%s370 + $0x78] sm:$0xf]
      %v2774 = vld [vmem:[%s370 + $0x7c] sm:$0xf]
      %v2807 = vunpack.c.l.b16 %v2743
      %v2808 = vunpack.c.l.b16 %v2744
      %v2809 = vunpack.c.l.b16 %v2745
      %v2810 = vunpack.c.l.b16 %v2746
      %v2811 = vunpack.c.l.b16 %v2747
      %v2812 = vunpack.c.l.b16 %v2748
      %v2813 = vunpack.c.l.b16 %v2749
      %v2814 = vunpack.c.l.b16 %v2750
      %v2815 = vunpack.c.l.b16 %v2751
      %v2816 = vunpack.c.l.b16 %v2752
      %v2817 = vunpack.c.l.b16 %v2753
      %v2818 = vunpack.c.l.b16 %v2754
      %v2819 = vunpack.c.l.b16 %v2755
      %v2820 = vunpack.c.l.b16 %v2756
      %v2821 = vunpack.c.l.b16 %v2757
      %v2822 = vunpack.c.l.b16 %v2758
      %v2823 = vunpack.c.l.b16 %v2759
      %v2824 = vunpack.c.l.b16 %v2760
      %v2825 = vunpack.c.l.b16 %v2761
      %v2826 = vunpack.c.l.b16 %v2762
      %v2827 = vunpack.c.l.b16 %v2763
      %v2828 = vunpack.c.l.b16 %v2764
      %v2829 = vunpack.c.l.b16 %v2765
      %v2830 = vunpack.c.l.b16 %v2766
      %v2831 = vunpack.c.l.b16 %v2767
      %v2832 = vunpack.c.l.b16 %v2768
      %v2833 = vunpack.c.l.b16 %v2769
      %v2834 = vunpack.c.l.b16 %v2770
      %v2835 = vunpack.c.l.b16 %v2771
      %v2836 = vunpack.c.l.b16 %v2772
      %v2837 = vunpack.c.l.b16 %v2773
      %v2838 = vunpack.c.l.b16 %v2774
      %v2839 = vpack.c.b16 %v2808, %v2807
      %v2840 = vpack.c.b16 %v2810, %v2809
      %v2841 = vpack.c.b16 %v2812, %v2811
      %v2842 = vpack.c.b16 %v2814, %v2813
      %v2843 = vpack.c.b16 %v2816, %v2815
      %v2844 = vpack.c.b16 %v2818, %v2817
      %v2845 = vpack.c.b16 %v2820, %v2819
      %v2846 = vpack.c.b16 %v2822, %v2821
      %v2847 = vpack.c.b16 %v2824, %v2823
      %v2848 = vpack.c.b16 %v2826, %v2825
      %v2849 = vpack.c.b16 %v2828, %v2827
      %v2850 = vpack.c.b16 %v2830, %v2829
      %v2851 = vpack.c.b16 %v2832, %v2831
      %v2852 = vpack.c.b16 %v2834, %v2833
      %v2853 = vpack.c.b16 %v2836, %v2835
      %v2854 = vpack.c.b16 %v2838, %v2837
      %2871 = vmatprep.subr.bf16.mxu0 0
      %2872 = vmatpush1.bf16.msra.mxu0 %v2846
      %2873 = vmatprep.subr.bf16.mxu0 0
      %2874 = vmatpush1.bf16.msra.mxu0 %v2845
      %2875 = vmatprep.subr.bf16.mxu0 0
      %2876 = vmatpush1.bf16.msra.mxu0 %v2844
      %2877 = vmatprep.subr.bf16.mxu0 0
      %2878 = vmatpush1.bf16.msra.mxu0 %v2843
      %2879 = vmatprep.subr.bf16.mxu0 0
      %2880 = vmatpush1.bf16.msra.mxu0 %v2842
      %2881 = vmatprep.subr.bf16.mxu0 0
      %2882 = vmatpush1.bf16.msra.mxu0 %v2841
      %2883 = vmatprep.subr.bf16.mxu0 0
      %2884 = vmatpush1.bf16.msra.mxu0 %v2840
      %2885 = vmatprep.subr.bf16.mxu0 0
      %2886 = vmatpush1.bf16.msra.mxu0 %v2839
      %2887 = vmatprep.subr.bf16.mxu0 0
      %2888 = vmatpush2.bf16.msra.mxu0 %v2854
      %2889 = vmatprep.subr.bf16.mxu0 0
      %2890 = vmatpush2.bf16.msra.mxu0 %v2853
      %2891 = vmatprep.subr.bf16.mxu0 0
      %2892 = vmatpush2.bf16.msra.mxu0 %v2852
      %2893 = vmatprep.subr.bf16.mxu0 0
      %2894 = vmatpush2.bf16.msra.mxu0 %v2851
      %2895 = vmatprep.subr.bf16.mxu0 0
      %2896 = vmatpush2.bf16.msra.mxu0 %v2850
      %2897 = vmatprep.subr.bf16.mxu0 0
      %2898 = vmatpush2.bf16.msra.mxu0 %v2849
      %2899 = vmatprep.subr.bf16.mxu0 0
      %2900 = vmatpush2.bf16.msra.mxu0 %v2848
      %2901 = vmatprep.subr.bf16.mxu0 0
      %2902 = vmatpush2.bf16.msra.mxu0 %v2847
      %2903 = vmatprep.mubr.bf16.mxu0 %v2742
      %2904 = vmatmul.mubr.bf16.gmra.mxu0 %v2741
      %v2905 = vpop.f32.mrf.mxu0
      %v2906 = vadd.f32 0.0, %v2905
      %v2907 = vpop.f32.mrf.mxu0
      %v2908 = vpop.f32.mrf.mxu0
      %v2909 = vpop.f32.mrf.mxu0
      %2910 = vdwg.mxu0
      %2911 = vst [vmem:[%s374] sm:$0x3] %v2906
      %p2912 = scmp.lt.s32.totalorder %s21, 3
      %s2913 = scalar_select %p2912, %s21, 3
      %s2914 = smul.addr %s2913, 2
      %s2915 = scalar_lea.vmem %s10, %s2914
      // Predicated region
      $region61: #{forward.3} parent=59 // pred_check
        %p2916 = pneg %p259
      $region62: #{forward.3} parent=59 // pred_check_branch
        %2918 = sbr.rel (%p2916) target = $region64
      $region63: #{forward.3} parent=59 // pred_region
        _
      $region64: #{forward.3} parent=59 // pred_fallthru
        _
    $region60: #{forward.3} parent=5 // pred_fallthru
      _
    %p2919 = scmp.le.s32.totalorder 2, %s16
    // Predicated region
    $region65: #{forward.3} parent=5 // pred_check
      %p2920 = pneg %p2919
    $region66: #{forward.3} parent=5 // pred_check_branch
      %2922 = sbr.rel (%p2920) target = $region68
    $region67: #{forward.3} parent=5 // pred_region
      %s2923 = ssub.s32 %s16, 2
      // Predicated region
      $region69: #{forward.3} parent=67 // pred_check
        %p2924 = pneg %p265
      $region70: #{forward.3} parent=67 // pred_check_branch
        %2926 = sbr.rel (%p2924) target = $region72
      $region71: #{forward.3} parent=67 // pred_region
        %p2927 = scmp.lt.s32.totalorder %s22, 3
        %s2928 = scalar_select %p2927, %s22, 3
        %s2929 = smul.addr %s2928, 2
        %s2930 = scalar_lea.vmem %s10, %s2929
      $region72: #{forward.3} parent=67 // pred_fallthru
        _
    $region68: #{forward.3} parent=5 // pred_fallthru
      _
  $region6: #{forward.3} parent=0 // loop_footer
    %s20 = sadd.s32 1, %s16
  $region7: #{forward.3} parent=0 // loop_footer_branch
    %15 = sbr.rel target = $region3
  $region8: #{forward.3} parent=0 // loop_exit
    _

</llo_original>
